<compile_context>
chip_gen: v7x
topology: tpu7x:2x2x1
jax: 0.10.0
libtpu: 0.0.40
codegen_flags: <defaults>
</compile_context>

<pallas_src>
import numpy as np
import jax
import jax.numpy as jnp
from jax.experimental import pallas as pl
from jax.experimental.pallas import tpu as pltpu

_CPAD = 16  # channel padding multiple (bf16 sublane packing)


def _round_up(x, m):
    return (x + m - 1) // m * m


def _tap_masks_np(N, H, W):
    """(9, 1, N*H*W) f32 validity masks for the 9 conv taps, (dy, dx)
    row-major, tiled across the batch.  They implement the zero padding AND
    neutralize wrap-around of the flat-lane rolls across image boundaries."""
    hw = H * W
    hh, ww = np.divmod(np.arange(hw), W)
    masks = np.zeros((9, 1, hw), np.float32)
    k = 0
    for dy in (-1, 0, 1):
        for dx in (-1, 0, 1):
            ok = ((hh + dy >= 0) & (hh + dy < H) &
                  (ww + dx >= 0) & (ww + dx < W))
            masks[k, 0, :] = ok.astype(np.float32)
            k += 1
    return np.tile(masks, (1, 1, N))


def _pool_colsel_np(W):
    """(W, W//2) 0/1 matrix selecting even columns of one image row."""
    Wh = W // 2
    sel = np.zeros((W, Wh), np.float32)
    for j in range(Wh):
        sel[2 * j, j] = 1.0
    return sel


def _pack_conv_weight(w_hwio, cin_pad, cout_pad):
    """(3,3,Cin,Cout) HWIO -> (cout_pad, 9*cin_pad) bf16, tap-major/chan-minor."""
    kh, kw, cin, cout = w_hwio.shape
    w = jnp.transpose(w_hwio, (3, 0, 1, 2))              # (Cout, 3, 3, Cin)
    w = jnp.pad(w, ((0, cout_pad - cout), (0, 0), (0, 0), (0, cin_pad - cin)))
    return w.reshape(cout_pad, kh * kw * cin_pad).astype(jnp.bfloat16)


def _make_fused_kernel(N, H, W, cin_pads):
    HW = H * W
    NHW = N * HW
    Hh = H // 2
    L = len(cin_pads)
    inv_cnt = 1.0 / float(NHW)

    def kernel(*refs):
        x_ref, masks_ref, sel_ref = refs[0], refs[1], refs[2]
        o_ref, col_ref = refs[-2], refs[-1]
        layer_refs = refs[3:-2]

        masks_v = masks_ref[...]                          # (9, 1, N*HW) f32
        act = x_ref[...]                                  # (Cpad0, N*HW) f32

        for l in range(L):
            w_ref, g_ref, b_ref = layer_refs[3 * l:3 * l + 3]
            cin_pad = cin_pads[l]

            # im2col: 9 lane-shifted copies of the whole batch slab, border /
            # batch-wrap masked, cast bf16 into ONE reused VMEM scratch.
            k = 0
            for dy in (-1, 0, 1):
                for dx in (-1, 0, 1):
                    if dy == 0 and dx == 0:
                        tap = act
                    else:
                        s = dy * W + dx                   # flat-pixel offset
                        tap = jnp.roll(act, -s, axis=1) * masks_v[k]
                    col_ref[k * cin_pad:(k + 1) * cin_pad, :] = (
                        tap.astype(jnp.bfloat16))
                    k += 1

            # ONE bf16 MXU matmul per layer over the whole batch slab.
            y = jnp.dot(w_ref[...], col_ref[0:9 * cin_pad, :],
                        preferred_element_type=jnp.float32)  # (Coutp, N*HW)

            # Training-mode BatchNorm2d (one-pass stats over N,H,W) + ReLU.
            # TODO(synk): for N*H*W beyond VMEM, tile the lane axis with a grid
            # and carry per-channel sum/sumsq partials (v7x: mark the
            # independent axis "parallel" for the second TensorCore).
            s1 = jnp.sum(y, axis=1, keepdims=True)
            s2 = jnp.sum(y * y, axis=1, keepdims=True)
            mean = s1 * inv_cnt
            var = jnp.maximum(s2 * inv_cnt - mean * mean, 0.0)
            scale = g_ref[...] * jax.lax.rsqrt(var + 1e-5)
            shift = b_ref[...] - mean * scale
            act = jnp.maximum(y * scale + shift, 0.0)

        # MaxPool2d(2,2): 2x2 window max via two lane shifts, then compact the
        # kept (even h, even w) pixels row-by-row with a small (W, W/2) 0/1
        # matmul (linear in H*W).  Roll wrap-around only touches odd rows /
        # columns, which are never kept.
        m = jnp.maximum(act, jnp.roll(act, -1, axis=1))
        m = jnp.maximum(m, jnp.roll(m, -W, axis=1))
        selw = sel_ref[...]                               # (W, Wh) f32
        pieces = []
        for n in range(N):
            for hh in range(Hh):
                start = n * HW + 2 * hh * W
                pieces.append(jnp.dot(m[:, start:start + W], selw,
                                      preferred_element_type=jnp.float32))
        # TODO(synk): for large N*H replace this unrolled per-row compaction
        # with lane-strided reads from a staged scratch / a gridded pool pass.
        o_ref[...] = jnp.concatenate(pieces, axis=1).astype(o_ref.dtype)

    return kernel


def fcn_encoder_block(x_nchw, params):
    N, C0, H, W = x_nchw.shape
    assert H % 2 == 0 and W % 2 == 0, "MaxPool2d(2,2) path assumes even H, W"
    Hh, Wh = H // 2, W // 2
    HW = H * W

    # Channel-major batch slab (C, N*H*W): lane-dense minor axis.  The input
    # transpose is wrapper-side layout plumbing on the small input only.
    c0p = _round_up(C0, _CPAD)
    x2 = jnp.transpose(x_nchw.reshape(N, C0, HW), (1, 0, 2)).reshape(C0, N * HW)
    x2 = x2.astype(jnp.float32)
    if c0p != C0:
        x2 = jnp.pad(x2, ((0, c0p - C0), (0, 0)))

    inputs = [x2,
              jnp.asarray(_tap_masks_np(N, H, W)),
              jnp.asarray(_pool_colsel_np(W))]

    cin_pads, cout_pads = [], []
    cin_pad = c0p
    cout = C0
    for (w, b, gamma, beta) in params:
        cout = w.shape[-1]
        cout_pad = _round_up(cout, _CPAD)
        # NOTE: conv bias `b` is intentionally NOT applied -- training-mode
        # BatchNorm subtracts the per-channel batch mean right after, which
        # cancels a per-channel bias exactly (zero numerical change).
        gp = jnp.pad(gamma.astype(jnp.float32), (0, cout_pad - cout))
        bp = jnp.pad(beta.astype(jnp.float32), (0, cout_pad - cout))
        inputs += [_pack_conv_weight(w, cin_pad, cout_pad),
                   gp.reshape(cout_pad, 1), bp.reshape(cout_pad, 1)]
        cin_pads.append(cin_pad)
        cout_pads.append(cout_pad)
        cin_pad = cout_pad

    max_cin_pad = max(cin_pads)
    kernel = _make_fused_kernel(N, H, W, tuple(cin_pads))

    # Rough whole-kernel VMEM residency -> explicit scoped-VMEM request.
    nhw = N * HW
    cmax = max([c0p] + cout_pads)
    est = (c0p * nhw * 4                      # input slab
           + 9 * nhw * 4                      # tap masks
           + 9 * max_cin_pad * nhw * 2        # bf16 col scratch
           + 4 * cmax * nhw * 4               # act / y / pool temporaries
           + sum(cp * 9 * ci * 2 for cp, ci in zip(cout_pads, cin_pads))
           + cout_pads[-1] * N * Hh * Wh * 4)
    vmem_limit = int(min(max(2 * est, 32 * 2**20), 100 * 2**20))

    vmem = pltpu.MemorySpace.VMEM
    out = pl.pallas_call(
        kernel,
        out_shape=jax.ShapeDtypeStruct((cout_pads[-1], N * Hh * Wh),
                                       jnp.float32),
        in_specs=[pl.BlockSpec(memory_space=vmem) for _ in inputs],
        out_specs=pl.BlockSpec(memory_space=vmem),
        scratch_shapes=[pltpu.VMEM((9 * max_cin_pad, N * HW), jnp.bfloat16)],
        compiler_params=pltpu.CompilerParams(vmem_limit_bytes=vmem_limit),
    )(*inputs)

    out = out[:cout].reshape(cout, N, Hh, Wh)
    return jnp.transpose(out, (1, 0, 2, 3))


def init_params(key, input_channels, output_channels, sub_layers_num):
    """Deterministic init mirroring PyTorch shapes (Conv2d kaiming-uniform-ish,
    BatchNorm weight=1 / bias=0 as in init_weights)."""
    params = []
    cin = input_channels
    for _ in range(sub_layers_num):
        key, kw, kb = jax.random.split(key, 3)
        fan_in = cin * 3 * 3
        bound = 1.0 / np.sqrt(fan_in)
        w = jax.random.uniform(kw, (3, 3, cin, output_channels),
                               jnp.float32, -bound, bound)
        b = jax.random.uniform(kb, (output_channels,), jnp.float32, -bound, bound)
        gamma = jnp.ones((output_channels,), jnp.float32)
        beta = jnp.zeros((output_channels,), jnp.float32)
        params.append((w, b, gamma, beta))
        cin = output_channels
    return params


# ----------------------------- Pure-JAX reference -----------------------------
def reference_forward(x_nchw, params):
    x = x_nchw.astype(jnp.float32)
    for w, b, gamma, beta in params:
        y = jax.lax.conv_general_dilated(
            x, w, window_strides=(1, 1), padding=((1, 1), (1, 1)),
            dimension_numbers=("NCHW", "HWIO", "NCHW"))
        y = y + b.reshape(1, -1, 1, 1)
        mean = jnp.mean(y, axis=(0, 2, 3), keepdims=True)
        var = jnp.mean((y - mean) ** 2, axis=(0, 2, 3), keepdims=True)
        y = (y - mean) * jax.lax.rsqrt(var + 1e-5)
        y = y * gamma.reshape(1, -1, 1, 1) + beta.reshape(1, -1, 1, 1)
        x = jnp.maximum(y, 0.0)
    return jax.lax.reduce_window(x, -jnp.inf, jax.lax.max,
                                 (1, 1, 2, 2), (1, 1, 2, 2), "VALID")


if __name__ == "__main__":
    key = jax.random.PRNGKey(0)
    kx, kp = jax.random.split(key)

    # FCNEncoderBlock(input_channels=4, output_channels=8, sub_layers_num=2)
    x = jax.random.normal(kx, (2, 4, 16, 16), jnp.float32)       # NCHW input
    params = init_params(kp, input_channels=4, output_channels=8,
                         sub_layers_num=2)

    out = jax.block_until_ready(jax.jit(fcn_encoder_block)(x, params))
    ref = jax.block_until_ready(reference_forward(x, params))

    assert out.shape == (2, 8, 8, 8), out.shape
    # Tolerance loosened slightly vs pure-f32: conv matmul operands are bf16
    # (f32 accumulation), per the MXU-throughput/VMEM recommendation.
    np.testing.assert_allclose(np.asarray(out), np.asarray(ref),
                               atol=3e-2, rtol=3e-2)
    print("KERNEL_OK")
</pallas_src>

<mosaic_0001>
module attributes {stable_mosaic.version = 11 : i64} {
  func.func @kernel(%arg0: memref<16x512xf32, #tpu.memory_space<vmem>>, %arg1: memref<9x1x512xf32, #tpu.memory_space<vmem>>, %arg2: memref<16x8xf32, #tpu.memory_space<vmem>>, %arg3: memref<16x144xbf16, #tpu.memory_space<vmem>>, %arg4: memref<16x1xf32, #tpu.memory_space<vmem>>, %arg5: memref<16x1xf32, #tpu.memory_space<vmem>>, %arg6: memref<16x144xbf16, #tpu.memory_space<vmem>>, %arg7: memref<16x1xf32, #tpu.memory_space<vmem>>, %arg8: memref<16x1xf32, #tpu.memory_space<vmem>>, %arg9: memref<16x128xf32, #tpu.memory_space<vmem>>, %arg10: memref<144x512xbf16, #tpu.memory_space<vmem>>) attributes {dimension_semantics = [], scalar_prefetch = 0 : i64, scratch_operands = 1 : i64, tpu.core_type = #tpu.core_type<tc>} {
    %c0 = arith.constant 0 : index
    %c0_0 = arith.constant 0 : index
    %c0_1 = arith.constant 0 : index
    %0 = vector.load %arg1[%c0, %c0_0, %c0_1] : memref<9x1x512xf32, #tpu.memory_space<vmem>>, vector<9x1x512xf32>
    %c0_2 = arith.constant 0 : index
    %c0_3 = arith.constant 0 : index
    %1 = vector.load %arg0[%c0_2, %c0_3] : memref<16x512xf32, #tpu.memory_space<vmem>>, vector<16x512xf32>
    %2 = vector.extract_strided_slice %1 {offsets = [0, 495], sizes = [16, 17], strides = [1, 1]} : vector<16x512xf32> to vector<16x17xf32>
    %3 = vector.extract_strided_slice %1 {offsets = [0, 0], sizes = [16, 495], strides = [1, 1]} : vector<16x512xf32> to vector<16x495xf32>
    %4 = tpu.concatenate %2, %3 in 1 : vector<16x17xf32>, vector<16x495xf32> -> vector<16x512xf32>
    %5 = vector.extract_strided_slice %0 {offsets = [0, 0, 0], sizes = [1, 1, 512], strides = [1, 1, 1]} : vector<9x1x512xf32> to vector<1x1x512xf32>
    %6 = vector.shape_cast %5 : vector<1x1x512xf32> to vector<1x512xf32>
    %7 = vector.broadcast %6 : vector<1x512xf32> to vector<16x512xf32>
    %8 = arith.mulf %4, %7 : vector<16x512xf32>
    %9 = arith.truncf %8 : vector<16x512xf32> to vector<16x512xbf16>
    %c0_4 = arith.constant 0 : index
    %c0_5 = arith.constant 0 : index
    %10 = vector.load %arg10[%c0_4, %c0_5] : memref<144x512xbf16, #tpu.memory_space<vmem>>, vector<16x512xbf16>
    tpu.vector_store %arg10[%c0_4, %c0_5], %9 {strides = array<i32>} : memref<144x512xbf16, #tpu.memory_space<vmem>>, vector<16x512xbf16>,
    %11 = vector.extract_strided_slice %1 {offsets = [0, 496], sizes = [16, 16], strides = [1, 1]} : vector<16x512xf32> to vector<16x16xf32>
    %12 = vector.extract_strided_slice %1 {offsets = [0, 0], sizes = [16, 496], strides = [1, 1]} : vector<16x512xf32> to vector<16x496xf32>
    %13 = tpu.concatenate %11, %12 in 1 : vector<16x16xf32>, vector<16x496xf32> -> vector<16x512xf32>
    %14 = vector.extract_strided_slice %0 {offsets = [1, 0, 0], sizes = [1, 1, 512], strides = [1, 1, 1]} : vector<9x1x512xf32> to vector<1x1x512xf32>
    %15 = vector.shape_cast %14 : vector<1x1x512xf32> to vector<1x512xf32>
    %16 = vector.broadcast %15 : vector<1x512xf32> to vector<16x512xf32>
    %17 = arith.mulf %13, %16 : vector<16x512xf32>
    %18 = arith.truncf %17 : vector<16x512xf32> to vector<16x512xbf16>
    %c16 = arith.constant 16 : index
    %c0_6 = arith.constant 0 : index
    %19 = vector.load %arg10[%c16, %c0_6] : memref<144x512xbf16, #tpu.memory_space<vmem>>, vector<16x512xbf16>
    tpu.vector_store %arg10[%c16, %c0_6], %18 {strides = array<i32>} : memref<144x512xbf16, #tpu.memory_space<vmem>>, vector<16x512xbf16>,
    %20 = vector.extract_strided_slice %1 {offsets = [0, 497], sizes = [16, 15], strides = [1, 1]} : vector<16x512xf32> to vector<16x15xf32>
    %21 = vector.extract_strided_slice %1 {offsets = [0, 0], sizes = [16, 497], strides = [1, 1]} : vector<16x512xf32> to vector<16x497xf32>
    %22 = tpu.concatenate %20, %21 in 1 : vector<16x15xf32>, vector<16x497xf32> -> vector<16x512xf32>
    %23 = vector.extract_strided_slice %0 {offsets = [2, 0, 0], sizes = [1, 1, 512], strides = [1, 1, 1]} : vector<9x1x512xf32> to vector<1x1x512xf32>
    %24 = vector.shape_cast %23 : vector<1x1x512xf32> to vector<1x512xf32>
    %25 = vector.broadcast %24 : vector<1x512xf32> to vector<16x512xf32>
    %26 = arith.mulf %22, %25 : vector<16x512xf32>
    %27 = arith.truncf %26 : vector<16x512xf32> to vector<16x512xbf16>
    %c32 = arith.constant 32 : index
    %c0_7 = arith.constant 0 : index
    %28 = vector.load %arg10[%c32, %c0_7] : memref<144x512xbf16, #tpu.memory_space<vmem>>, vector<16x512xbf16>
    tpu.vector_store %arg10[%c32, %c0_7], %27 {strides = array<i32>} : memref<144x512xbf16, #tpu.memory_space<vmem>>, vector<16x512xbf16>,
    %29 = vector.extract_strided_slice %1 {offsets = [0, 511], sizes = [16, 1], strides = [1, 1]} : vector<16x512xf32> to vector<16x1xf32>
    %30 = vector.extract_strided_slice %1 {offsets = [0, 0], sizes = [16, 511], strides = [1, 1]} : vector<16x512xf32> to vector<16x511xf32>
    %31 = tpu.concatenate %29, %30 in 1 : vector<16x1xf32>, vector<16x511xf32> -> vector<16x512xf32>
    %32 = vector.extract_strided_slice %0 {offsets = [3, 0, 0], sizes = [1, 1, 512], strides = [1, 1, 1]} : vector<9x1x512xf32> to vector<1x1x512xf32>
    %33 = vector.shape_cast %32 : vector<1x1x512xf32> to vector<1x512xf32>
    %34 = vector.broadcast %33 : vector<1x512xf32> to vector<16x512xf32>
    %35 = arith.mulf %31, %34 : vector<16x512xf32>
    %36 = arith.truncf %35 : vector<16x512xf32> to vector<16x512xbf16>
    %c48 = arith.constant 48 : index
    %c0_8 = arith.constant 0 : index
    %37 = vector.load %arg10[%c48, %c0_8] : memref<144x512xbf16, #tpu.memory_space<vmem>>, vector<16x512xbf16>
    tpu.vector_store %arg10[%c48, %c0_8], %36 {strides = array<i32>} : memref<144x512xbf16, #tpu.memory_space<vmem>>, vector<16x512xbf16>,
    %38 = arith.truncf %1 : vector<16x512xf32> to vector<16x512xbf16>
    %c64 = arith.constant 64 : index
    %c0_9 = arith.constant 0 : index
    %39 = vector.load %arg10[%c64, %c0_9] : memref<144x512xbf16, #tpu.memory_space<vmem>>, vector<16x512xbf16>
    tpu.vector_store %arg10[%c64, %c0_9], %38 {strides = array<i32>} : memref<144x512xbf16, #tpu.memory_space<vmem>>, vector<16x512xbf16>,
    %40 = vector.extract_strided_slice %1 {offsets = [0, 1], sizes = [16, 511], strides = [1, 1]} : vector<16x512xf32> to vector<16x511xf32>
    %41 = vector.extract_strided_slice %1 {offsets = [0, 0], sizes = [16, 1], strides = [1, 1]} : vector<16x512xf32> to vector<16x1xf32>
    %42 = tpu.concatenate %40, %41 in 1 : vector<16x511xf32>, vector<16x1xf32> -> vector<16x512xf32>
    %43 = vector.extract_strided_slice %0 {offsets = [5, 0, 0], sizes = [1, 1, 512], strides = [1, 1, 1]} : vector<9x1x512xf32> to vector<1x1x512xf32>
    %44 = vector.shape_cast %43 : vector<1x1x512xf32> to vector<1x512xf32>
    %45 = vector.broadcast %44 : vector<1x512xf32> to vector<16x512xf32>
    %46 = arith.mulf %42, %45 : vector<16x512xf32>
    %47 = arith.truncf %46 : vector<16x512xf32> to vector<16x512xbf16>
    %c80 = arith.constant 80 : index
    %c0_10 = arith.constant 0 : index
    %48 = vector.load %arg10[%c80, %c0_10] : memref<144x512xbf16, #tpu.memory_space<vmem>>, vector<16x512xbf16>
    tpu.vector_store %arg10[%c80, %c0_10], %47 {strides = array<i32>} : memref<144x512xbf16, #tpu.memory_space<vmem>>, vector<16x512xbf16>,
    %49 = vector.extract_strided_slice %1 {offsets = [0, 15], sizes = [16, 497], strides = [1, 1]} : vector<16x512xf32> to vector<16x497xf32>
    %50 = vector.extract_strided_slice %1 {offsets = [0, 0], sizes = [16, 15], strides = [1, 1]} : vector<16x512xf32> to vector<16x15xf32>
    %51 = tpu.concatenate %49, %50 in 1 : vector<16x497xf32>, vector<16x15xf32> -> vector<16x512xf32>
    %52 = vector.extract_strided_slice %0 {offsets = [6, 0, 0], sizes = [1, 1, 512], strides = [1, 1, 1]} : vector<9x1x512xf32> to vector<1x1x512xf32>
    %53 = vector.shape_cast %52 : vector<1x1x512xf32> to vector<1x512xf32>
    %54 = vector.broadcast %53 : vector<1x512xf32> to vector<16x512xf32>
    %55 = arith.mulf %51, %54 : vector<16x512xf32>
    %56 = arith.truncf %55 : vector<16x512xf32> to vector<16x512xbf16>
    %c96 = arith.constant 96 : index
    %c0_11 = arith.constant 0 : index
    %57 = vector.load %arg10[%c96, %c0_11] : memref<144x512xbf16, #tpu.memory_space<vmem>>, vector<16x512xbf16>
    tpu.vector_store %arg10[%c96, %c0_11], %56 {strides = array<i32>} : memref<144x512xbf16, #tpu.memory_space<vmem>>, vector<16x512xbf16>,
    %58 = vector.extract_strided_slice %1 {offsets = [0, 16], sizes = [16, 496], strides = [1, 1]} : vector<16x512xf32> to vector<16x496xf32>
    %59 = vector.extract_strided_slice %1 {offsets = [0, 0], sizes = [16, 16], strides = [1, 1]} : vector<16x512xf32> to vector<16x16xf32>
    %60 = tpu.concatenate %58, %59 in 1 : vector<16x496xf32>, vector<16x16xf32> -> vector<16x512xf32>
    %61 = vector.extract_strided_slice %0 {offsets = [7, 0, 0], sizes = [1, 1, 512], strides = [1, 1, 1]} : vector<9x1x512xf32> to vector<1x1x512xf32>
    %62 = vector.shape_cast %61 : vector<1x1x512xf32> to vector<1x512xf32>
    %63 = vector.broadcast %62 : vector<1x512xf32> to vector<16x512xf32>
    %64 = arith.mulf %60, %63 : vector<16x512xf32>
    %65 = arith.truncf %64 : vector<16x512xf32> to vector<16x512xbf16>
    %c112 = arith.constant 112 : index
    %c0_12 = arith.constant 0 : index
    %66 = vector.load %arg10[%c112, %c0_12] : memref<144x512xbf16, #tpu.memory_space<vmem>>, vector<16x512xbf16>
    tpu.vector_store %arg10[%c112, %c0_12], %65 {strides = array<i32>} : memref<144x512xbf16, #tpu.memory_space<vmem>>, vector<16x512xbf16>,
    %67 = vector.extract_strided_slice %1 {offsets = [0, 17], sizes = [16, 495], strides = [1, 1]} : vector<16x512xf32> to vector<16x495xf32>
    %68 = vector.extract_strided_slice %1 {offsets = [0, 0], sizes = [16, 17], strides = [1, 1]} : vector<16x512xf32> to vector<16x17xf32>
    %69 = tpu.concatenate %67, %68 in 1 : vector<16x495xf32>, vector<16x17xf32> -> vector<16x512xf32>
    %70 = vector.extract_strided_slice %0 {offsets = [8, 0, 0], sizes = [1, 1, 512], strides = [1, 1, 1]} : vector<9x1x512xf32> to vector<1x1x512xf32>
    %71 = vector.shape_cast %70 : vector<1x1x512xf32> to vector<1x512xf32>
    %72 = vector.broadcast %71 : vector<1x512xf32> to vector<16x512xf32>
    %73 = arith.mulf %69, %72 : vector<16x512xf32>
    %74 = arith.truncf %73 : vector<16x512xf32> to vector<16x512xbf16>
    %c128 = arith.constant 128 : index
    %c0_13 = arith.constant 0 : index
    %75 = vector.load %arg10[%c128, %c0_13] : memref<144x512xbf16, #tpu.memory_space<vmem>>, vector<16x512xbf16>
    tpu.vector_store %arg10[%c128, %c0_13], %74 {strides = array<i32>} : memref<144x512xbf16, #tpu.memory_space<vmem>>, vector<16x512xbf16>,
    %c0_14 = arith.constant 0 : index
    %c0_15 = arith.constant 0 : index
    %76 = vector.load %arg3[%c0_14, %c0_15] : memref<16x144xbf16, #tpu.memory_space<vmem>>, vector<16x144xbf16>
    %c0_16 = arith.constant 0 : index
    %c0_17 = arith.constant 0 : index
    %77 = vector.load %arg10[%c0_16, %c0_17] : memref<144x512xbf16, #tpu.memory_space<vmem>>, vector<144x512xbf16>
    %cst = arith.constant dense<0.000000e+00> : vector<16x512xf32>
    %78 = tpu.matmul %76, %77, %cst {dimension_numbers = #tpu.dot_dimension_numbers<[1], [0], [0], [1], [0, 0, 1, 1], [], []>} : vector<16x144xbf16>, vector<144x512xbf16>, vector<16x512xf32> -> vector<16x512xf32>
    %cst_18 = arith.constant dense<0.000000e+00> : vector<16xf32>
    %79 = vector.multi_reduction <add>, %78, %cst_18 [1] : vector<16x512xf32> to vector<16xf32>
    %80 = vector.shape_cast %79 : vector<16xf32> to vector<16x1xf32>
    %81 = arith.mulf %78, %78 : vector<16x512xf32>
    %cst_19 = arith.constant dense<0.000000e+00> : vector<16xf32>
    %82 = vector.multi_reduction <add>, %81, %cst_19 [1] : vector<16x512xf32> to vector<16xf32>
    %83 = vector.shape_cast %82 : vector<16xf32> to vector<16x1xf32>
    %cst_20 = arith.constant 0.001953125 : f32
    %84 = vector.broadcast %cst_20 : f32 to vector<16x1xf32>
    %85 = arith.mulf %80, %84 : vector<16x1xf32>
    %cst_21 = arith.constant 0.001953125 : f32
    %86 = vector.broadcast %cst_21 : f32 to vector<16x1xf32>
    %87 = arith.mulf %83, %86 : vector<16x1xf32>
    %88 = arith.mulf %85, %85 : vector<16x1xf32>
    %89 = arith.subf %87, %88 : vector<16x1xf32>
    %cst_22 = arith.constant 0.000000e+00 : f32
    %90 = vector.broadcast %cst_22 : f32 to vector<16x1xf32>
    %91 = arith.maximumf %89, %90 : vector<16x1xf32>
    %c0_23 = arith.constant 0 : index
    %c0_24 = arith.constant 0 : index
    %92 = vector.load %arg4[%c0_23, %c0_24] : memref<16x1xf32, #tpu.memory_space<vmem>>, vector<16x1xf32>
    %cst_25 = arith.constant 9.99999974E-6 : f32
    %93 = vector.broadcast %cst_25 : f32 to vector<16x1xf32>
    %94 = arith.addf %91, %93 : vector<16x1xf32>
    %95 = math.rsqrt %94 : vector<16x1xf32>
    %96 = arith.mulf %92, %95 : vector<16x1xf32>
    %c0_26 = arith.constant 0 : index
    %c0_27 = arith.constant 0 : index
    %97 = vector.load %arg5[%c0_26, %c0_27] : memref<16x1xf32, #tpu.memory_space<vmem>>, vector<16x1xf32>
    %98 = arith.mulf %85, %96 : vector<16x1xf32>
    %99 = arith.subf %97, %98 : vector<16x1xf32>
    %100 = vector.broadcast %96 : vector<16x1xf32> to vector<16x512xf32>
    %101 = arith.mulf %78, %100 : vector<16x512xf32>
    %102 = vector.broadcast %99 : vector<16x1xf32> to vector<16x512xf32>
    %103 = arith.addf %101, %102 : vector<16x512xf32>
    %cst_28 = arith.constant 0.000000e+00 : f32
    %104 = vector.broadcast %cst_28 : f32 to vector<16x512xf32>
    %105 = arith.maximumf %103, %104 : vector<16x512xf32>
    %106 = vector.extract_strided_slice %105 {offsets = [0, 495], sizes = [16, 17], strides = [1, 1]} : vector<16x512xf32> to vector<16x17xf32>
    %107 = vector.extract_strided_slice %105 {offsets = [0, 0], sizes = [16, 495], strides = [1, 1]} : vector<16x512xf32> to vector<16x495xf32>
    %108 = tpu.concatenate %106, %107 in 1 : vector<16x17xf32>, vector<16x495xf32> -> vector<16x512xf32>
    %109 = vector.extract_strided_slice %0 {offsets = [0, 0, 0], sizes = [1, 1, 512], strides = [1, 1, 1]} : vector<9x1x512xf32> to vector<1x1x512xf32>
    %110 = vector.shape_cast %109 : vector<1x1x512xf32> to vector<1x512xf32>
    %111 = vector.broadcast %110 : vector<1x512xf32> to vector<16x512xf32>
    %112 = arith.mulf %108, %111 : vector<16x512xf32>
    %113 = arith.truncf %112 : vector<16x512xf32> to vector<16x512xbf16>
    %c0_29 = arith.constant 0 : index
    %c0_30 = arith.constant 0 : index
    %114 = vector.load %arg10[%c0_29, %c0_30] : memref<144x512xbf16, #tpu.memory_space<vmem>>, vector<16x512xbf16>
    tpu.vector_store %arg10[%c0_29, %c0_30], %113 {strides = array<i32>} : memref<144x512xbf16, #tpu.memory_space<vmem>>, vector<16x512xbf16>,
    %115 = vector.extract_strided_slice %105 {offsets = [0, 496], sizes = [16, 16], strides = [1, 1]} : vector<16x512xf32> to vector<16x16xf32>
    %116 = vector.extract_strided_slice %105 {offsets = [0, 0], sizes = [16, 496], strides = [1, 1]} : vector<16x512xf32> to vector<16x496xf32>
    %117 = tpu.concatenate %115, %116 in 1 : vector<16x16xf32>, vector<16x496xf32> -> vector<16x512xf32>
    %118 = vector.extract_strided_slice %0 {offsets = [1, 0, 0], sizes = [1, 1, 512], strides = [1, 1, 1]} : vector<9x1x512xf32> to vector<1x1x512xf32>
    %119 = vector.shape_cast %118 : vector<1x1x512xf32> to vector<1x512xf32>
    %120 = vector.broadcast %119 : vector<1x512xf32> to vector<16x512xf32>
    %121 = arith.mulf %117, %120 : vector<16x512xf32>
    %122 = arith.truncf %121 : vector<16x512xf32> to vector<16x512xbf16>
    %c16_31 = arith.constant 16 : index
    %c0_32 = arith.constant 0 : index
    %123 = vector.load %arg10[%c16_31, %c0_32] : memref<144x512xbf16, #tpu.memory_space<vmem>>, vector<16x512xbf16>
    tpu.vector_store %arg10[%c16_31, %c0_32], %122 {strides = array<i32>} : memref<144x512xbf16, #tpu.memory_space<vmem>>, vector<16x512xbf16>,
    %124 = vector.extract_strided_slice %105 {offsets = [0, 497], sizes = [16, 15], strides = [1, 1]} : vector<16x512xf32> to vector<16x15xf32>
    %125 = vector.extract_strided_slice %105 {offsets = [0, 0], sizes = [16, 497], strides = [1, 1]} : vector<16x512xf32> to vector<16x497xf32>
    %126 = tpu.concatenate %124, %125 in 1 : vector<16x15xf32>, vector<16x497xf32> -> vector<16x512xf32>
    %127 = vector.extract_strided_slice %0 {offsets = [2, 0, 0], sizes = [1, 1, 512], strides = [1, 1, 1]} : vector<9x1x512xf32> to vector<1x1x512xf32>
    %128 = vector.shape_cast %127 : vector<1x1x512xf32> to vector<1x512xf32>
    %129 = vector.broadcast %128 : vector<1x512xf32> to vector<16x512xf32>
    %130 = arith.mulf %126, %129 : vector<16x512xf32>
    %131 = arith.truncf %130 : vector<16x512xf32> to vector<16x512xbf16>
    %c32_33 = arith.constant 32 : index
    %c0_34 = arith.constant 0 : index
    %132 = vector.load %arg10[%c32_33, %c0_34] : memref<144x512xbf16, #tpu.memory_space<vmem>>, vector<16x512xbf16>
    tpu.vector_store %arg10[%c32_33, %c0_34], %131 {strides = array<i32>} : memref<144x512xbf16, #tpu.memory_space<vmem>>, vector<16x512xbf16>,
    %133 = vector.extract_strided_slice %105 {offsets = [0, 511], sizes = [16, 1], strides = [1, 1]} : vector<16x512xf32> to vector<16x1xf32>
    %134 = vector.extract_strided_slice %105 {offsets = [0, 0], sizes = [16, 511], strides = [1, 1]} : vector<16x512xf32> to vector<16x511xf32>
    %135 = tpu.concatenate %133, %134 in 1 : vector<16x1xf32>, vector<16x511xf32> -> vector<16x512xf32>
    %136 = vector.extract_strided_slice %0 {offsets = [3, 0, 0], sizes = [1, 1, 512], strides = [1, 1, 1]} : vector<9x1x512xf32> to vector<1x1x512xf32>
    %137 = vector.shape_cast %136 : vector<1x1x512xf32> to vector<1x512xf32>
    %138 = vector.broadcast %137 : vector<1x512xf32> to vector<16x512xf32>
    %139 = arith.mulf %135, %138 : vector<16x512xf32>
    %140 = arith.truncf %139 : vector<16x512xf32> to vector<16x512xbf16>
    %c48_35 = arith.constant 48 : index
    %c0_36 = arith.constant 0 : index
    %141 = vector.load %arg10[%c48_35, %c0_36] : memref<144x512xbf16, #tpu.memory_space<vmem>>, vector<16x512xbf16>
    tpu.vector_store %arg10[%c48_35, %c0_36], %140 {strides = array<i32>} : memref<144x512xbf16, #tpu.memory_space<vmem>>, vector<16x512xbf16>,
    %142 = arith.truncf %105 : vector<16x512xf32> to vector<16x512xbf16>
    %c64_37 = arith.constant 64 : index
    %c0_38 = arith.constant 0 : index
    %143 = vector.load %arg10[%c64_37, %c0_38] : memref<144x512xbf16, #tpu.memory_space<vmem>>, vector<16x512xbf16>
    tpu.vector_store %arg10[%c64_37, %c0_38], %142 {strides = array<i32>} : memref<144x512xbf16, #tpu.memory_space<vmem>>, vector<16x512xbf16>,
    %144 = vector.extract_strided_slice %105 {offsets = [0, 1], sizes = [16, 511], strides = [1, 1]} : vector<16x512xf32> to vector<16x511xf32>
    %145 = vector.extract_strided_slice %105 {offsets = [0, 0], sizes = [16, 1], strides = [1, 1]} : vector<16x512xf32> to vector<16x1xf32>
    %146 = tpu.concatenate %144, %145 in 1 : vector<16x511xf32>, vector<16x1xf32> -> vector<16x512xf32>
    %147 = vector.extract_strided_slice %0 {offsets = [5, 0, 0], sizes = [1, 1, 512], strides = [1, 1, 1]} : vector<9x1x512xf32> to vector<1x1x512xf32>
    %148 = vector.shape_cast %147 : vector<1x1x512xf32> to vector<1x512xf32>
    %149 = vector.broadcast %148 : vector<1x512xf32> to vector<16x512xf32>
    %150 = arith.mulf %146, %149 : vector<16x512xf32>
    %151 = arith.truncf %150 : vector<16x512xf32> to vector<16x512xbf16>
    %c80_39 = arith.constant 80 : index
    %c0_40 = arith.constant 0 : index
    %152 = vector.load %arg10[%c80_39, %c0_40] : memref<144x512xbf16, #tpu.memory_space<vmem>>, vector<16x512xbf16>
    tpu.vector_store %arg10[%c80_39, %c0_40], %151 {strides = array<i32>} : memref<144x512xbf16, #tpu.memory_space<vmem>>, vector<16x512xbf16>,
    %153 = vector.extract_strided_slice %105 {offsets = [0, 15], sizes = [16, 497], strides = [1, 1]} : vector<16x512xf32> to vector<16x497xf32>
    %154 = vector.extract_strided_slice %105 {offsets = [0, 0], sizes = [16, 15], strides = [1, 1]} : vector<16x512xf32> to vector<16x15xf32>
    %155 = tpu.concatenate %153, %154 in 1 : vector<16x497xf32>, vector<16x15xf32> -> vector<16x512xf32>
    %156 = vector.extract_strided_slice %0 {offsets = [6, 0, 0], sizes = [1, 1, 512], strides = [1, 1, 1]} : vector<9x1x512xf32> to vector<1x1x512xf32>
    %157 = vector.shape_cast %156 : vector<1x1x512xf32> to vector<1x512xf32>
    %158 = vector.broadcast %157 : vector<1x512xf32> to vector<16x512xf32>
    %159 = arith.mulf %155, %158 : vector<16x512xf32>
    %160 = arith.truncf %159 : vector<16x512xf32> to vector<16x512xbf16>
    %c96_41 = arith.constant 96 : index
    %c0_42 = arith.constant 0 : index
    %161 = vector.load %arg10[%c96_41, %c0_42] : memref<144x512xbf16, #tpu.memory_space<vmem>>, vector<16x512xbf16>
    tpu.vector_store %arg10[%c96_41, %c0_42], %160 {strides = array<i32>} : memref<144x512xbf16, #tpu.memory_space<vmem>>, vector<16x512xbf16>,
    %162 = vector.extract_strided_slice %105 {offsets = [0, 16], sizes = [16, 496], strides = [1, 1]} : vector<16x512xf32> to vector<16x496xf32>
    %163 = vector.extract_strided_slice %105 {offsets = [0, 0], sizes = [16, 16], strides = [1, 1]} : vector<16x512xf32> to vector<16x16xf32>
    %164 = tpu.concatenate %162, %163 in 1 : vector<16x496xf32>, vector<16x16xf32> -> vector<16x512xf32>
    %165 = vector.extract_strided_slice %0 {offsets = [7, 0, 0], sizes = [1, 1, 512], strides = [1, 1, 1]} : vector<9x1x512xf32> to vector<1x1x512xf32>
    %166 = vector.shape_cast %165 : vector<1x1x512xf32> to vector<1x512xf32>
    %167 = vector.broadcast %166 : vector<1x512xf32> to vector<16x512xf32>
    %168 = arith.mulf %164, %167 : vector<16x512xf32>
    %169 = arith.truncf %168 : vector<16x512xf32> to vector<16x512xbf16>
    %c112_43 = arith.constant 112 : index
    %c0_44 = arith.constant 0 : index
    %170 = vector.load %arg10[%c112_43, %c0_44] : memref<144x512xbf16, #tpu.memory_space<vmem>>, vector<16x512xbf16>
    tpu.vector_store %arg10[%c112_43, %c0_44], %169 {strides = array<i32>} : memref<144x512xbf16, #tpu.memory_space<vmem>>, vector<16x512xbf16>,
    %171 = vector.extract_strided_slice %105 {offsets = [0, 17], sizes = [16, 495], strides = [1, 1]} : vector<16x512xf32> to vector<16x495xf32>
    %172 = vector.extract_strided_slice %105 {offsets = [0, 0], sizes = [16, 17], strides = [1, 1]} : vector<16x512xf32> to vector<16x17xf32>
    %173 = tpu.concatenate %171, %172 in 1 : vector<16x495xf32>, vector<16x17xf32> -> vector<16x512xf32>
    %174 = vector.extract_strided_slice %0 {offsets = [8, 0, 0], sizes = [1, 1, 512], strides = [1, 1, 1]} : vector<9x1x512xf32> to vector<1x1x512xf32>
    %175 = vector.shape_cast %174 : vector<1x1x512xf32> to vector<1x512xf32>
    %176 = vector.broadcast %175 : vector<1x512xf32> to vector<16x512xf32>
    %177 = arith.mulf %173, %176 : vector<16x512xf32>
    %178 = arith.truncf %177 : vector<16x512xf32> to vector<16x512xbf16>
    %c128_45 = arith.constant 128 : index
    %c0_46 = arith.constant 0 : index
    %179 = vector.load %arg10[%c128_45, %c0_46] : memref<144x512xbf16, #tpu.memory_space<vmem>>, vector<16x512xbf16>
    tpu.vector_store %arg10[%c128_45, %c0_46], %178 {strides = array<i32>} : memref<144x512xbf16, #tpu.memory_space<vmem>>, vector<16x512xbf16>,
    %c0_47 = arith.constant 0 : index
    %c0_48 = arith.constant 0 : index
    %180 = vector.load %arg6[%c0_47, %c0_48] : memref<16x144xbf16, #tpu.memory_space<vmem>>, vector<16x144xbf16>
    %c0_49 = arith.constant 0 : index
    %c0_50 = arith.constant 0 : index
    %181 = vector.load %arg10[%c0_49, %c0_50] : memref<144x512xbf16, #tpu.memory_space<vmem>>, vector<144x512xbf16>
    %cst_51 = arith.constant dense<0.000000e+00> : vector<16x512xf32>
    %182 = tpu.matmul %180, %181, %cst_51 {dimension_numbers = #tpu.dot_dimension_numbers<[1], [0], [0], [1], [0, 0, 1, 1], [], []>} : vector<16x144xbf16>, vector<144x512xbf16>, vector<16x512xf32> -> vector<16x512xf32>
    %cst_52 = arith.constant dense<0.000000e+00> : vector<16xf32>
    %183 = vector.multi_reduction <add>, %182, %cst_52 [1] : vector<16x512xf32> to vector<16xf32>
    %184 = vector.shape_cast %183 : vector<16xf32> to vector<16x1xf32>
    %185 = arith.mulf %182, %182 : vector<16x512xf32>
    %cst_53 = arith.constant dense<0.000000e+00> : vector<16xf32>
    %186 = vector.multi_reduction <add>, %185, %cst_53 [1] : vector<16x512xf32> to vector<16xf32>
    %187 = vector.shape_cast %186 : vector<16xf32> to vector<16x1xf32>
    %cst_54 = arith.constant 0.001953125 : f32
    %188 = vector.broadcast %cst_54 : f32 to vector<16x1xf32>
    %189 = arith.mulf %184, %188 : vector<16x1xf32>
    %cst_55 = arith.constant 0.001953125 : f32
    %190 = vector.broadcast %cst_55 : f32 to vector<16x1xf32>
    %191 = arith.mulf %187, %190 : vector<16x1xf32>
    %192 = arith.mulf %189, %189 : vector<16x1xf32>
    %193 = arith.subf %191, %192 : vector<16x1xf32>
    %cst_56 = arith.constant 0.000000e+00 : f32
    %194 = vector.broadcast %cst_56 : f32 to vector<16x1xf32>
    %195 = arith.maximumf %193, %194 : vector<16x1xf32>
    %c0_57 = arith.constant 0 : index
    %c0_58 = arith.constant 0 : index
    %196 = vector.load %arg7[%c0_57, %c0_58] : memref<16x1xf32, #tpu.memory_space<vmem>>, vector<16x1xf32>
    %cst_59 = arith.constant 9.99999974E-6 : f32
    %197 = vector.broadcast %cst_59 : f32 to vector<16x1xf32>
    %198 = arith.addf %195, %197 : vector<16x1xf32>
    %199 = math.rsqrt %198 : vector<16x1xf32>
    %200 = arith.mulf %196, %199 : vector<16x1xf32>
    %c0_60 = arith.constant 0 : index
    %c0_61 = arith.constant 0 : index
    %201 = vector.load %arg8[%c0_60, %c0_61] : memref<16x1xf32, #tpu.memory_space<vmem>>, vector<16x1xf32>
    %202 = arith.mulf %189, %200 : vector<16x1xf32>
    %203 = arith.subf %201, %202 : vector<16x1xf32>
    %204 = vector.broadcast %200 : vector<16x1xf32> to vector<16x512xf32>
    %205 = arith.mulf %182, %204 : vector<16x512xf32>
    %206 = vector.broadcast %203 : vector<16x1xf32> to vector<16x512xf32>
    %207 = arith.addf %205, %206 : vector<16x512xf32>
    %cst_62 = arith.constant 0.000000e+00 : f32
    %208 = vector.broadcast %cst_62 : f32 to vector<16x512xf32>
    %209 = arith.maximumf %207, %208 : vector<16x512xf32>
    %210 = vector.extract_strided_slice %209 {offsets = [0, 1], sizes = [16, 511], strides = [1, 1]} : vector<16x512xf32> to vector<16x511xf32>
    %211 = vector.extract_strided_slice %209 {offsets = [0, 0], sizes = [16, 1], strides = [1, 1]} : vector<16x512xf32> to vector<16x1xf32>
    %212 = tpu.concatenate %210, %211 in 1 : vector<16x511xf32>, vector<16x1xf32> -> vector<16x512xf32>
    %213 = arith.maximumf %209, %212 : vector<16x512xf32>
    %214 = vector.extract_strided_slice %213 {offsets = [0, 16], sizes = [16, 496], strides = [1, 1]} : vector<16x512xf32> to vector<16x496xf32>
    %215 = vector.extract_strided_slice %213 {offsets = [0, 0], sizes = [16, 16], strides = [1, 1]} : vector<16x512xf32> to vector<16x16xf32>
    %216 = tpu.concatenate %214, %215 in 1 : vector<16x496xf32>, vector<16x16xf32> -> vector<16x512xf32>
    %217 = arith.maximumf %213, %216 : vector<16x512xf32>
    %c0_63 = arith.constant 0 : index
    %c0_64 = arith.constant 0 : index
    %218 = vector.load %arg2[%c0_63, %c0_64] : memref<16x8xf32, #tpu.memory_space<vmem>>, vector<16x8xf32>
    %219 = vector.extract_strided_slice %217 {offsets = [0, 0], sizes = [16, 16], strides = [1, 1]} : vector<16x512xf32> to vector<16x16xf32>
    %cst_65 = arith.constant dense<0.000000e+00> : vector<16x8xf32>
    %220 = tpu.matmul %219, %218, %cst_65 {dimension_numbers = #tpu.dot_dimension_numbers<[1], [0], [0], [1], [0, 0, 1, 1], [], []>} : vector<16x16xf32>, vector<16x8xf32>, vector<16x8xf32> -> vector<16x8xf32>
    %221 = vector.extract_strided_slice %217 {offsets = [0, 32], sizes = [16, 16], strides = [1, 1]} : vector<16x512xf32> to vector<16x16xf32>
    %cst_66 = arith.constant dense<0.000000e+00> : vector<16x8xf32>
    %222 = tpu.matmul %221, %218, %cst_66 {dimension_numbers = #tpu.dot_dimension_numbers<[1], [0], [0], [1], [0, 0, 1, 1], [], []>} : vector<16x16xf32>, vector<16x8xf32>, vector<16x8xf32> -> vector<16x8xf32>
    %223 = vector.extract_strided_slice %217 {offsets = [0, 64], sizes = [16, 16], strides = [1, 1]} : vector<16x512xf32> to vector<16x16xf32>
    %cst_67 = arith.constant dense<0.000000e+00> : vector<16x8xf32>
    %224 = tpu.matmul %223, %218, %cst_67 {dimension_numbers = #tpu.dot_dimension_numbers<[1], [0], [0], [1], [0, 0, 1, 1], [], []>} : vector<16x16xf32>, vector<16x8xf32>, vector<16x8xf32> -> vector<16x8xf32>
    %225 = vector.extract_strided_slice %217 {offsets = [0, 96], sizes = [16, 16], strides = [1, 1]} : vector<16x512xf32> to vector<16x16xf32>
    %cst_68 = arith.constant dense<0.000000e+00> : vector<16x8xf32>
    %226 = tpu.matmul %225, %218, %cst_68 {dimension_numbers = #tpu.dot_dimension_numbers<[1], [0], [0], [1], [0, 0, 1, 1], [], []>} : vector<16x16xf32>, vector<16x8xf32>, vector<16x8xf32> -> vector<16x8xf32>
    %227 = vector.extract_strided_slice %217 {offsets = [0, 128], sizes = [16, 16], strides = [1, 1]} : vector<16x512xf32> to vector<16x16xf32>
    %cst_69 = arith.constant dense<0.000000e+00> : vector<16x8xf32>
    %228 = tpu.matmul %227, %218, %cst_69 {dimension_numbers = #tpu.dot_dimension_numbers<[1], [0], [0], [1], [0, 0, 1, 1], [], []>} : vector<16x16xf32>, vector<16x8xf32>, vector<16x8xf32> -> vector<16x8xf32>
    %229 = vector.extract_strided_slice %217 {offsets = [0, 160], sizes = [16, 16], strides = [1, 1]} : vector<16x512xf32> to vector<16x16xf32>
    %cst_70 = arith.constant dense<0.000000e+00> : vector<16x8xf32>
    %230 = tpu.matmul %229, %218, %cst_70 {dimension_numbers = #tpu.dot_dimension_numbers<[1], [0], [0], [1], [0, 0, 1, 1], [], []>} : vector<16x16xf32>, vector<16x8xf32>, vector<16x8xf32> -> vector<16x8xf32>
    %231 = vector.extract_strided_slice %217 {offsets = [0, 192], sizes = [16, 16], strides = [1, 1]} : vector<16x512xf32> to vector<16x16xf32>
    %cst_71 = arith.constant dense<0.000000e+00> : vector<16x8xf32>
    %232 = tpu.matmul %231, %218, %cst_71 {dimension_numbers = #tpu.dot_dimension_numbers<[1], [0], [0], [1], [0, 0, 1, 1], [], []>} : vector<16x16xf32>, vector<16x8xf32>, vector<16x8xf32> -> vector<16x8xf32>
    %233 = vector.extract_strided_slice %217 {offsets = [0, 224], sizes = [16, 16], strides = [1, 1]} : vector<16x512xf32> to vector<16x16xf32>
    %cst_72 = arith.constant dense<0.000000e+00> : vector<16x8xf32>
    %234 = tpu.matmul %233, %218, %cst_72 {dimension_numbers = #tpu.dot_dimension_numbers<[1], [0], [0], [1], [0, 0, 1, 1], [], []>} : vector<16x16xf32>, vector<16x8xf32>, vector<16x8xf32> -> vector<16x8xf32>
    %235 = vector.extract_strided_slice %217 {offsets = [0, 256], sizes = [16, 16], strides = [1, 1]} : vector<16x512xf32> to vector<16x16xf32>
    %cst_73 = arith.constant dense<0.000000e+00> : vector<16x8xf32>
    %236 = tpu.matmul %235, %218, %cst_73 {dimension_numbers = #tpu.dot_dimension_numbers<[1], [0], [0], [1], [0, 0, 1, 1], [], []>} : vector<16x16xf32>, vector<16x8xf32>, vector<16x8xf32> -> vector<16x8xf32>
    %237 = vector.extract_strided_slice %217 {offsets = [0, 288], sizes = [16, 16], strides = [1, 1]} : vector<16x512xf32> to vector<16x16xf32>
    %cst_74 = arith.constant dense<0.000000e+00> : vector<16x8xf32>
    %238 = tpu.matmul %237, %218, %cst_74 {dimension_numbers = #tpu.dot_dimension_numbers<[1], [0], [0], [1], [0, 0, 1, 1], [], []>} : vector<16x16xf32>, vector<16x8xf32>, vector<16x8xf32> -> vector<16x8xf32>
    %239 = vector.extract_strided_slice %217 {offsets = [0, 320], sizes = [16, 16], strides = [1, 1]} : vector<16x512xf32> to vector<16x16xf32>
    %cst_75 = arith.constant dense<0.000000e+00> : vector<16x8xf32>
    %240 = tpu.matmul %239, %218, %cst_75 {dimension_numbers = #tpu.dot_dimension_numbers<[1], [0], [0], [1], [0, 0, 1, 1], [], []>} : vector<16x16xf32>, vector<16x8xf32>, vector<16x8xf32> -> vector<16x8xf32>
    %241 = vector.extract_strided_slice %217 {offsets = [0, 352], sizes = [16, 16], strides = [1, 1]} : vector<16x512xf32> to vector<16x16xf32>
    %cst_76 = arith.constant dense<0.000000e+00> : vector<16x8xf32>
    %242 = tpu.matmul %241, %218, %cst_76 {dimension_numbers = #tpu.dot_dimension_numbers<[1], [0], [0], [1], [0, 0, 1, 1], [], []>} : vector<16x16xf32>, vector<16x8xf32>, vector<16x8xf32> -> vector<16x8xf32>
    %243 = vector.extract_strided_slice %217 {offsets = [0, 384], sizes = [16, 16], strides = [1, 1]} : vector<16x512xf32> to vector<16x16xf32>
    %cst_77 = arith.constant dense<0.000000e+00> : vector<16x8xf32>
    %244 = tpu.matmul %243, %218, %cst_77 {dimension_numbers = #tpu.dot_dimension_numbers<[1], [0], [0], [1], [0, 0, 1, 1], [], []>} : vector<16x16xf32>, vector<16x8xf32>, vector<16x8xf32> -> vector<16x8xf32>
    %245 = vector.extract_strided_slice %217 {offsets = [0, 416], sizes = [16, 16], strides = [1, 1]} : vector<16x512xf32> to vector<16x16xf32>
    %cst_78 = arith.constant dense<0.000000e+00> : vector<16x8xf32>
    %246 = tpu.matmul %245, %218, %cst_78 {dimension_numbers = #tpu.dot_dimension_numbers<[1], [0], [0], [1], [0, 0, 1, 1], [], []>} : vector<16x16xf32>, vector<16x8xf32>, vector<16x8xf32> -> vector<16x8xf32>
    %247 = vector.extract_strided_slice %217 {offsets = [0, 448], sizes = [16, 16], strides = [1, 1]} : vector<16x512xf32> to vector<16x16xf32>
    %cst_79 = arith.constant dense<0.000000e+00> : vector<16x8xf32>
    %248 = tpu.matmul %247, %218, %cst_79 {dimension_numbers = #tpu.dot_dimension_numbers<[1], [0], [0], [1], [0, 0, 1, 1], [], []>} : vector<16x16xf32>, vector<16x8xf32>, vector<16x8xf32> -> vector<16x8xf32>
    %249 = vector.extract_strided_slice %217 {offsets = [0, 480], sizes = [16, 16], strides = [1, 1]} : vector<16x512xf32> to vector<16x16xf32>
    %cst_80 = arith.constant dense<0.000000e+00> : vector<16x8xf32>
    %250 = tpu.matmul %249, %218, %cst_80 {dimension_numbers = #tpu.dot_dimension_numbers<[1], [0], [0], [1], [0, 0, 1, 1], [], []>} : vector<16x16xf32>, vector<16x8xf32>, vector<16x8xf32> -> vector<16x8xf32>
    %251 = tpu.concatenate %220, %222, %224, %226, %228, %230, %232, %234, %236, %238, %240, %242, %244, %246, %248, %250 in 1 : vector<16x8xf32>, vector<16x8xf32>, vector<16x8xf32>, vector<16x8xf32>, vector<16x8xf32>, vector<16x8xf32>, vector<16x8xf32>, vector<16x8xf32>, vector<16x8xf32>, vector<16x8xf32>, vector<16x8xf32>, vector<16x8xf32>, vector<16x8xf32>, vector<16x8xf32>, vector<16x8xf32>, vector<16x8xf32> -> vector<16x128xf32>
    %c0_81 = arith.constant 0 : index
    %c0_82 = arith.constant 0 : index
    %252 = vector.load %arg9[%c0_81, %c0_82] : memref<16x128xf32, #tpu.memory_space<vmem>>, vector<16x128xf32>
    tpu.vector_store %arg9[%c0_81, %c0_82], %251 {strides = array<i32>} : memref<16x128xf32, #tpu.memory_space<vmem>>, vector<16x128xf32>,
    return
  }
}

</mosaic_0001>

<llo_original>
// kernel: fcn_encoder_block.1
$region0: #{fcn_encoder_block.1}
  #allocation0 [shape = 'u32[]', space=smem, size = 0x4, offset = 0x4, fixed_abs, tag = 'smem constant byte address 0x4 - core index']
  #allocation1 [shape = 'u32[144,128]{1,0:T(1,128)}', space=vmem, size = 0x12000, scoped, tag = 'internal scratch']
  #allocation2 [shape = 'bf16[144,512]{1,0:T(16,128)(2,1)}', space=vmem, size = 0x24000, scoped, tag = 'scratch operand']
  %s0 = inlined_call_operand.vmem [shape: f32[16,512], index: 0, kind: input, shape index: {}]
  %s1 = inlined_call_operand.vmem [shape: f32[9,1,512], index: 1, kind: input, shape index: {}]
  %s2 = inlined_call_operand.vmem [shape: f32[16,8], index: 2, kind: input, shape index: {}]
  %s3 = inlined_call_operand.vmem [shape: bf16[16,144], index: 3, kind: input, shape index: {}]
  %s4 = inlined_call_operand.vmem [shape: f32[16,1], index: 4, kind: input, shape index: {}]
  %s5 = inlined_call_operand.vmem [shape: f32[16,1], index: 5, kind: input, shape index: {}]
  %s6 = inlined_call_operand.vmem [shape: bf16[16,144], index: 6, kind: input, shape index: {}]
  %s7 = inlined_call_operand.vmem [shape: f32[16,1], index: 7, kind: input, shape index: {}]
  %s8 = inlined_call_operand.vmem [shape: f32[16,1], index: 8, kind: input, shape index: {}]
  %s9 = inlined_call_operand.vmem [shape: f32[16,128], index: 9, kind: output, shape index: {}]
  %s10 = sld [smem:[#allocation0]]
  $region46: #{fcn_encoder_block.1} parent=0
    _
  %s12 = ssub.s32 1, %s10
  %s13 = scalar_select 0, %s12, %s10
  // Predicated region
  $region2: #{fcn_encoder_block.1} parent=0 // pred_check
    _
  $region3: #{fcn_encoder_block.1} parent=0 // pred_check_branch
    %15 = sbr.rel (0) target = $region5
  $region4: #{fcn_encoder_block.1} parent=0 // pred_region
    _
  $region5: #{fcn_encoder_block.1} parent=0 // pred_fallthru
    _
  // Predicated region
  $region6: #{fcn_encoder_block.1} parent=0 // pred_check
    _
  $region7: #{fcn_encoder_block.1} parent=0 // pred_check_branch
    %17 = sbr.rel (0) target = $region9
  $region8: #{fcn_encoder_block.1} parent=0 // pred_region
    _
  $region9: #{fcn_encoder_block.1} parent=0 // pred_fallthru
    _
  // Predicated region
  $region10: #{fcn_encoder_block.1} parent=0 // pred_check
    _
  $region11: #{fcn_encoder_block.1} parent=0 // pred_check_branch
    %19 = sbr.rel (0) target = $region13
  $region12: #{fcn_encoder_block.1} parent=0 // pred_region
    _
  $region13: #{fcn_encoder_block.1} parent=0 // pred_fallthru
    _
  // Predicated region
  $region14: #{fcn_encoder_block.1} parent=0 // pred_check
    _
  $region15: #{fcn_encoder_block.1} parent=0 // pred_check_branch
    %21 = sbr.rel (0) target = $region17
  $region16: #{fcn_encoder_block.1} parent=0 // pred_region
    _
  $region17: #{fcn_encoder_block.1} parent=0 // pred_fallthru
    _
  // Predicated region
  $region18: #{fcn_encoder_block.1} parent=0 // pred_check
    _
  $region19: #{fcn_encoder_block.1} parent=0 // pred_check_branch
    %23 = sbr.rel (0) target = $region21
  $region20: #{fcn_encoder_block.1} parent=0 // pred_region
    _
  $region21: #{fcn_encoder_block.1} parent=0 // pred_fallthru
    _
  // Predicated region
  $region22: #{fcn_encoder_block.1} parent=0 // pred_check
    _
  $region23: #{fcn_encoder_block.1} parent=0 // pred_check_branch
    %25 = sbr.rel (0) target = $region25
  $region24: #{fcn_encoder_block.1} parent=0 // pred_region
    _
  $region25: #{fcn_encoder_block.1} parent=0 // pred_fallthru
    _
  // Predicated region
  $region26: #{fcn_encoder_block.1} parent=0 // pred_check
    _
  $region27: #{fcn_encoder_block.1} parent=0 // pred_check_branch
    %27 = sbr.rel (0) target = $region29
  $region28: #{fcn_encoder_block.1} parent=0 // pred_region
    _
  $region29: #{fcn_encoder_block.1} parent=0 // pred_fallthru
    _
  // Predicated region
  $region30: #{fcn_encoder_block.1} parent=0 // pred_check
    _
  $region31: #{fcn_encoder_block.1} parent=0 // pred_check_branch
    %29 = sbr.rel (0) target = $region33
  $region32: #{fcn_encoder_block.1} parent=0 // pred_region
    _
  $region33: #{fcn_encoder_block.1} parent=0 // pred_fallthru
    _
  // Predicated region
  $region34: #{fcn_encoder_block.1} parent=0 // pred_check
    _
  $region35: #{fcn_encoder_block.1} parent=0 // pred_check_branch
    %31 = sbr.rel (0) target = $region37
  $region36: #{fcn_encoder_block.1} parent=0 // pred_region
    _
  $region37: #{fcn_encoder_block.1} parent=0 // pred_fallthru
    _
  %v33 = vld [vmem:[%s1] sm:$0xf]
  %v34 = vld [vmem:[%s1 + $0x4] sm:$0xf]
  %v35 = vld [vmem:[%s1 + $0x8] sm:$0xf]
  %v36 = vld [vmem:[%s1 + $0xc] sm:$0xf]
  %v37 = vld [vmem:[%s1 + $0x14] sm:$0xf]
  %v38 = vld [vmem:[%s1 + $0x18] sm:$0xf]
  %v39 = vld [vmem:[%s1 + $0x1c] sm:$0xf]
  %v40 = vld [vmem:[%s1 + $0x20] sm:$0xf]
  %v41 = vld [vmem:[%s0] sm:$0xff]
  %v42 = vld [vmem:[%s0 + $0x8] sm:$0xff]
  %v43 = vld [vmem:[%s0 + $0x10] sm:$0xff]
  %v44 = vld [vmem:[%s0 + $0x18] sm:$0xff]
  %v45 = vld [vmem:[%s0 + $0x20] sm:$0xff]
  %v46 = vld [vmem:[%s0 + $0x28] sm:$0xff]
  %v47 = vld [vmem:[%s0 + $0x30] sm:$0xff]
  %v48 = vld [vmem:[%s0 + $0x38] sm:$0xff]
  %51 = vrot.lane.b32.xlu0 %v44, 17
  %v52 = vpop.permute.xlu0 %51
  %53 = vrot.lane.b32.xlu0 %v48, 17
  %v54 = vpop.permute.xlu0 %53
  %63 = vrot.lane.b32.xlu0 %v41, 17
  %v64 = vpop.permute.xlu0 %63
  %65 = vrot.lane.b32.xlu0 %v42, 17
  %v66 = vpop.permute.xlu0 %65
  %67 = vrot.lane.b32.xlu0 %v43, 17
  %v68 = vpop.permute.xlu0 %67
  %69 = vrot.lane.b32.xlu0 %v45, 17
  %v70 = vpop.permute.xlu0 %69
  %71 = vrot.lane.b32.xlu0 %v46, 17
  %v72 = vpop.permute.xlu0 %71
  %73 = vrot.lane.b32.xlu0 %v47, 17
  %v74 = vpop.permute.xlu0 %73
  %vm75 = vcmask 138240
  %v76 = vsel %vm75, %v64, %v66
  %v77 = vsel %vm75, %v66, %v68
  %v78 = vsel %vm75, %v68, %v52
  %v79 = vsel %vm75, %v70, %v72
  %v80 = vsel %vm75, %v72, %v74
  %v81 = vsel %vm75, %v74, %v54
  %v90 = vsel %vm75, %v52, %v64
  %v91 = vsel %vm75, %v54, %v70
  %v93 = vlaneseq
  %v94 = vshrl.u32 %v93, 7
  %v95 = vsub.s32 0, %v94
  %v96 = vrot.slane %v33, %v95
  %v97 = vlaneseq
  %v98 = vshrl.u32 %v97, 7
  %v99 = vsub.s32 1, %v98
  %v100 = vrot.slane %v33, %v99
  %v101 = vlaneseq
  %v102 = vshrl.u32 %v101, 7
  %v103 = vsub.s32 2, %v102
  %v104 = vrot.slane %v33, %v103
  %v105 = vlaneseq
  %v106 = vshrl.u32 %v105, 7
  %v107 = vsub.s32 3, %v106
  %v108 = vrot.slane %v33, %v107
  %v113 = vmul.f32 %v90, %v96
  %v114 = vmul.f32 %v76, %v100
  %v115 = vmul.f32 %v77, %v104
  %v116 = vmul.f32 %v78, %v108
  %v117 = vmul.f32 %v91, %v96
  %v118 = vmul.f32 %v79, %v100
  %v119 = vmul.f32 %v80, %v104
  %v120 = vmul.f32 %v81, %v108
  %v121 = vpack.c.bf16 %v117, %v113
  %v122 = vpack.c.bf16 %v118, %v114
  %v123 = vpack.c.bf16 %v119, %v115
  %v124 = vpack.c.bf16 %v120, %v116
  %125 = vst [vmem:[#allocation2] sm:$0xff] %v121
  %126 = vst [vmem:[#allocation2 + $0x8] sm:$0xff] %v122
  %127 = vst [vmem:[#allocation2 + $0x10] sm:$0xff] %v123
  %128 = vst [vmem:[#allocation2 + $0x18] sm:$0xff] %v124
  %129 = vrot.lane.b32.xlu0 %v44, 16
  %v130 = vpop.permute.xlu0 %129
  %131 = vrot.lane.b32.xlu0 %v48, 16
  %v132 = vpop.permute.xlu0 %131
  %135 = vrot.lane.b32.xlu0 %v41, 16
  %v136 = vpop.permute.xlu0 %135
  %137 = vrot.lane.b32.xlu0 %v42, 16
  %v138 = vpop.permute.xlu0 %137
  %139 = vrot.lane.b32.xlu0 %v43, 16
  %v140 = vpop.permute.xlu0 %139
  %141 = vrot.lane.b32.xlu0 %v45, 16
  %v142 = vpop.permute.xlu0 %141
  %143 = vrot.lane.b32.xlu0 %v46, 16
  %v144 = vpop.permute.xlu0 %143
  %145 = vrot.lane.b32.xlu0 %v47, 16
  %v146 = vpop.permute.xlu0 %145
  %vm147 = vcmask 130048
  %v148 = vsel %vm147, %v136, %v138
  %v149 = vsel %vm147, %v138, %v140
  %v150 = vsel %vm147, %v140, %v130
  %v151 = vsel %vm147, %v142, %v144
  %v152 = vsel %vm147, %v144, %v146
  %v153 = vsel %vm147, %v146, %v132
  %v162 = vsel %vm147, %v130, %v136
  %v163 = vsel %vm147, %v132, %v142
  %v165 = vlaneseq
  %v166 = vshrl.u32 %v165, 7
  %v167 = vsub.s32 0, %v166
  %v168 = vrot.slane %v34, %v167
  %v169 = vlaneseq
  %v170 = vshrl.u32 %v169, 7
  %v171 = vsub.s32 1, %v170
  %v172 = vrot.slane %v34, %v171
  %v173 = vlaneseq
  %v174 = vshrl.u32 %v173, 7
  %v175 = vsub.s32 2, %v174
  %v176 = vrot.slane %v34, %v175
  %v177 = vlaneseq
  %v178 = vshrl.u32 %v177, 7
  %v179 = vsub.s32 3, %v178
  %v180 = vrot.slane %v34, %v179
  %v185 = vmul.f32 %v162, %v168
  %v186 = vmul.f32 %v148, %v172
  %v187 = vmul.f32 %v149, %v176
  %v188 = vmul.f32 %v150, %v180
  %v189 = vmul.f32 %v163, %v168
  %v190 = vmul.f32 %v151, %v172
  %v191 = vmul.f32 %v152, %v176
  %v192 = vmul.f32 %v153, %v180
  %v193 = vpack.c.bf16 %v189, %v185
  %v194 = vpack.c.bf16 %v190, %v186
  %v195 = vpack.c.bf16 %v191, %v187
  %v196 = vpack.c.bf16 %v192, %v188
  %197 = vst [vmem:[#allocation2 + $0x20] sm:$0xff] %v193
  %198 = vst [vmem:[#allocation2 + $0x28] sm:$0xff] %v194
  %199 = vst [vmem:[#allocation2 + $0x30] sm:$0xff] %v195
  %200 = vst [vmem:[#allocation2 + $0x38] sm:$0xff] %v196
  %201 = vrot.lane.b32.xlu0 %v44, 15
  %v202 = vpop.permute.xlu0 %201
  %203 = vrot.lane.b32.xlu0 %v48, 15
  %v204 = vpop.permute.xlu0 %203
  %207 = vrot.lane.b32.xlu0 %v41, 15
  %v208 = vpop.permute.xlu0 %207
  %209 = vrot.lane.b32.xlu0 %v42, 15
  %v210 = vpop.permute.xlu0 %209
  %211 = vrot.lane.b32.xlu0 %v43, 15
  %v212 = vpop.permute.xlu0 %211
  %213 = vrot.lane.b32.xlu0 %v45, 15
  %v214 = vpop.permute.xlu0 %213
  %215 = vrot.lane.b32.xlu0 %v46, 15
  %v216 = vpop.permute.xlu0 %215
  %217 = vrot.lane.b32.xlu0 %v47, 15
  %v218 = vpop.permute.xlu0 %217
  %vm219 = vcmask 121856
  %v220 = vsel %vm219, %v208, %v210
  %v221 = vsel %vm219, %v210, %v212
  %v222 = vsel %vm219, %v212, %v202
  %v223 = vsel %vm219, %v214, %v216
  %v224 = vsel %vm219, %v216, %v218
  %v225 = vsel %vm219, %v218, %v204
  %v234 = vsel %vm219, %v202, %v208
  %v235 = vsel %vm219, %v204, %v214
  %v237 = vlaneseq
  %v238 = vshrl.u32 %v237, 7
  %v239 = vsub.s32 0, %v238
  %v240 = vrot.slane %v35, %v239
  %v241 = vlaneseq
  %v242 = vshrl.u32 %v241, 7
  %v243 = vsub.s32 1, %v242
  %v244 = vrot.slane %v35, %v243
  %v245 = vlaneseq
  %v246 = vshrl.u32 %v245, 7
  %v247 = vsub.s32 2, %v246
  %v248 = vrot.slane %v35, %v247
  %v249 = vlaneseq
  %v250 = vshrl.u32 %v249, 7
  %v251 = vsub.s32 3, %v250
  %v252 = vrot.slane %v35, %v251
  %v257 = vmul.f32 %v234, %v240
  %v258 = vmul.f32 %v220, %v244
  %v259 = vmul.f32 %v221, %v248
  %v260 = vmul.f32 %v222, %v252
  %v261 = vmul.f32 %v235, %v240
  %v262 = vmul.f32 %v223, %v244
  %v263 = vmul.f32 %v224, %v248
  %v264 = vmul.f32 %v225, %v252
  %v265 = vpack.c.bf16 %v261, %v257
  %v266 = vpack.c.bf16 %v262, %v258
  %v267 = vpack.c.bf16 %v263, %v259
  %v268 = vpack.c.bf16 %v264, %v260
  %269 = vst [vmem:[#allocation2 + $0x40] sm:$0xff] %v265
  %270 = vst [vmem:[#allocation2 + $0x48] sm:$0xff] %v266
  %271 = vst [vmem:[#allocation2 + $0x50] sm:$0xff] %v267
  %272 = vst [vmem:[#allocation2 + $0x58] sm:$0xff] %v268
  %273 = vrot.lane.b32.xlu0 %v44, 1
  %v274 = vpop.permute.xlu0 %273
  %275 = vrot.lane.b32.xlu0 %v48, 1
  %v276 = vpop.permute.xlu0 %275
  %279 = vrot.lane.b32.xlu0 %v41, 1
  %v280 = vpop.permute.xlu0 %279
  %281 = vrot.lane.b32.xlu0 %v42, 1
  %v282 = vpop.permute.xlu0 %281
  %283 = vrot.lane.b32.xlu0 %v43, 1
  %v284 = vpop.permute.xlu0 %283
  %285 = vrot.lane.b32.xlu0 %v45, 1
  %v286 = vpop.permute.xlu0 %285
  %287 = vrot.lane.b32.xlu0 %v46, 1
  %v288 = vpop.permute.xlu0 %287
  %289 = vrot.lane.b32.xlu0 %v47, 1
  %v290 = vpop.permute.xlu0 %289
  %vm291 = vcmask 7168
  %v292 = vsel %vm291, %v280, %v282
  %v293 = vsel %vm291, %v282, %v284
  %v294 = vsel %vm291, %v284, %v274
  %v295 = vsel %vm291, %v286, %v288
  %v296 = vsel %vm291, %v288, %v290
  %v297 = vsel %vm291, %v290, %v276
  %v306 = vsel %vm291, %v274, %v280
  %v307 = vsel %vm291, %v276, %v286
  %v309 = vlaneseq
  %v310 = vshrl.u32 %v309, 7
  %v311 = vsub.s32 0, %v310
  %v312 = vrot.slane %v36, %v311
  %v313 = vlaneseq
  %v314 = vshrl.u32 %v313, 7
  %v315 = vsub.s32 1, %v314
  %v316 = vrot.slane %v36, %v315
  %v317 = vlaneseq
  %v318 = vshrl.u32 %v317, 7
  %v319 = vsub.s32 2, %v318
  %v320 = vrot.slane %v36, %v319
  %v321 = vlaneseq
  %v322 = vshrl.u32 %v321, 7
  %v323 = vsub.s32 3, %v322
  %v324 = vrot.slane %v36, %v323
  %v329 = vmul.f32 %v306, %v312
  %v330 = vmul.f32 %v292, %v316
  %v331 = vmul.f32 %v293, %v320
  %v332 = vmul.f32 %v294, %v324
  %v333 = vmul.f32 %v307, %v312
  %v334 = vmul.f32 %v295, %v316
  %v335 = vmul.f32 %v296, %v320
  %v336 = vmul.f32 %v297, %v324
  %v337 = vpack.c.bf16 %v333, %v329
  %v338 = vpack.c.bf16 %v334, %v330
  %v339 = vpack.c.bf16 %v335, %v331
  %v340 = vpack.c.bf16 %v336, %v332
  %341 = vst [vmem:[#allocation2 + $0x60] sm:$0xff] %v337
  %342 = vst [vmem:[#allocation2 + $0x68] sm:$0xff] %v338
  %343 = vst [vmem:[#allocation2 + $0x70] sm:$0xff] %v339
  %344 = vst [vmem:[#allocation2 + $0x78] sm:$0xff] %v340
  %v345 = vpack.c.bf16 %v45, %v41
  %v346 = vpack.c.bf16 %v46, %v42
  %v347 = vpack.c.bf16 %v47, %v43
  %v348 = vpack.c.bf16 %v48, %v44
  %349 = vst [vmem:[#allocation2 + $0x80] sm:$0xff] %v345
  %350 = vst [vmem:[#allocation2 + $0x88] sm:$0xff] %v346
  %351 = vst [vmem:[#allocation2 + $0x90] sm:$0xff] %v347
  %352 = vst [vmem:[#allocation2 + $0x98] sm:$0xff] %v348
  %353 = vrot.lane.b32.xlu0 %v41, 127
  %v354 = vpop.permute.xlu0 %353
  %355 = vrot.lane.b32.xlu0 %v42, 127
  %v356 = vpop.permute.xlu0 %355
  %357 = vrot.lane.b32.xlu0 %v43, 127
  %v358 = vpop.permute.xlu0 %357
  %359 = vrot.lane.b32.xlu0 %v44, 127
  %v360 = vpop.permute.xlu0 %359
  %361 = vrot.lane.b32.xlu0 %v45, 127
  %v362 = vpop.permute.xlu0 %361
  %363 = vrot.lane.b32.xlu0 %v46, 127
  %v364 = vpop.permute.xlu0 %363
  %365 = vrot.lane.b32.xlu0 %v47, 127
  %v366 = vpop.permute.xlu0 %365
  %367 = vrot.lane.b32.xlu0 %v48, 127
  %v368 = vpop.permute.xlu0 %367
  %vm369 = vcmask 1039360
  %v370 = vsel %vm369, %v354, %v356
  %v371 = vsel %vm369, %v356, %v358
  %v372 = vsel %vm369, %v358, %v360
  %v373 = vsel %vm369, %v362, %v364
  %v374 = vsel %vm369, %v364, %v366
  %v375 = vsel %vm369, %v366, %v368
  %v386 = vsel %vm369, %v360, %v354
  %v387 = vsel %vm369, %v368, %v362
  %v389 = vlaneseq
  %v390 = vshrl.u32 %v389, 7
  %v391 = vsub.s32 0, %v390
  %v392 = vrot.slane %v37, %v391
  %v393 = vlaneseq
  %v394 = vshrl.u32 %v393, 7
  %v395 = vsub.s32 1, %v394
  %v396 = vrot.slane %v37, %v395
  %v397 = vlaneseq
  %v398 = vshrl.u32 %v397, 7
  %v399 = vsub.s32 2, %v398
  %v400 = vrot.slane %v37, %v399
  %v401 = vlaneseq
  %v402 = vshrl.u32 %v401, 7
  %v403 = vsub.s32 3, %v402
  %v404 = vrot.slane %v37, %v403
  %v409 = vmul.f32 %v370, %v392
  %v410 = vmul.f32 %v371, %v396
  %v411 = vmul.f32 %v372, %v400
  %v412 = vmul.f32 %v386, %v404
  %v413 = vmul.f32 %v373, %v392
  %v414 = vmul.f32 %v374, %v396
  %v415 = vmul.f32 %v375, %v400
  %v416 = vmul.f32 %v387, %v404
  %v417 = vpack.c.bf16 %v413, %v409
  %v418 = vpack.c.bf16 %v414, %v410
  %v419 = vpack.c.bf16 %v415, %v411
  %v420 = vpack.c.bf16 %v416, %v412
  %421 = vst [vmem:[#allocation2 + $0xa0] sm:$0xff] %v417
  %422 = vst [vmem:[#allocation2 + $0xa8] sm:$0xff] %v418
  %423 = vst [vmem:[#allocation2 + $0xb0] sm:$0xff] %v419
  %424 = vst [vmem:[#allocation2 + $0xb8] sm:$0xff] %v420
  %425 = vrot.lane.b32.xlu0 %v41, 113
  %v426 = vpop.permute.xlu0 %425
  %427 = vrot.lane.b32.xlu0 %v42, 113
  %v428 = vpop.permute.xlu0 %427
  %429 = vrot.lane.b32.xlu0 %v43, 113
  %v430 = vpop.permute.xlu0 %429
  %431 = vrot.lane.b32.xlu0 %v44, 113
  %v432 = vpop.permute.xlu0 %431
  %433 = vrot.lane.b32.xlu0 %v45, 113
  %v434 = vpop.permute.xlu0 %433
  %435 = vrot.lane.b32.xlu0 %v46, 113
  %v436 = vpop.permute.xlu0 %435
  %437 = vrot.lane.b32.xlu0 %v47, 113
  %v438 = vpop.permute.xlu0 %437
  %439 = vrot.lane.b32.xlu0 %v48, 113
  %v440 = vpop.permute.xlu0 %439
  %vm441 = vcmask 924672
  %v442 = vsel %vm441, %v426, %v428
  %v443 = vsel %vm441, %v428, %v430
  %v444 = vsel %vm441, %v430, %v432
  %v445 = vsel %vm441, %v434, %v436
  %v446 = vsel %vm441, %v436, %v438
  %v447 = vsel %vm441, %v438, %v440
  %v458 = vsel %vm441, %v432, %v426
  %v459 = vsel %vm441, %v440, %v434
  %v461 = vlaneseq
  %v462 = vshrl.u32 %v461, 7
  %v463 = vsub.s32 0, %v462
  %v464 = vrot.slane %v38, %v463
  %v465 = vlaneseq
  %v466 = vshrl.u32 %v465, 7
  %v467 = vsub.s32 1, %v466
  %v468 = vrot.slane %v38, %v467
  %v469 = vlaneseq
  %v470 = vshrl.u32 %v469, 7
  %v471 = vsub.s32 2, %v470
  %v472 = vrot.slane %v38, %v471
  %v473 = vlaneseq
  %v474 = vshrl.u32 %v473, 7
  %v475 = vsub.s32 3, %v474
  %v476 = vrot.slane %v38, %v475
  %v481 = vmul.f32 %v442, %v464
  %v482 = vmul.f32 %v443, %v468
  %v483 = vmul.f32 %v444, %v472
  %v484 = vmul.f32 %v458, %v476
  %v485 = vmul.f32 %v445, %v464
  %v486 = vmul.f32 %v446, %v468
  %v487 = vmul.f32 %v447, %v472
  %v488 = vmul.f32 %v459, %v476
  %v489 = vpack.c.bf16 %v485, %v481
  %v490 = vpack.c.bf16 %v486, %v482
  %v491 = vpack.c.bf16 %v487, %v483
  %v492 = vpack.c.bf16 %v488, %v484
  %493 = vst [vmem:[#allocation2 + $0xc0] sm:$0xff] %v489
  %494 = vst [vmem:[#allocation2 + $0xc8] sm:$0xff] %v490
  %495 = vst [vmem:[#allocation2 + $0xd0] sm:$0xff] %v491
  %496 = vst [vmem:[#allocation2 + $0xd8] sm:$0xff] %v492
  %497 = vrot.lane.b32.xlu0 %v41, 112
  %v498 = vpop.permute.xlu0 %497
  %499 = vrot.lane.b32.xlu0 %v42, 112
  %v500 = vpop.permute.xlu0 %499
  %501 = vrot.lane.b32.xlu0 %v43, 112
  %v502 = vpop.permute.xlu0 %501
  %503 = vrot.lane.b32.xlu0 %v44, 112
  %v504 = vpop.permute.xlu0 %503
  %505 = vrot.lane.b32.xlu0 %v45, 112
  %v506 = vpop.permute.xlu0 %505
  %507 = vrot.lane.b32.xlu0 %v46, 112
  %v508 = vpop.permute.xlu0 %507
  %509 = vrot.lane.b32.xlu0 %v47, 112
  %v510 = vpop.permute.xlu0 %509
  %511 = vrot.lane.b32.xlu0 %v48, 112
  %v512 = vpop.permute.xlu0 %511
  %vm513 = vcmask 916480
  %v514 = vsel %vm513, %v498, %v500
  %v515 = vsel %vm513, %v500, %v502
  %v516 = vsel %vm513, %v502, %v504
  %v517 = vsel %vm513, %v506, %v508
  %v518 = vsel %vm513, %v508, %v510
  %v519 = vsel %vm513, %v510, %v512
  %v530 = vsel %vm513, %v504, %v498
  %v531 = vsel %vm513, %v512, %v506
  %v533 = vlaneseq
  %v534 = vshrl.u32 %v533, 7
  %v535 = vsub.s32 0, %v534
  %v536 = vrot.slane %v39, %v535
  %v537 = vlaneseq
  %v538 = vshrl.u32 %v537, 7
  %v539 = vsub.s32 1, %v538
  %v540 = vrot.slane %v39, %v539
  %v541 = vlaneseq
  %v542 = vshrl.u32 %v541, 7
  %v543 = vsub.s32 2, %v542
  %v544 = vrot.slane %v39, %v543
  %v545 = vlaneseq
  %v546 = vshrl.u32 %v545, 7
  %v547 = vsub.s32 3, %v546
  %v548 = vrot.slane %v39, %v547
  %v553 = vmul.f32 %v514, %v536
  %v554 = vmul.f32 %v515, %v540
  %v555 = vmul.f32 %v516, %v544
  %v556 = vmul.f32 %v530, %v548
  %v557 = vmul.f32 %v517, %v536
  %v558 = vmul.f32 %v518, %v540
  %v559 = vmul.f32 %v519, %v544
  %v560 = vmul.f32 %v531, %v548
  %v561 = vpack.c.bf16 %v557, %v553
  %v562 = vpack.c.bf16 %v558, %v554
  %v563 = vpack.c.bf16 %v559, %v555
  %v564 = vpack.c.bf16 %v560, %v556
  %565 = vst [vmem:[#allocation2 + $0xe0] sm:$0xff] %v561
  %566 = vst [vmem:[#allocation2 + $0xe8] sm:$0xff] %v562
  %567 = vst [vmem:[#allocation2 + $0xf0] sm:$0xff] %v563
  %568 = vst [vmem:[#allocation2 + $0xf8] sm:$0xff] %v564
  %569 = vrot.lane.b32.xlu0 %v41, 111
  %v570 = vpop.permute.xlu0 %569
  %571 = vrot.lane.b32.xlu0 %v42, 111
  %v572 = vpop.permute.xlu0 %571
  %573 = vrot.lane.b32.xlu0 %v43, 111
  %v574 = vpop.permute.xlu0 %573
  %575 = vrot.lane.b32.xlu0 %v44, 111
  %v576 = vpop.permute.xlu0 %575
  %577 = vrot.lane.b32.xlu0 %v45, 111
  %v578 = vpop.permute.xlu0 %577
  %579 = vrot.lane.b32.xlu0 %v46, 111
  %v580 = vpop.permute.xlu0 %579
  %581 = vrot.lane.b32.xlu0 %v47, 111
  %v582 = vpop.permute.xlu0 %581
  %583 = vrot.lane.b32.xlu0 %v48, 111
  %v584 = vpop.permute.xlu0 %583
  %vm585 = vcmask 908288
  %v586 = vsel %vm585, %v570, %v572
  %v587 = vsel %vm585, %v572, %v574
  %v588 = vsel %vm585, %v574, %v576
  %v589 = vsel %vm585, %v578, %v580
  %v590 = vsel %vm585, %v580, %v582
  %v591 = vsel %vm585, %v582, %v584
  %v602 = vsel %vm585, %v576, %v570
  %v603 = vsel %vm585, %v584, %v578
  %v605 = vlaneseq
  %v606 = vshrl.u32 %v605, 7
  %v607 = vsub.s32 0, %v606
  %v608 = vrot.slane %v40, %v607
  %v609 = vlaneseq
  %v610 = vshrl.u32 %v609, 7
  %v611 = vsub.s32 1, %v610
  %v612 = vrot.slane %v40, %v611
  %v613 = vlaneseq
  %v614 = vshrl.u32 %v613, 7
  %v615 = vsub.s32 2, %v614
  %v616 = vrot.slane %v40, %v615
  %v617 = vlaneseq
  %v618 = vshrl.u32 %v617, 7
  %v619 = vsub.s32 3, %v618
  %v620 = vrot.slane %v40, %v619
  %v625 = vmul.f32 %v586, %v608
  %v626 = vmul.f32 %v587, %v612
  %v627 = vmul.f32 %v588, %v616
  %v628 = vmul.f32 %v602, %v620
  %v629 = vmul.f32 %v589, %v608
  %v630 = vmul.f32 %v590, %v612
  %v631 = vmul.f32 %v591, %v616
  %v632 = vmul.f32 %v603, %v620
  %v633 = vpack.c.bf16 %v629, %v625
  %v634 = vpack.c.bf16 %v630, %v626
  %v635 = vpack.c.bf16 %v631, %v627
  %v636 = vpack.c.bf16 %v632, %v628
  %637 = vst [vmem:[#allocation2 + $0x100] sm:$0xff] %v633
  %638 = vst [vmem:[#allocation2 + $0x108] sm:$0xff] %v634
  %639 = vst [vmem:[#allocation2 + $0x110] sm:$0xff] %v635
  %640 = vst [vmem:[#allocation2 + $0x118] sm:$0xff] %v636
  %v641 = vld [vmem:[%s3] sm:$0xff]
  %v642 = vld [vmem:[%s3 + $0x8] sm:$0xff]
  %v643 = vld [vmem:[#allocation2] sm:$0xff]
  %v644 = vld [vmem:[#allocation2 + $0x8] sm:$0xff]
  %v645 = vld [vmem:[#allocation2 + $0x10] sm:$0xff]
  %v646 = vld [vmem:[#allocation2 + $0x18] sm:$0xff]
  %v647 = vld [vmem:[#allocation2 + $0x20] sm:$0xff]
  %v648 = vld [vmem:[#allocation2 + $0x28] sm:$0xff]
  %v649 = vld [vmem:[#allocation2 + $0x30] sm:$0xff]
  %v650 = vld [vmem:[#allocation2 + $0x38] sm:$0xff]
  %v651 = vld [vmem:[#allocation2 + $0x40] sm:$0xff]
  %v652 = vld [vmem:[#allocation2 + $0x48] sm:$0xff]
  %v653 = vld [vmem:[#allocation2 + $0x50] sm:$0xff]
  %v654 = vld [vmem:[#allocation2 + $0x58] sm:$0xff]
  %v655 = vld [vmem:[#allocation2 + $0x60] sm:$0xff]
  %v656 = vld [vmem:[#allocation2 + $0x68] sm:$0xff]
  %v657 = vld [vmem:[#allocation2 + $0x70] sm:$0xff]
  %v658 = vld [vmem:[#allocation2 + $0x78] sm:$0xff]
  %v659 = vld [vmem:[#allocation2 + $0x80] sm:$0xff]
  %v660 = vld [vmem:[#allocation2 + $0x88] sm:$0xff]
  %v661 = vld [vmem:[#allocation2 + $0x90] sm:$0xff]
  %v662 = vld [vmem:[#allocation2 + $0x98] sm:$0xff]
  %v663 = vld [vmem:[#allocation2 + $0xa0] sm:$0xff]
  %v664 = vld [vmem:[#allocation2 + $0xa8] sm:$0xff]
  %v665 = vld [vmem:[#allocation2 + $0xb0] sm:$0xff]
  %v666 = vld [vmem:[#allocation2 + $0xb8] sm:$0xff]
  %v667 = vld [vmem:[#allocation2 + $0xc0] sm:$0xff]
  %v668 = vld [vmem:[#allocation2 + $0xc8] sm:$0xff]
  %v669 = vld [vmem:[#allocation2 + $0xd0] sm:$0xff]
  %v670 = vld [vmem:[#allocation2 + $0xd8] sm:$0xff]
  %v671 = vld [vmem:[#allocation2 + $0xe0] sm:$0xff]
  %v672 = vld [vmem:[#allocation2 + $0xe8] sm:$0xff]
  %v673 = vld [vmem:[#allocation2 + $0xf0] sm:$0xff]
  %v674 = vld [vmem:[#allocation2 + $0xf8] sm:$0xff]
  %v675 = vld [vmem:[#allocation2 + $0x100] sm:$0xff]
  %v676 = vld [vmem:[#allocation2 + $0x108] sm:$0xff]
  %v677 = vld [vmem:[#allocation2 + $0x110] sm:$0xff]
  %v678 = vld [vmem:[#allocation2 + $0x118] sm:$0xff]
  %v681 = vunpack.c.l.b16 %v641
  %v682 = vunpack.c.h.b16 %v641
  %v683 = vunpack.c.l.b16 %v642
  %v684 = vunpack.c.h.b16 %v642
  %v685 = vpack.c.b16 %v683, %v681
  %v686 = vpack.c.b16 %v684, %v682
  %v689 = vsel %vm147, %v686, 0
  %691 = vmatprep.subr.bf16.mxu0 %v644
  %692 = vmatpush1.bf16.msra.mxu0 %v643
  %693 = vmatprep.subr.bf16.mxu0 %v648
  %694 = vmatpush1.bf16.msra.mxu0 %v647
  %695 = vmatprep.subr.bf16.mxu0 %v652
  %696 = vmatpush1.bf16.msra.mxu0 %v651
  %697 = vmatprep.subr.bf16.mxu0 %v656
  %698 = vmatpush1.bf16.msra.mxu0 %v655
  %699 = vmatprep.subr.bf16.mxu0 %v660
  %700 = vmatpush1.bf16.msra.mxu0 %v659
  %701 = vmatprep.subr.bf16.mxu0 %v664
  %702 = vmatpush1.bf16.msra.mxu0 %v663
  %703 = vmatprep.subr.bf16.mxu0 %v668
  %704 = vmatpush1.bf16.msra.mxu0 %v667
  %705 = vmatprep.subr.bf16.mxu0 %v672
  %706 = vmatpush1.bf16.msra.mxu0 %v671
  %707 = vmatprep.subr.bf16.mxu0 %v676
  %708 = vmatpush1.bf16.msra.mxu0 %v675
  %709 = vmatprep.subr.bf16.mxu0 0
  %710 = vmatpush1.bf16.msra.mxu0 0
  %711 = vmatprep.subr.bf16.mxu0 0
  %712 = vmatpush1.bf16.msra.mxu0 0
  %713 = vmatprep.subr.bf16.mxu0 0
  %714 = vmatpush1.bf16.msra.mxu0 0
  %715 = vmatprep.subr.bf16.mxu0 0
  %716 = vmatpush1.bf16.msra.mxu0 0
  %717 = vmatprep.subr.bf16.mxu0 0
  %718 = vmatpush1.bf16.msra.mxu0 0
  %719 = vmatprep.subr.bf16.mxu0 0
  %720 = vmatpush1.bf16.msra.mxu0 0
  %721 = vmatprep.subr.bf16.mxu0 0
  %722 = vmatpush1.bf16.msra.mxu0 0
  %723 = vmatprep.mubr.bf16.mxu0 %v689
  %724 = vmatmul.mubr.bf16.gmra.mrb[0].mxu0 %v685
  %v725 = vpop.f32.mrb[0].mxu0
  %v726 = vadd.f32 0.0, %v725
  %v727 = vpop.f32.mrb[0].mxu0
  %v728 = vadd.f32 0.0, %v727
  %v729 = vpop.f32.mrb[0].mxu0
  %v730 = vadd.f32 0.0, %v729
  %v731 = vpop.f32.mrb[0].mxu0
  %v732 = vadd.f32 0.0, %v731
  %733 = vdwg.mxu0
  %734 = vmatprep.subr.bf16.mxu0 %v646
  %735 = vmatpush1.bf16.msra.mxu0 %v645
  %736 = vmatprep.subr.bf16.mxu0 %v650
  %737 = vmatpush1.bf16.msra.mxu0 %v649
  %738 = vmatprep.subr.bf16.mxu0 %v654
  %739 = vmatpush1.bf16.msra.mxu0 %v653
  %740 = vmatprep.subr.bf16.mxu0 %v658
  %741 = vmatpush1.bf16.msra.mxu0 %v657
  %742 = vmatprep.subr.bf16.mxu0 %v662
  %743 = vmatpush1.bf16.msra.mxu0 %v661
  %744 = vmatprep.subr.bf16.mxu0 %v666
  %745 = vmatpush1.bf16.msra.mxu0 %v665
  %746 = vmatprep.subr.bf16.mxu0 %v670
  %747 = vmatpush1.bf16.msra.mxu0 %v669
  %748 = vmatprep.subr.bf16.mxu0 %v674
  %749 = vmatpush1.bf16.msra.mxu0 %v673
  %750 = vmatprep.subr.bf16.mxu0 %v678
  %751 = vmatpush1.bf16.msra.mxu0 %v677
  %752 = vmatprep.subr.bf16.mxu0 0
  %753 = vmatpush1.bf16.msra.mxu0 0
  %754 = vmatprep.subr.bf16.mxu0 0
  %755 = vmatpush1.bf16.msra.mxu0 0
  %756 = vmatprep.subr.bf16.mxu0 0
  %757 = vmatpush1.bf16.msra.mxu0 0
  %758 = vmatprep.subr.bf16.mxu0 0
  %759 = vmatpush1.bf16.msra.mxu0 0
  %760 = vmatprep.subr.bf16.mxu0 0
  %761 = vmatpush1.bf16.msra.mxu0 0
  %762 = vmatprep.subr.bf16.mxu0 0
  %763 = vmatpush1.bf16.msra.mxu0 0
  %764 = vmatprep.subr.bf16.mxu0 0
  %765 = vmatpush1.bf16.msra.mxu0 0
  %766 = vmatprep.mubr.bf16.mxu0 %v689
  %767 = vmatmul.mubr.bf16.gmra.mrb[0].mxu0 %v685
  %v768 = vpop.f32.mrb[0].mxu0
  %v769 = vadd.f32 0.0, %v768
  %v770 = vpop.f32.mrb[0].mxu0
  %v771 = vadd.f32 0.0, %v770
  %v772 = vpop.f32.mrb[0].mxu0
  %v773 = vadd.f32 0.0, %v772
  %v774 = vpop.f32.mrb[0].mxu0
  %v775 = vadd.f32 0.0, %v774
  %776 = vdwg.mxu0
  %v777 = vadd.f32 %v726, %v728
  %v778 = vadd.f32 %v777, %v769
  %v779 = vadd.f32 %v778, %v771
  %780 = vadd.xlane.f32.xlu0 %v779
  %v781 = vpop.xlane.xlu0 %780
  %v782 = vadd.f32 %v730, %v732
  %v783 = vadd.f32 %v782, %v773
  %v784 = vadd.f32 %v783, %v775
  %785 = vadd.xlane.f32.xlu0 %v784
  %v786 = vpop.xlane.xlu0 %785
  %v787 = vmul.f32 %v726, %v726
  %v788 = vmul.f32 %v728, %v728
  %v789 = vmul.f32 %v769, %v769
  %v790 = vmul.f32 %v771, %v771
  %v791 = vmul.f32 %v730, %v730
  %v792 = vmul.f32 %v732, %v732
  %v793 = vmul.f32 %v773, %v773
  %v794 = vmul.f32 %v775, %v775
  %v795 = vadd.f32 %v787, %v788
  %v796 = vadd.f32 %v795, %v789
  %v797 = vadd.f32 %v796, %v790
  %798 = vadd.xlane.f32.xlu0 %v797
  %v799 = vpop.xlane.xlu0 %798
  %v800 = vadd.f32 %v791, %v792
  %v801 = vadd.f32 %v800, %v793
  %v802 = vadd.f32 %v801, %v794
  %803 = vadd.xlane.f32.xlu0 %v802
  %v804 = vpop.xlane.xlu0 %803
  %v805 = vmul.f32 %v781, 0.001953125
  %v806 = vmul.f32 %v786, 0.001953125
  %v807 = vmul.f32 %v799, 0.001953125
  %v808 = vmul.f32 %v804, 0.001953125
  %v809 = vmul.f32 %v805, %v805
  %v810 = vmul.f32 %v806, %v806
  %v811 = vsub.f32 %v807, %v809
  %v812 = vsub.f32 %v808, %v810
  %v813 = vmax.f32 %v811, 0.0
  %v814 = vmax.f32 %v812, 0.0
  %v815 = vld [vmem:[%s4] sm:$0xff]
  %v816 = vld [vmem:[%s4 + $0x8] sm:$0xff]
  %v817 = vadd.f32 %v813, 1e-05
  %v818 = vadd.f32 %v814, 1e-05
  %v819 = vrsqrt.pop %v817
  %v820 = vrsqrt.pop %v818
  %v821 = vmul.f32 %v815, %v819
  %v822 = vmul.f32 %v816, %v820
  %v823 = vld [vmem:[%s5] sm:$0xff]
  %v824 = vld [vmem:[%s5 + $0x8] sm:$0xff]
  %v825 = vmul.f32 %v805, %v821
  %v826 = vmul.f32 %v806, %v822
  %v827 = vsub.f32 %v823, %v825
  %v828 = vsub.f32 %v824, %v826
  %830 = vset.pattern.permute.xlu0 0
  %831 = vperm.xlu0 %830, %v821
  %v832 = vpop.permute.xlu0 %831
  %835 = vset.pattern.permute.xlu0 0
  %836 = vperm.xlu0 %835, %v822
  %v837 = vpop.permute.xlu0 %836
  %v839 = vmul.f32 %v726, %v832
  %v840 = vmul.f32 %v728, %v832
  %v841 = vmul.f32 %v769, %v832
  %v842 = vmul.f32 %v771, %v832
  %v843 = vmul.f32 %v730, %v837
  %v844 = vmul.f32 %v732, %v837
  %v845 = vmul.f32 %v773, %v837
  %v846 = vmul.f32 %v775, %v837
  %848 = vset.pattern.permute.xlu0 0
  %849 = vperm.xlu0 %848, %v827
  %v850 = vpop.permute.xlu0 %849
  %853 = vset.pattern.permute.xlu0 0
  %854 = vperm.xlu0 %853, %v828
  %v855 = vpop.permute.xlu0 %854
  %v857 = vadd.f32 %v839, %v850
  %v858 = vadd.f32 %v840, %v850
  %v859 = vadd.f32 %v841, %v850
  %v860 = vadd.f32 %v842, %v850
  %v861 = vadd.f32 %v843, %v855
  %v862 = vadd.f32 %v844, %v855
  %v863 = vadd.f32 %v845, %v855
  %v864 = vadd.f32 %v846, %v855
  %v865 = vmax.f32 %v857, 0.0
  %v866 = vmax.f32 %v858, 0.0
  %v867 = vmax.f32 %v859, 0.0
  %v868 = vmax.f32 %v860, 0.0
  %v869 = vmax.f32 %v861, 0.0
  %v870 = vmax.f32 %v862, 0.0
  %v871 = vmax.f32 %v863, 0.0
  %v872 = vmax.f32 %v864, 0.0
  %875 = vrot.lane.b32.xlu0 %v868, 17
  %v876 = vpop.permute.xlu0 %875
  %877 = vrot.lane.b32.xlu0 %v872, 17
  %v878 = vpop.permute.xlu0 %877
  %887 = vrot.lane.b32.xlu0 %v865, 17
  %v888 = vpop.permute.xlu0 %887
  %889 = vrot.lane.b32.xlu0 %v866, 17
  %v890 = vpop.permute.xlu0 %889
  %891 = vrot.lane.b32.xlu0 %v867, 17
  %v892 = vpop.permute.xlu0 %891
  %893 = vrot.lane.b32.xlu0 %v869, 17
  %v894 = vpop.permute.xlu0 %893
  %895 = vrot.lane.b32.xlu0 %v870, 17
  %v896 = vpop.permute.xlu0 %895
  %897 = vrot.lane.b32.xlu0 %v871, 17
  %v898 = vpop.permute.xlu0 %897
  %v899 = vsel %vm75, %v888, %v890
  %v900 = vsel %vm75, %v890, %v892
  %v901 = vsel %vm75, %v892, %v876
  %v902 = vsel %vm75, %v894, %v896
  %v903 = vsel %vm75, %v896, %v898
  %v904 = vsel %vm75, %v898, %v878
  %v913 = vsel %vm75, %v876, %v888
  %v914 = vsel %vm75, %v878, %v894
  %v915 = vmul.f32 %v913, %v96
  %v916 = vmul.f32 %v899, %v100
  %v917 = vmul.f32 %v900, %v104
  %v918 = vmul.f32 %v901, %v108
  %v919 = vmul.f32 %v914, %v96
  %v920 = vmul.f32 %v902, %v100
  %v921 = vmul.f32 %v903, %v104
  %v922 = vmul.f32 %v904, %v108
  %v923 = vpack.c.bf16 %v919, %v915
  %v924 = vpack.c.bf16 %v920, %v916
  %v925 = vpack.c.bf16 %v921, %v917
  %v926 = vpack.c.bf16 %v922, %v918
  %927 = vst [vmem:[#allocation2] sm:$0xff] %v923
  %928 = vst [vmem:[#allocation2 + $0x8] sm:$0xff] %v924
  %929 = vst [vmem:[#allocation2 + $0x10] sm:$0xff] %v925
  %930 = vst [vmem:[#allocation2 + $0x18] sm:$0xff] %v926
  %931 = vrot.lane.b32.xlu0 %v868, 16
  %v932 = vpop.permute.xlu0 %931
  %933 = vrot.lane.b32.xlu0 %v872, 16
  %v934 = vpop.permute.xlu0 %933
  %937 = vrot.lane.b32.xlu0 %v865, 16
  %v938 = vpop.permute.xlu0 %937
  %939 = vrot.lane.b32.xlu0 %v866, 16
  %v940 = vpop.permute.xlu0 %939
  %941 = vrot.lane.b32.xlu0 %v867, 16
  %v942 = vpop.permute.xlu0 %941
  %943 = vrot.lane.b32.xlu0 %v869, 16
  %v944 = vpop.permute.xlu0 %943
  %945 = vrot.lane.b32.xlu0 %v870, 16
  %v946 = vpop.permute.xlu0 %945
  %947 = vrot.lane.b32.xlu0 %v871, 16
  %v948 = vpop.permute.xlu0 %947
  %v949 = vsel %vm147, %v938, %v940
  %v950 = vsel %vm147, %v940, %v942
  %v951 = vsel %vm147, %v942, %v932
  %v952 = vsel %vm147, %v944, %v946
  %v953 = vsel %vm147, %v946, %v948
  %v954 = vsel %vm147, %v948, %v934
  %v963 = vsel %vm147, %v932, %v938
  %v964 = vsel %vm147, %v934, %v944
  %v965 = vmul.f32 %v963, %v168
  %v966 = vmul.f32 %v949, %v172
  %v967 = vmul.f32 %v950, %v176
  %v968 = vmul.f32 %v951, %v180
  %v969 = vmul.f32 %v964, %v168
  %v970 = vmul.f32 %v952, %v172
  %v971 = vmul.f32 %v953, %v176
  %v972 = vmul.f32 %v954, %v180
  %v973 = vpack.c.bf16 %v969, %v965
  %v974 = vpack.c.bf16 %v970, %v966
  %v975 = vpack.c.bf16 %v971, %v967
  %v976 = vpack.c.bf16 %v972, %v968
  %977 = vst [vmem:[#allocation2 + $0x20] sm:$0xff] %v973
  %978 = vst [vmem:[#allocation2 + $0x28] sm:$0xff] %v974
  %979 = vst [vmem:[#allocation2 + $0x30] sm:$0xff] %v975
  %980 = vst [vmem:[#allocation2 + $0x38] sm:$0xff] %v976
  %981 = vrot.lane.b32.xlu0 %v868, 15
  %v982 = vpop.permute.xlu0 %981
  %983 = vrot.lane.b32.xlu0 %v872, 15
  %v984 = vpop.permute.xlu0 %983
  %987 = vrot.lane.b32.xlu0 %v865, 15
  %v988 = vpop.permute.xlu0 %987
  %989 = vrot.lane.b32.xlu0 %v866, 15
  %v990 = vpop.permute.xlu0 %989
  %991 = vrot.lane.b32.xlu0 %v867, 15
  %v992 = vpop.permute.xlu0 %991
  %993 = vrot.lane.b32.xlu0 %v869, 15
  %v994 = vpop.permute.xlu0 %993
  %995 = vrot.lane.b32.xlu0 %v870, 15
  %v996 = vpop.permute.xlu0 %995
  %997 = vrot.lane.b32.xlu0 %v871, 15
  %v998 = vpop.permute.xlu0 %997
  %v999 = vsel %vm219, %v988, %v990
  %v1000 = vsel %vm219, %v990, %v992
  %v1001 = vsel %vm219, %v992, %v982
  %v1002 = vsel %vm219, %v994, %v996
  %v1003 = vsel %vm219, %v996, %v998
  %v1004 = vsel %vm219, %v998, %v984
  %v1013 = vsel %vm219, %v982, %v988
  %v1014 = vsel %vm219, %v984, %v994
  %v1015 = vmul.f32 %v1013, %v240
  %v1016 = vmul.f32 %v999, %v244
  %v1017 = vmul.f32 %v1000, %v248
  %v1018 = vmul.f32 %v1001, %v252
  %v1019 = vmul.f32 %v1014, %v240
  %v1020 = vmul.f32 %v1002, %v244
  %v1021 = vmul.f32 %v1003, %v248
  %v1022 = vmul.f32 %v1004, %v252
  %v1023 = vpack.c.bf16 %v1019, %v1015
  %v1024 = vpack.c.bf16 %v1020, %v1016
  %v1025 = vpack.c.bf16 %v1021, %v1017
  %v1026 = vpack.c.bf16 %v1022, %v1018
  %1027 = vst [vmem:[#allocation2 + $0x40] sm:$0xff] %v1023
  %1028 = vst [vmem:[#allocation2 + $0x48] sm:$0xff] %v1024
  %1029 = vst [vmem:[#allocation2 + $0x50] sm:$0xff] %v1025
  %1030 = vst [vmem:[#allocation2 + $0x58] sm:$0xff] %v1026
  %1031 = vrot.lane.b32.xlu0 %v868, 1
  %v1032 = vpop.permute.xlu0 %1031
  %1033 = vrot.lane.b32.xlu0 %v872, 1
  %v1034 = vpop.permute.xlu0 %1033
  %1037 = vrot.lane.b32.xlu0 %v865, 1
  %v1038 = vpop.permute.xlu0 %1037
  %1039 = vrot.lane.b32.xlu0 %v866, 1
  %v1040 = vpop.permute.xlu0 %1039
  %1041 = vrot.lane.b32.xlu0 %v867, 1
  %v1042 = vpop.permute.xlu0 %1041
  %1043 = vrot.lane.b32.xlu0 %v869, 1
  %v1044 = vpop.permute.xlu0 %1043
  %1045 = vrot.lane.b32.xlu0 %v870, 1
  %v1046 = vpop.permute.xlu0 %1045
  %1047 = vrot.lane.b32.xlu0 %v871, 1
  %v1048 = vpop.permute.xlu0 %1047
  %v1049 = vsel %vm291, %v1038, %v1040
  %v1050 = vsel %vm291, %v1040, %v1042
  %v1051 = vsel %vm291, %v1042, %v1032
  %v1052 = vsel %vm291, %v1044, %v1046
  %v1053 = vsel %vm291, %v1046, %v1048
  %v1054 = vsel %vm291, %v1048, %v1034
  %v1063 = vsel %vm291, %v1032, %v1038
  %v1064 = vsel %vm291, %v1034, %v1044
  %v1065 = vmul.f32 %v1063, %v312
  %v1066 = vmul.f32 %v1049, %v316
  %v1067 = vmul.f32 %v1050, %v320
  %v1068 = vmul.f32 %v1051, %v324
  %v1069 = vmul.f32 %v1064, %v312
  %v1070 = vmul.f32 %v1052, %v316
  %v1071 = vmul.f32 %v1053, %v320
  %v1072 = vmul.f32 %v1054, %v324
  %v1073 = vpack.c.bf16 %v1069, %v1065
  %v1074 = vpack.c.bf16 %v1070, %v1066
  %v1075 = vpack.c.bf16 %v1071, %v1067
  %v1076 = vpack.c.bf16 %v1072, %v1068
  %1077 = vst [vmem:[#allocation2 + $0x60] sm:$0xff] %v1073
  %1078 = vst [vmem:[#allocation2 + $0x68] sm:$0xff] %v1074
  %1079 = vst [vmem:[#allocation2 + $0x70] sm:$0xff] %v1075
  %1080 = vst [vmem:[#allocation2 + $0x78] sm:$0xff] %v1076
  %v1081 = vpack.c.bf16 %v869, %v865
  %v1082 = vpack.c.bf16 %v870, %v866
  %v1083 = vpack.c.bf16 %v871, %v867
  %v1084 = vpack.c.bf16 %v872, %v868
  %1085 = vst [vmem:[#allocation2 + $0x80] sm:$0xff] %v1081
  %1086 = vst [vmem:[#allocation2 + $0x88] sm:$0xff] %v1082
  %1087 = vst [vmem:[#allocation2 + $0x90] sm:$0xff] %v1083
  %1088 = vst [vmem:[#allocation2 + $0x98] sm:$0xff] %v1084
  %1089 = vrot.lane.b32.xlu0 %v865, 127
  %v1090 = vpop.permute.xlu0 %1089
  %1091 = vrot.lane.b32.xlu0 %v866, 127
  %v1092 = vpop.permute.xlu0 %1091
  %1093 = vrot.lane.b32.xlu0 %v867, 127
  %v1094 = vpop.permute.xlu0 %1093
  %1095 = vrot.lane.b32.xlu0 %v868, 127
  %v1096 = vpop.permute.xlu0 %1095
  %1097 = vrot.lane.b32.xlu0 %v869, 127
  %v1098 = vpop.permute.xlu0 %1097
  %1099 = vrot.lane.b32.xlu0 %v870, 127
  %v1100 = vpop.permute.xlu0 %1099
  %1101 = vrot.lane.b32.xlu0 %v871, 127
  %v1102 = vpop.permute.xlu0 %1101
  %1103 = vrot.lane.b32.xlu0 %v872, 127
  %v1104 = vpop.permute.xlu0 %1103
  %v1105 = vsel %vm369, %v1090, %v1092
  %v1106 = vsel %vm369, %v1092, %v1094
  %v1107 = vsel %vm369, %v1094, %v1096
  %v1108 = vsel %vm369, %v1098, %v1100
  %v1109 = vsel %vm369, %v1100, %v1102
  %v1110 = vsel %vm369, %v1102, %v1104
  %v1121 = vsel %vm369, %v1096, %v1090
  %v1122 = vsel %vm369, %v1104, %v1098
  %v1123 = vmul.f32 %v1105, %v392
  %v1124 = vmul.f32 %v1106, %v396
  %v1125 = vmul.f32 %v1107, %v400
  %v1126 = vmul.f32 %v1121, %v404
  %v1127 = vmul.f32 %v1108, %v392
  %v1128 = vmul.f32 %v1109, %v396
  %v1129 = vmul.f32 %v1110, %v400
  %v1130 = vmul.f32 %v1122, %v404
  %v1131 = vpack.c.bf16 %v1127, %v1123
  %v1132 = vpack.c.bf16 %v1128, %v1124
  %v1133 = vpack.c.bf16 %v1129, %v1125
  %v1134 = vpack.c.bf16 %v1130, %v1126
  %1135 = vst [vmem:[#allocation2 + $0xa0] sm:$0xff] %v1131
  %1136 = vst [vmem:[#allocation2 + $0xa8] sm:$0xff] %v1132
  %1137 = vst [vmem:[#allocation2 + $0xb0] sm:$0xff] %v1133
  %1138 = vst [vmem:[#allocation2 + $0xb8] sm:$0xff] %v1134
  %1139 = vrot.lane.b32.xlu0 %v865, 113
  %v1140 = vpop.permute.xlu0 %1139
  %1141 = vrot.lane.b32.xlu0 %v866, 113
  %v1142 = vpop.permute.xlu0 %1141
  %1143 = vrot.lane.b32.xlu0 %v867, 113
  %v1144 = vpop.permute.xlu0 %1143
  %1145 = vrot.lane.b32.xlu0 %v868, 113
  %v1146 = vpop.permute.xlu0 %1145
  %1147 = vrot.lane.b32.xlu0 %v869, 113
  %v1148 = vpop.permute.xlu0 %1147
  %1149 = vrot.lane.b32.xlu0 %v870, 113
  %v1150 = vpop.permute.xlu0 %1149
  %1151 = vrot.lane.b32.xlu0 %v871, 113
  %v1152 = vpop.permute.xlu0 %1151
  %1153 = vrot.lane.b32.xlu0 %v872, 113
  %v1154 = vpop.permute.xlu0 %1153
  %v1155 = vsel %vm441, %v1140, %v1142
  %v1156 = vsel %vm441, %v1142, %v1144
  %v1157 = vsel %vm441, %v1144, %v1146
  %v1158 = vsel %vm441, %v1148, %v1150
  %v1159 = vsel %vm441, %v1150, %v1152
  %v1160 = vsel %vm441, %v1152, %v1154
  %v1171 = vsel %vm441, %v1146, %v1140
  %v1172 = vsel %vm441, %v1154, %v1148
  %v1173 = vmul.f32 %v1155, %v464
  %v1174 = vmul.f32 %v1156, %v468
  %v1175 = vmul.f32 %v1157, %v472
  %v1176 = vmul.f32 %v1171, %v476
  %v1177 = vmul.f32 %v1158, %v464
  %v1178 = vmul.f32 %v1159, %v468
  %v1179 = vmul.f32 %v1160, %v472
  %v1180 = vmul.f32 %v1172, %v476
  %v1181 = vpack.c.bf16 %v1177, %v1173
  %v1182 = vpack.c.bf16 %v1178, %v1174
  %v1183 = vpack.c.bf16 %v1179, %v1175
  %v1184 = vpack.c.bf16 %v1180, %v1176
  %1185 = vst [vmem:[#allocation2 + $0xc0] sm:$0xff] %v1181
  %1186 = vst [vmem:[#allocation2 + $0xc8] sm:$0xff] %v1182
  %1187 = vst [vmem:[#allocation2 + $0xd0] sm:$0xff] %v1183
  %1188 = vst [vmem:[#allocation2 + $0xd8] sm:$0xff] %v1184
  %1189 = vrot.lane.b32.xlu0 %v865, 112
  %v1190 = vpop.permute.xlu0 %1189
  %1191 = vrot.lane.b32.xlu0 %v866, 112
  %v1192 = vpop.permute.xlu0 %1191
  %1193 = vrot.lane.b32.xlu0 %v867, 112
  %v1194 = vpop.permute.xlu0 %1193
  %1195 = vrot.lane.b32.xlu0 %v868, 112
  %v1196 = vpop.permute.xlu0 %1195
  %1197 = vrot.lane.b32.xlu0 %v869, 112
  %v1198 = vpop.permute.xlu0 %1197
  %1199 = vrot.lane.b32.xlu0 %v870, 112
  %v1200 = vpop.permute.xlu0 %1199
  %1201 = vrot.lane.b32.xlu0 %v871, 112
  %v1202 = vpop.permute.xlu0 %1201
  %1203 = vrot.lane.b32.xlu0 %v872, 112
  %v1204 = vpop.permute.xlu0 %1203
  %v1205 = vsel %vm513, %v1190, %v1192
  %v1206 = vsel %vm513, %v1192, %v1194
  %v1207 = vsel %vm513, %v1194, %v1196
  %v1208 = vsel %vm513, %v1198, %v1200
  %v1209 = vsel %vm513, %v1200, %v1202
  %v1210 = vsel %vm513, %v1202, %v1204
  %v1221 = vsel %vm513, %v1196, %v1190
  %v1222 = vsel %vm513, %v1204, %v1198
  %v1223 = vmul.f32 %v1205, %v536
  %v1224 = vmul.f32 %v1206, %v540
  %v1225 = vmul.f32 %v1207, %v544
  %v1226 = vmul.f32 %v1221, %v548
  %v1227 = vmul.f32 %v1208, %v536
  %v1228 = vmul.f32 %v1209, %v540
  %v1229 = vmul.f32 %v1210, %v544
  %v1230 = vmul.f32 %v1222, %v548
  %v1231 = vpack.c.bf16 %v1227, %v1223
  %v1232 = vpack.c.bf16 %v1228, %v1224
  %v1233 = vpack.c.bf16 %v1229, %v1225
  %v1234 = vpack.c.bf16 %v1230, %v1226
  %1235 = vst [vmem:[#allocation2 + $0xe0] sm:$0xff] %v1231
  %1236 = vst [vmem:[#allocation2 + $0xe8] sm:$0xff] %v1232
  %1237 = vst [vmem:[#allocation2 + $0xf0] sm:$0xff] %v1233
  %1238 = vst [vmem:[#allocation2 + $0xf8] sm:$0xff] %v1234
  %1239 = vrot.lane.b32.xlu0 %v865, 111
  %v1240 = vpop.permute.xlu0 %1239
  %1241 = vrot.lane.b32.xlu0 %v866, 111
  %v1242 = vpop.permute.xlu0 %1241
  %1243 = vrot.lane.b32.xlu0 %v867, 111
  %v1244 = vpop.permute.xlu0 %1243
  %1245 = vrot.lane.b32.xlu0 %v868, 111
  %v1246 = vpop.permute.xlu0 %1245
  %1247 = vrot.lane.b32.xlu0 %v869, 111
  %v1248 = vpop.permute.xlu0 %1247
  %1249 = vrot.lane.b32.xlu0 %v870, 111
  %v1250 = vpop.permute.xlu0 %1249
  %1251 = vrot.lane.b32.xlu0 %v871, 111
  %v1252 = vpop.permute.xlu0 %1251
  %1253 = vrot.lane.b32.xlu0 %v872, 111
  %v1254 = vpop.permute.xlu0 %1253
  %v1255 = vsel %vm585, %v1240, %v1242
  %v1256 = vsel %vm585, %v1242, %v1244
  %v1257 = vsel %vm585, %v1244, %v1246
  %v1258 = vsel %vm585, %v1248, %v1250
  %v1259 = vsel %vm585, %v1250, %v1252
  %v1260 = vsel %vm585, %v1252, %v1254
  %v1271 = vsel %vm585, %v1246, %v1240
  %v1272 = vsel %vm585, %v1254, %v1248
  %v1273 = vmul.f32 %v1255, %v608
  %v1274 = vmul.f32 %v1256, %v612
  %v1275 = vmul.f32 %v1257, %v616
  %v1276 = vmul.f32 %v1271, %v620
  %v1277 = vmul.f32 %v1258, %v608
  %v1278 = vmul.f32 %v1259, %v612
  %v1279 = vmul.f32 %v1260, %v616
  %v1280 = vmul.f32 %v1272, %v620
  %v1281 = vpack.c.bf16 %v1277, %v1273
  %v1282 = vpack.c.bf16 %v1278, %v1274
  %v1283 = vpack.c.bf16 %v1279, %v1275
  %v1284 = vpack.c.bf16 %v1280, %v1276
  %1285 = vst [vmem:[#allocation2 + $0x100] sm:$0xff] %v1281
  %1286 = vst [vmem:[#allocation2 + $0x108] sm:$0xff] %v1282
  %1287 = vst [vmem:[#allocation2 + $0x110] sm:$0xff] %v1283
  %1288 = vst [vmem:[#allocation2 + $0x118] sm:$0xff] %v1284
  %v1289 = vld [vmem:[%s6] sm:$0xff]
  %v1290 = vld [vmem:[%s6 + $0x8] sm:$0xff]
  %v1291 = vld [vmem:[#allocation2] sm:$0xff]
  %v1292 = vld [vmem:[#allocation2 + $0x8] sm:$0xff]
  %v1293 = vld [vmem:[#allocation2 + $0x10] sm:$0xff]
  %v1294 = vld [vmem:[#allocation2 + $0x18] sm:$0xff]
  %v1295 = vld [vmem:[#allocation2 + $0x20] sm:$0xff]
  %v1296 = vld [vmem:[#allocation2 + $0x28] sm:$0xff]
  %v1297 = vld [vmem:[#allocation2 + $0x30] sm:$0xff]
  %v1298 = vld [vmem:[#allocation2 + $0x38] sm:$0xff]
  %v1299 = vld [vmem:[#allocation2 + $0x40] sm:$0xff]
  %v1300 = vld [vmem:[#allocation2 + $0x48] sm:$0xff]
  %v1301 = vld [vmem:[#allocation2 + $0x50] sm:$0xff]
  %v1302 = vld [vmem:[#allocation2 + $0x58] sm:$0xff]
  %v1303 = vld [vmem:[#allocation2 + $0x60] sm:$0xff]
  %v1304 = vld [vmem:[#allocation2 + $0x68] sm:$0xff]
  %v1305 = vld [vmem:[#allocation2 + $0x70] sm:$0xff]
  %v1306 = vld [vmem:[#allocation2 + $0x78] sm:$0xff]
  %v1307 = vld [vmem:[#allocation2 + $0x80] sm:$0xff]
  %v1308 = vld [vmem:[#allocation2 + $0x88] sm:$0xff]
  %v1309 = vld [vmem:[#allocation2 + $0x90] sm:$0xff]
  %v1310 = vld [vmem:[#allocation2 + $0x98] sm:$0xff]
  %v1311 = vld [vmem:[#allocation2 + $0xa0] sm:$0xff]
  %v1312 = vld [vmem:[#allocation2 + $0xa8] sm:$0xff]
  %v1313 = vld [vmem:[#allocation2 + $0xb0] sm:$0xff]
  %v1314 = vld [vmem:[#allocation2 + $0xb8] sm:$0xff]
  %v1315 = vld [vmem:[#allocation2 + $0xc0] sm:$0xff]
  %v1316 = vld [vmem:[#allocation2 + $0xc8] sm:$0xff]
  %v1317 = vld [vmem:[#allocation2 + $0xd0] sm:$0xff]
  %v1318 = vld [vmem:[#allocation2 + $0xd8] sm:$0xff]
  %v1319 = vld [vmem:[#allocation2 + $0xe0] sm:$0xff]
  %v1320 = vld [vmem:[#allocation2 + $0xe8] sm:$0xff]
  %v1321 = vld [vmem:[#allocation2 + $0xf0] sm:$0xff]
  %v1322 = vld [vmem:[#allocation2 + $0xf8] sm:$0xff]
  %v1323 = vld [vmem:[#allocation2 + $0x100] sm:$0xff]
  %v1324 = vld [vmem:[#allocation2 + $0x108] sm:$0xff]
  %v1325 = vld [vmem:[#allocation2 + $0x110] sm:$0xff]
  %v1326 = vld [vmem:[#allocation2 + $0x118] sm:$0xff]
  %v1329 = vunpack.c.l.b16 %v1289
  %v1330 = vunpack.c.h.b16 %v1289
  %v1331 = vunpack.c.l.b16 %v1290
  %v1332 = vunpack.c.h.b16 %v1290
  %v1333 = vpack.c.b16 %v1331, %v1329
  %v1334 = vpack.c.b16 %v1332, %v1330
  %v1337 = vsel %vm147, %v1334, 0
  %1339 = vmatprep.subr.bf16.mxu0 %v1292
  %1340 = vmatpush1.bf16.msra.mxu0 %v1291
  %1341 = vmatprep.subr.bf16.mxu0 %v1296
  %1342 = vmatpush1.bf16.msra.mxu0 %v1295
  %1343 = vmatprep.subr.bf16.mxu0 %v1300
  %1344 = vmatpush1.bf16.msra.mxu0 %v1299
  %1345 = vmatprep.subr.bf16.mxu0 %v1304
  %1346 = vmatpush1.bf16.msra.mxu0 %v1303
  %1347 = vmatprep.subr.bf16.mxu0 %v1308
  %1348 = vmatpush1.bf16.msra.mxu0 %v1307
  %1349 = vmatprep.subr.bf16.mxu0 %v1312
  %1350 = vmatpush1.bf16.msra.mxu0 %v1311
  %1351 = vmatprep.subr.bf16.mxu0 %v1316
  %1352 = vmatpush1.bf16.msra.mxu0 %v1315
  %1353 = vmatprep.subr.bf16.mxu0 %v1320
  %1354 = vmatpush1.bf16.msra.mxu0 %v1319
  %1355 = vmatprep.subr.bf16.mxu0 %v1324
  %1356 = vmatpush1.bf16.msra.mxu0 %v1323
  %1357 = vmatprep.subr.bf16.mxu0 0
  %1358 = vmatpush1.bf16.msra.mxu0 0
  %1359 = vmatprep.subr.bf16.mxu0 0
  %1360 = vmatpush1.bf16.msra.mxu0 0
  %1361 = vmatprep.subr.bf16.mxu0 0
  %1362 = vmatpush1.bf16.msra.mxu0 0
  %1363 = vmatprep.subr.bf16.mxu0 0
  %1364 = vmatpush1.bf16.msra.mxu0 0
  %1365 = vmatprep.subr.bf16.mxu0 0
  %1366 = vmatpush1.bf16.msra.mxu0 0
  %1367 = vmatprep.subr.bf16.mxu0 0
  %1368 = vmatpush1.bf16.msra.mxu0 0
  %1369 = vmatprep.subr.bf16.mxu0 0
  %1370 = vmatpush1.bf16.msra.mxu0 0
  %1371 = vmatprep.mubr.bf16.mxu0 %v1337
  %1372 = vmatmul.mubr.bf16.gmra.mrb[0].mxu0 %v1333
  %v1373 = vpop.f32.mrb[0].mxu0
  %v1374 = vadd.f32 0.0, %v1373
  %v1375 = vpop.f32.mrb[0].mxu0
  %v1376 = vadd.f32 0.0, %v1375
  %v1377 = vpop.f32.mrb[0].mxu0
  %v1378 = vadd.f32 0.0, %v1377
  %v1379 = vpop.f32.mrb[0].mxu0
  %v1380 = vadd.f32 0.0, %v1379
  %1381 = vdwg.mxu0
  %1382 = vmatprep.subr.bf16.mxu0 %v1294
  %1383 = vmatpush1.bf16.msra.mxu0 %v1293
  %1384 = vmatprep.subr.bf16.mxu0 %v1298
  %1385 = vmatpush1.bf16.msra.mxu0 %v1297
  %1386 = vmatprep.subr.bf16.mxu0 %v1302
  %1387 = vmatpush1.bf16.msra.mxu0 %v1301
  %1388 = vmatprep.subr.bf16.mxu0 %v1306
  %1389 = vmatpush1.bf16.msra.mxu0 %v1305
  %1390 = vmatprep.subr.bf16.mxu0 %v1310
  %1391 = vmatpush1.bf16.msra.mxu0 %v1309
  %1392 = vmatprep.subr.bf16.mxu0 %v1314
  %1393 = vmatpush1.bf16.msra.mxu0 %v1313
  %1394 = vmatprep.subr.bf16.mxu0 %v1318
  %1395 = vmatpush1.bf16.msra.mxu0 %v1317
  %1396 = vmatprep.subr.bf16.mxu0 %v1322
  %1397 = vmatpush1.bf16.msra.mxu0 %v1321
  %1398 = vmatprep.subr.bf16.mxu0 %v1326
  %1399 = vmatpush1.bf16.msra.mxu0 %v1325
  %1400 = vmatprep.subr.bf16.mxu0 0
  %1401 = vmatpush1.bf16.msra.mxu0 0
  %1402 = vmatprep.subr.bf16.mxu0 0
  %1403 = vmatpush1.bf16.msra.mxu0 0
  %1404 = vmatprep.subr.bf16.mxu0 0
  %1405 = vmatpush1.bf16.msra.mxu0 0
  %1406 = vmatprep.subr.bf16.mxu0 0
  %1407 = vmatpush1.bf16.msra.mxu0 0
  %1408 = vmatprep.subr.bf16.mxu0 0
  %1409 = vmatpush1.bf16.msra.mxu0 0
  %1410 = vmatprep.subr.bf16.mxu0 0
  %1411 = vmatpush1.bf16.msra.mxu0 0
  %1412 = vmatprep.subr.bf16.mxu0 0
  %1413 = vmatpush1.bf16.msra.mxu0 0
  %1414 = vmatprep.mubr.bf16.mxu0 %v1337
  %1415 = vmatmul.mubr.bf16.gmra.mrb[0].mxu0 %v1333
  %v1416 = vpop.f32.mrb[0].mxu0
  %v1417 = vadd.f32 0.0, %v1416
  %v1418 = vpop.f32.mrb[0].mxu0
  %v1419 = vadd.f32 0.0, %v1418
  %v1420 = vpop.f32.mrb[0].mxu0
  %v1421 = vadd.f32 0.0, %v1420
  %v1422 = vpop.f32.mrb[0].mxu0
  %v1423 = vadd.f32 0.0, %v1422
  %1424 = vdwg.mxu0
  %v1425 = vadd.f32 %v1374, %v1376
  %v1426 = vadd.f32 %v1425, %v1417
  %v1427 = vadd.f32 %v1426, %v1419
  %1428 = vadd.xlane.f32.xlu0 %v1427
  %v1429 = vpop.xlane.xlu0 %1428
  %v1430 = vadd.f32 %v1378, %v1380
  %v1431 = vadd.f32 %v1430, %v1421
  %v1432 = vadd.f32 %v1431, %v1423
  %1433 = vadd.xlane.f32.xlu0 %v1432
  %v1434 = vpop.xlane.xlu0 %1433
  %v1435 = vmul.f32 %v1374, %v1374
  %v1436 = vmul.f32 %v1376, %v1376
  %v1437 = vmul.f32 %v1417, %v1417
  %v1438 = vmul.f32 %v1419, %v1419
  %v1439 = vmul.f32 %v1378, %v1378
  %v1440 = vmul.f32 %v1380, %v1380
  %v1441 = vmul.f32 %v1421, %v1421
  %v1442 = vmul.f32 %v1423, %v1423
  %v1443 = vadd.f32 %v1435, %v1436
  %v1444 = vadd.f32 %v1443, %v1437
  %v1445 = vadd.f32 %v1444, %v1438
  %1446 = vadd.xlane.f32.xlu0 %v1445
  %v1447 = vpop.xlane.xlu0 %1446
  %v1448 = vadd.f32 %v1439, %v1440
  %v1449 = vadd.f32 %v1448, %v1441
  %v1450 = vadd.f32 %v1449, %v1442
  %1451 = vadd.xlane.f32.xlu0 %v1450
  %v1452 = vpop.xlane.xlu0 %1451
  %v1453 = vmul.f32 %v1429, 0.001953125
  %v1454 = vmul.f32 %v1434, 0.001953125
  %v1455 = vmul.f32 %v1447, 0.001953125
  %v1456 = vmul.f32 %v1452, 0.001953125
  %v1457 = vmul.f32 %v1453, %v1453
  %v1458 = vmul.f32 %v1454, %v1454
  %v1459 = vsub.f32 %v1455, %v1457
  %v1460 = vsub.f32 %v1456, %v1458
  %v1461 = vmax.f32 %v1459, 0.0
  %v1462 = vmax.f32 %v1460, 0.0
  %v1463 = vld [vmem:[%s7] sm:$0xff]
  %v1464 = vld [vmem:[%s7 + $0x8] sm:$0xff]
  %v1465 = vadd.f32 %v1461, 1e-05
  %v1466 = vadd.f32 %v1462, 1e-05
  %v1467 = vrsqrt.pop %v1465
  %v1468 = vrsqrt.pop %v1466
  %v1469 = vmul.f32 %v1463, %v1467
  %v1470 = vmul.f32 %v1464, %v1468
  %v1471 = vld [vmem:[%s8] sm:$0xff]
  %v1472 = vld [vmem:[%s8 + $0x8] sm:$0xff]
  %v1473 = vmul.f32 %v1453, %v1469
  %v1474 = vmul.f32 %v1454, %v1470
  %v1475 = vsub.f32 %v1471, %v1473
  %v1476 = vsub.f32 %v1472, %v1474
  %1478 = vset.pattern.permute.xlu0 0
  %1479 = vperm.xlu0 %1478, %v1469
  %v1480 = vpop.permute.xlu0 %1479
  %1483 = vset.pattern.permute.xlu0 0
  %1484 = vperm.xlu0 %1483, %v1470
  %v1485 = vpop.permute.xlu0 %1484
  %v1487 = vmul.f32 %v1374, %v1480
  %v1488 = vmul.f32 %v1376, %v1480
  %v1489 = vmul.f32 %v1417, %v1480
  %v1490 = vmul.f32 %v1419, %v1480
  %v1491 = vmul.f32 %v1378, %v1485
  %v1492 = vmul.f32 %v1380, %v1485
  %v1493 = vmul.f32 %v1421, %v1485
  %v1494 = vmul.f32 %v1423, %v1485
  %1496 = vset.pattern.permute.xlu0 0
  %1497 = vperm.xlu0 %1496, %v1475
  %v1498 = vpop.permute.xlu0 %1497
  %1501 = vset.pattern.permute.xlu0 0
  %1502 = vperm.xlu0 %1501, %v1476
  %v1503 = vpop.permute.xlu0 %1502
  %v1505 = vadd.f32 %v1487, %v1498
  %v1506 = vadd.f32 %v1488, %v1498
  %v1507 = vadd.f32 %v1489, %v1498
  %v1508 = vadd.f32 %v1490, %v1498
  %v1509 = vadd.f32 %v1491, %v1503
  %v1510 = vadd.f32 %v1492, %v1503
  %v1511 = vadd.f32 %v1493, %v1503
  %v1512 = vadd.f32 %v1494, %v1503
  %v1513 = vmax.f32 %v1505, 0.0
  %v1514 = vmax.f32 %v1506, 0.0
  %v1515 = vmax.f32 %v1507, 0.0
  %v1516 = vmax.f32 %v1508, 0.0
  %v1517 = vmax.f32 %v1509, 0.0
  %v1518 = vmax.f32 %v1510, 0.0
  %v1519 = vmax.f32 %v1511, 0.0
  %v1520 = vmax.f32 %v1512, 0.0
  %1529 = vrot.lane.b32.xlu0 %v1513, 127
  %v1530 = vpop.permute.xlu0 %1529
  %1531 = vrot.lane.b32.xlu0 %v1514, 127
  %v1532 = vpop.permute.xlu0 %1531
  %1533 = vrot.lane.b32.xlu0 %v1515, 127
  %v1534 = vpop.permute.xlu0 %1533
  %1535 = vrot.lane.b32.xlu0 %v1516, 127
  %v1536 = vpop.permute.xlu0 %1535
  %1537 = vrot.lane.b32.xlu0 %v1517, 127
  %v1538 = vpop.permute.xlu0 %1537
  %1539 = vrot.lane.b32.xlu0 %v1518, 127
  %v1540 = vpop.permute.xlu0 %1539
  %1541 = vrot.lane.b32.xlu0 %v1519, 127
  %v1542 = vpop.permute.xlu0 %1541
  %1543 = vrot.lane.b32.xlu0 %v1520, 127
  %v1544 = vpop.permute.xlu0 %1543
  %v1545 = vsel %vm369, %v1530, %v1532
  %v1546 = vsel %vm369, %v1532, %v1534
  %v1547 = vsel %vm369, %v1534, %v1536
  %v1548 = vsel %vm369, %v1538, %v1540
  %v1549 = vsel %vm369, %v1540, %v1542
  %v1550 = vsel %vm369, %v1542, %v1544
  %v1561 = vsel %vm369, %v1536, %v1530
  %v1562 = vsel %vm369, %v1544, %v1538
  %v1563 = vmax.f32 %v1513, %v1545
  %v1564 = vmax.f32 %v1514, %v1546
  %v1565 = vmax.f32 %v1515, %v1547
  %v1566 = vmax.f32 %v1516, %v1561
  %v1567 = vmax.f32 %v1517, %v1548
  %v1568 = vmax.f32 %v1518, %v1549
  %v1569 = vmax.f32 %v1519, %v1550
  %v1570 = vmax.f32 %v1520, %v1562
  %1579 = vrot.lane.b32.xlu0 %v1563, 112
  %v1580 = vpop.permute.xlu0 %1579
  %1581 = vrot.lane.b32.xlu0 %v1564, 112
  %v1582 = vpop.permute.xlu0 %1581
  %1583 = vrot.lane.b32.xlu0 %v1565, 112
  %v1584 = vpop.permute.xlu0 %1583
  %1585 = vrot.lane.b32.xlu0 %v1566, 112
  %v1586 = vpop.permute.xlu0 %1585
  %1587 = vrot.lane.b32.xlu0 %v1567, 112
  %v1588 = vpop.permute.xlu0 %1587
  %1589 = vrot.lane.b32.xlu0 %v1568, 112
  %v1590 = vpop.permute.xlu0 %1589
  %1591 = vrot.lane.b32.xlu0 %v1569, 112
  %v1592 = vpop.permute.xlu0 %1591
  %1593 = vrot.lane.b32.xlu0 %v1570, 112
  %v1594 = vpop.permute.xlu0 %1593
  %v1595 = vsel %vm513, %v1580, %v1582
  %v1596 = vsel %vm513, %v1582, %v1584
  %v1597 = vsel %vm513, %v1584, %v1586
  %v1598 = vsel %vm513, %v1588, %v1590
  %v1599 = vsel %vm513, %v1590, %v1592
  %v1600 = vsel %vm513, %v1592, %v1594
  %v1611 = vsel %vm513, %v1586, %v1580
  %v1612 = vsel %vm513, %v1594, %v1588
  %v1613 = vmax.f32 %v1563, %v1595
  %v1614 = vmax.f32 %v1564, %v1596
  %v1615 = vmax.f32 %v1565, %v1597
  %v1616 = vmax.f32 %v1566, %v1611
  %v1617 = vmax.f32 %v1567, %v1598
  %v1618 = vmax.f32 %v1568, %v1599
  %v1619 = vmax.f32 %v1569, %v1600
  %v1620 = vmax.f32 %v1570, %v1612
  %v1621 = vld [vmem:[%s2] sm:$0xff]
  %v1622 = vld [vmem:[%s2 + $0x8] sm:$0xff]
  %v1624 = vsel %vm147, %v1613, 0
  %v1627 = vsel %vm147, %v1617, 0
  %1629 = vmatprep.subr.mxu0 0.0
  %1630 = vmatpush1.msra.mxu0 %v1621
  %1631 = vmatprep.subr.mxu0 0.0
  %1632 = vmatpush1.msra.mxu0 %v1622
  %1633 = vmatprep.subr.mxu0 0.0
  %1634 = vmatpush1.msra.mxu0 0.0
  %1635 = vmatprep.subr.mxu0 0.0
  %1636 = vmatpush1.msra.mxu0 0.0
  %1637 = vmatprep.subr.mxu0 0.0
  %1638 = vmatpush1.msra.mxu0 0.0
  %1639 = vmatprep.subr.mxu0 0.0
  %1640 = vmatpush1.msra.mxu0 0.0
  %1641 = vmatprep.subr.mxu0 0.0
  %1642 = vmatpush1.msra.mxu0 0.0
  %1643 = vmatprep.subr.mxu0 0.0
  %1644 = vmatpush1.msra.mxu0 0.0
  %1645 = vmatprep.subr.mxu0 0.0
  %1646 = vmatpush1.msra.mxu0 0.0
  %1647 = vmatprep.subr.mxu0 0.0
  %1648 = vmatpush1.msra.mxu0 0.0
  %1649 = vmatprep.subr.mxu0 0.0
  %1650 = vmatpush1.msra.mxu0 0.0
  %1651 = vmatprep.subr.mxu0 0.0
  %1652 = vmatpush1.msra.mxu0 0.0
  %1653 = vmatprep.subr.mxu0 0.0
  %1654 = vmatpush1.msra.mxu0 0.0
  %1655 = vmatprep.subr.mxu0 0.0
  %1656 = vmatpush1.msra.mxu0 0.0
  %1657 = vmatprep.subr.mxu0 0.0
  %1658 = vmatpush1.msra.mxu0 0.0
  %1659 = vmatprep.subr.mxu0 0.0
  %1660 = vmatpush1.msra.mxu0 0.0
  %1661 = vmatprep.subr.mxu0 0.0
  %1662 = vmatpush1.msra.mxu0 0.0
  %1663 = vmatprep.subr.mxu0 0.0
  %1664 = vmatpush1.msra.mxu0 0.0
  %1665 = vmatprep.subr.mxu0 0.0
  %1666 = vmatpush1.msra.mxu0 0.0
  %1667 = vmatprep.subr.mxu0 0.0
  %1668 = vmatpush1.msra.mxu0 0.0
  %1669 = vmatprep.subr.mxu0 0.0
  %1670 = vmatpush1.msra.mxu0 0.0
  %1671 = vmatprep.subr.mxu0 0.0
  %1672 = vmatpush1.msra.mxu0 0.0
  %1673 = vmatprep.subr.mxu0 0.0
  %1674 = vmatpush1.msra.mxu0 0.0
  %1675 = vmatprep.subr.mxu0 0.0
  %1676 = vmatpush1.msra.mxu0 0.0
  %1677 = vmatprep.subr.mxu0 0.0
  %1678 = vmatpush1.msra.mxu0 0.0
  %1679 = vmatprep.subr.mxu0 0.0
  %1680 = vmatpush1.msra.mxu0 0.0
  %1681 = vmatprep.subr.mxu0 0.0
  %1682 = vmatpush1.msra.mxu0 0.0
  %1683 = vmatprep.subr.mxu0 0.0
  %1684 = vmatpush1.msra.mxu0 0.0
  %1685 = vmatprep.subr.mxu0 0.0
  %1686 = vmatpush1.msra.mxu0 0.0
  %1687 = vmatprep.subr.mxu0 0.0
  %1688 = vmatpush1.msra.mxu0 0.0
  %1689 = vmatprep.subr.mxu0 0.0
  %1690 = vmatpush1.msra.mxu0 0.0
  %1691 = vmatprep.subr.mxu0 0.0
  %1692 = vmatpush1.msra.mxu0 0.0
  %1693 = vmatprep.mubr.f32.mxu0 0.0
  %1694 = vmatmul.mubr.f32.gmra.mrb[0].mxu0 %v1624
  %v1695 = vpop.f32.mrb[0].mxu0
  %v1696 = vadd.f32 0.0, %v1695
  %v1697 = vpop.f32.mrb[0].mxu0
  %1698 = vmatprep.mubr.f32.mxu0 0.0
  %1699 = vmatmul.mubr.f32.gmra.mrb[0].mxu0 %v1627
  %v1700 = vpop.f32.mrb[0].mxu0
  %v1701 = vadd.f32 0.0, %v1700
  %v1702 = vpop.f32.mrb[0].mxu0
  %1703 = vdwg.mxu0
  %1704 = vrot.lane.b32.xlu0 %v1613, 96
  %v1705 = vpop.permute.xlu0 %1704
  %1706 = vrot.lane.b32.xlu0 %v1617, 96
  %v1707 = vpop.permute.xlu0 %1706
  %v1708 = vsel %vm147, %v1705, 0
  %v1710 = vsel %vm147, %v1707, 0
  %1712 = vmatprep.subr.mxu0 0.0
  %1713 = vmatpush1.msra.mxu0 %v1621
  %1714 = vmatprep.subr.mxu0 0.0
  %1715 = vmatpush1.msra.mxu0 %v1622
  %1716 = vmatprep.subr.mxu0 0.0
  %1717 = vmatpush1.msra.mxu0 0.0
  %1718 = vmatprep.subr.mxu0 0.0
  %1719 = vmatpush1.msra.mxu0 0.0
  %1720 = vmatprep.subr.mxu0 0.0
  %1721 = vmatpush1.msra.mxu0 0.0
  %1722 = vmatprep.subr.mxu0 0.0
  %1723 = vmatpush1.msra.mxu0 0.0
  %1724 = vmatprep.subr.mxu0 0.0
  %1725 = vmatpush1.msra.mxu0 0.0
  %1726 = vmatprep.subr.mxu0 0.0
  %1727 = vmatpush1.msra.mxu0 0.0
  %1728 = vmatprep.subr.mxu0 0.0
  %1729 = vmatpush1.msra.mxu0 0.0
  %1730 = vmatprep.subr.mxu0 0.0
  %1731 = vmatpush1.msra.mxu0 0.0
  %1732 = vmatprep.subr.mxu0 0.0
  %1733 = vmatpush1.msra.mxu0 0.0
  %1734 = vmatprep.subr.mxu0 0.0
  %1735 = vmatpush1.msra.mxu0 0.0
  %1736 = vmatprep.subr.mxu0 0.0
  %1737 = vmatpush1.msra.mxu0 0.0
  %1738 = vmatprep.subr.mxu0 0.0
  %1739 = vmatpush1.msra.mxu0 0.0
  %1740 = vmatprep.subr.mxu0 0.0
  %1741 = vmatpush1.msra.mxu0 0.0
  %1742 = vmatprep.subr.mxu0 0.0
  %1743 = vmatpush1.msra.mxu0 0.0
  %1744 = vmatprep.subr.mxu0 0.0
  %1745 = vmatpush1.msra.mxu0 0.0
  %1746 = vmatprep.subr.mxu0 0.0
  %1747 = vmatpush1.msra.mxu0 0.0
  %1748 = vmatprep.subr.mxu0 0.0
  %1749 = vmatpush1.msra.mxu0 0.0
  %1750 = vmatprep.subr.mxu0 0.0
  %1751 = vmatpush1.msra.mxu0 0.0
  %1752 = vmatprep.subr.mxu0 0.0
  %1753 = vmatpush1.msra.mxu0 0.0
  %1754 = vmatprep.subr.mxu0 0.0
  %1755 = vmatpush1.msra.mxu0 0.0
  %1756 = vmatprep.subr.mxu0 0.0
  %1757 = vmatpush1.msra.mxu0 0.0
  %1758 = vmatprep.subr.mxu0 0.0
  %1759 = vmatpush1.msra.mxu0 0.0
  %1760 = vmatprep.subr.mxu0 0.0
  %1761 = vmatpush1.msra.mxu0 0.0
  %1762 = vmatprep.subr.mxu0 0.0
  %1763 = vmatpush1.msra.mxu0 0.0
  %1764 = vmatprep.subr.mxu0 0.0
  %1765 = vmatpush1.msra.mxu0 0.0
  %1766 = vmatprep.subr.mxu0 0.0
  %1767 = vmatpush1.msra.mxu0 0.0
  %1768 = vmatprep.subr.mxu0 0.0
  %1769 = vmatpush1.msra.mxu0 0.0
  %1770 = vmatprep.subr.mxu0 0.0
  %1771 = vmatpush1.msra.mxu0 0.0
  %1772 = vmatprep.subr.mxu0 0.0
  %1773 = vmatpush1.msra.mxu0 0.0
  %1774 = vmatprep.subr.mxu0 0.0
  %1775 = vmatpush1.msra.mxu0 0.0
  %1776 = vmatprep.mubr.f32.mxu0 0.0
  %1777 = vmatmul.mubr.f32.gmra.mrb[0].mxu0 %v1708
  %v1778 = vpop.f32.mrb[0].mxu0
  %v1779 = vadd.f32 0.0, %v1778
  %v1780 = vpop.f32.mrb[0].mxu0
  %1781 = vmatprep.mubr.f32.mxu0 0.0
  %1782 = vmatmul.mubr.f32.gmra.mrb[0].mxu0 %v1710
  %v1783 = vpop.f32.mrb[0].mxu0
  %v1784 = vadd.f32 0.0, %v1783
  %v1785 = vpop.f32.mrb[0].mxu0
  %1786 = vdwg.mxu0
  %1787 = vrot.lane.b32.xlu0 %v1613, 64
  %v1788 = vpop.permute.xlu0 %1787
  %1789 = vrot.lane.b32.xlu0 %v1617, 64
  %v1790 = vpop.permute.xlu0 %1789
  %v1791 = vsel %vm147, %v1788, 0
  %v1793 = vsel %vm147, %v1790, 0
  %1795 = vmatprep.subr.mxu0 0.0
  %1796 = vmatpush1.msra.mxu0 %v1621
  %1797 = vmatprep.subr.mxu0 0.0
  %1798 = vmatpush1.msra.mxu0 %v1622
  %1799 = vmatprep.subr.mxu0 0.0
  %1800 = vmatpush1.msra.mxu0 0.0
  %1801 = vmatprep.subr.mxu0 0.0
  %1802 = vmatpush1.msra.mxu0 0.0
  %1803 = vmatprep.subr.mxu0 0.0
  %1804 = vmatpush1.msra.mxu0 0.0
  %1805 = vmatprep.subr.mxu0 0.0
  %1806 = vmatpush1.msra.mxu0 0.0
  %1807 = vmatprep.subr.mxu0 0.0
  %1808 = vmatpush1.msra.mxu0 0.0
  %1809 = vmatprep.subr.mxu0 0.0
  %1810 = vmatpush1.msra.mxu0 0.0
  %1811 = vmatprep.subr.mxu0 0.0
  %1812 = vmatpush1.msra.mxu0 0.0
  %1813 = vmatprep.subr.mxu0 0.0
  %1814 = vmatpush1.msra.mxu0 0.0
  %1815 = vmatprep.subr.mxu0 0.0
  %1816 = vmatpush1.msra.mxu0 0.0
  %1817 = vmatprep.subr.mxu0 0.0
  %1818 = vmatpush1.msra.mxu0 0.0
  %1819 = vmatprep.subr.mxu0 0.0
  %1820 = vmatpush1.msra.mxu0 0.0
  %1821 = vmatprep.subr.mxu0 0.0
  %1822 = vmatpush1.msra.mxu0 0.0
  %1823 = vmatprep.subr.mxu0 0.0
  %1824 = vmatpush1.msra.mxu0 0.0
  %1825 = vmatprep.subr.mxu0 0.0
  %1826 = vmatpush1.msra.mxu0 0.0
  %1827 = vmatprep.subr.mxu0 0.0
  %1828 = vmatpush1.msra.mxu0 0.0
  %1829 = vmatprep.subr.mxu0 0.0
  %1830 = vmatpush1.msra.mxu0 0.0
  %1831 = vmatprep.subr.mxu0 0.0
  %1832 = vmatpush1.msra.mxu0 0.0
  %1833 = vmatprep.subr.mxu0 0.0
  %1834 = vmatpush1.msra.mxu0 0.0
  %1835 = vmatprep.subr.mxu0 0.0
  %1836 = vmatpush1.msra.mxu0 0.0
  %1837 = vmatprep.subr.mxu0 0.0
  %1838 = vmatpush1.msra.mxu0 0.0
  %1839 = vmatprep.subr.mxu0 0.0
  %1840 = vmatpush1.msra.mxu0 0.0
  %1841 = vmatprep.subr.mxu0 0.0
  %1842 = vmatpush1.msra.mxu0 0.0
  %1843 = vmatprep.subr.mxu0 0.0
  %1844 = vmatpush1.msra.mxu0 0.0
  %1845 = vmatprep.subr.mxu0 0.0
  %1846 = vmatpush1.msra.mxu0 0.0
  %1847 = vmatprep.subr.mxu0 0.0
  %1848 = vmatpush1.msra.mxu0 0.0
  %1849 = vmatprep.subr.mxu0 0.0
  %1850 = vmatpush1.msra.mxu0 0.0
  %1851 = vmatprep.subr.mxu0 0.0
  %1852 = vmatpush1.msra.mxu0 0.0
  %1853 = vmatprep.subr.mxu0 0.0
  %1854 = vmatpush1.msra.mxu0 0.0
  %1855 = vmatprep.subr.mxu0 0.0
  %1856 = vmatpush1.msra.mxu0 0.0
  %1857 = vmatprep.subr.mxu0 0.0
  %1858 = vmatpush1.msra.mxu0 0.0
  %1859 = vmatprep.mubr.f32.mxu0 0.0
  %1860 = vmatmul.mubr.f32.gmra.mrb[0].mxu0 %v1791
  %v1861 = vpop.f32.mrb[0].mxu0
  %v1862 = vadd.f32 0.0, %v1861
  %v1863 = vpop.f32.mrb[0].mxu0
  %1864 = vmatprep.mubr.f32.mxu0 0.0
  %1865 = vmatmul.mubr.f32.gmra.mrb[0].mxu0 %v1793
  %v1866 = vpop.f32.mrb[0].mxu0
  %v1867 = vadd.f32 0.0, %v1866
  %v1868 = vpop.f32.mrb[0].mxu0
  %1869 = vdwg.mxu0
  %1870 = vrot.lane.b32.xlu0 %v1613, 32
  %v1871 = vpop.permute.xlu0 %1870
  %1872 = vrot.lane.b32.xlu0 %v1617, 32
  %v1873 = vpop.permute.xlu0 %1872
  %v1874 = vsel %vm147, %v1871, 0
  %v1876 = vsel %vm147, %v1873, 0
  %1878 = vmatprep.subr.mxu0 0.0
  %1879 = vmatpush1.msra.mxu0 %v1621
  %1880 = vmatprep.subr.mxu0 0.0
  %1881 = vmatpush1.msra.mxu0 %v1622
  %1882 = vmatprep.subr.mxu0 0.0
  %1883 = vmatpush1.msra.mxu0 0.0
  %1884 = vmatprep.subr.mxu0 0.0
  %1885 = vmatpush1.msra.mxu0 0.0
  %1886 = vmatprep.subr.mxu0 0.0
  %1887 = vmatpush1.msra.mxu0 0.0
  %1888 = vmatprep.subr.mxu0 0.0
  %1889 = vmatpush1.msra.mxu0 0.0
  %1890 = vmatprep.subr.mxu0 0.0
  %1891 = vmatpush1.msra.mxu0 0.0
  %1892 = vmatprep.subr.mxu0 0.0
  %1893 = vmatpush1.msra.mxu0 0.0
  %1894 = vmatprep.subr.mxu0 0.0
  %1895 = vmatpush1.msra.mxu0 0.0
  %1896 = vmatprep.subr.mxu0 0.0
  %1897 = vmatpush1.msra.mxu0 0.0
  %1898 = vmatprep.subr.mxu0 0.0
  %1899 = vmatpush1.msra.mxu0 0.0
  %1900 = vmatprep.subr.mxu0 0.0
  %1901 = vmatpush1.msra.mxu0 0.0
  %1902 = vmatprep.subr.mxu0 0.0
  %1903 = vmatpush1.msra.mxu0 0.0
  %1904 = vmatprep.subr.mxu0 0.0
  %1905 = vmatpush1.msra.mxu0 0.0
  %1906 = vmatprep.subr.mxu0 0.0
  %1907 = vmatpush1.msra.mxu0 0.0
  %1908 = vmatprep.subr.mxu0 0.0
  %1909 = vmatpush1.msra.mxu0 0.0
  %1910 = vmatprep.subr.mxu0 0.0
  %1911 = vmatpush1.msra.mxu0 0.0
  %1912 = vmatprep.subr.mxu0 0.0
  %1913 = vmatpush1.msra.mxu0 0.0
  %1914 = vmatprep.subr.mxu0 0.0
  %1915 = vmatpush1.msra.mxu0 0.0
  %1916 = vmatprep.subr.mxu0 0.0
  %1917 = vmatpush1.msra.mxu0 0.0
  %1918 = vmatprep.subr.mxu0 0.0
  %1919 = vmatpush1.msra.mxu0 0.0
  %1920 = vmatprep.subr.mxu0 0.0
  %1921 = vmatpush1.msra.mxu0 0.0
  %1922 = vmatprep.subr.mxu0 0.0
  %1923 = vmatpush1.msra.mxu0 0.0
  %1924 = vmatprep.subr.mxu0 0.0
  %1925 = vmatpush1.msra.mxu0 0.0
  %1926 = vmatprep.subr.mxu0 0.0
  %1927 = vmatpush1.msra.mxu0 0.0
  %1928 = vmatprep.subr.mxu0 0.0
  %1929 = vmatpush1.msra.mxu0 0.0
  %1930 = vmatprep.subr.mxu0 0.0
  %1931 = vmatpush1.msra.mxu0 0.0
  %1932 = vmatprep.subr.mxu0 0.0
  %1933 = vmatpush1.msra.mxu0 0.0
  %1934 = vmatprep.subr.mxu0 0.0
  %1935 = vmatpush1.msra.mxu0 0.0
  %1936 = vmatprep.subr.mxu0 0.0
  %1937 = vmatpush1.msra.mxu0 0.0
  %1938 = vmatprep.subr.mxu0 0.0
  %1939 = vmatpush1.msra.mxu0 0.0
  %1940 = vmatprep.subr.mxu0 0.0
  %1941 = vmatpush1.msra.mxu0 0.0
  %1942 = vmatprep.mubr.f32.mxu0 0.0
  %1943 = vmatmul.mubr.f32.gmra.mrb[0].mxu0 %v1874
  %v1944 = vpop.f32.mrb[0].mxu0
  %v1945 = vadd.f32 0.0, %v1944
  %v1946 = vpop.f32.mrb[0].mxu0
  %1947 = vmatprep.mubr.f32.mxu0 0.0
  %1948 = vmatmul.mubr.f32.gmra.mrb[0].mxu0 %v1876
  %v1949 = vpop.f32.mrb[0].mxu0
  %v1950 = vadd.f32 0.0, %v1949
  %v1951 = vpop.f32.mrb[0].mxu0
  %1952 = vdwg.mxu0
  %v1954 = vsel %vm147, %v1614, 0
  %v1957 = vsel %vm147, %v1618, 0
  %1959 = vmatprep.subr.mxu0 0.0
  %1960 = vmatpush1.msra.mxu0 %v1621
  %1961 = vmatprep.subr.mxu0 0.0
  %1962 = vmatpush1.msra.mxu0 %v1622
  %1963 = vmatprep.subr.mxu0 0.0
  %1964 = vmatpush1.msra.mxu0 0.0
  %1965 = vmatprep.subr.mxu0 0.0
  %1966 = vmatpush1.msra.mxu0 0.0
  %1967 = vmatprep.subr.mxu0 0.0
  %1968 = vmatpush1.msra.mxu0 0.0
  %1969 = vmatprep.subr.mxu0 0.0
  %1970 = vmatpush1.msra.mxu0 0.0
  %1971 = vmatprep.subr.mxu0 0.0
  %1972 = vmatpush1.msra.mxu0 0.0
  %1973 = vmatprep.subr.mxu0 0.0
  %1974 = vmatpush1.msra.mxu0 0.0
  %1975 = vmatprep.subr.mxu0 0.0
  %1976 = vmatpush1.msra.mxu0 0.0
  %1977 = vmatprep.subr.mxu0 0.0
  %1978 = vmatpush1.msra.mxu0 0.0
  %1979 = vmatprep.subr.mxu0 0.0
  %1980 = vmatpush1.msra.mxu0 0.0
  %1981 = vmatprep.subr.mxu0 0.0
  %1982 = vmatpush1.msra.mxu0 0.0
  %1983 = vmatprep.subr.mxu0 0.0
  %1984 = vmatpush1.msra.mxu0 0.0
  %1985 = vmatprep.subr.mxu0 0.0
  %1986 = vmatpush1.msra.mxu0 0.0
  %1987 = vmatprep.subr.mxu0 0.0
  %1988 = vmatpush1.msra.mxu0 0.0
  %1989 = vmatprep.subr.mxu0 0.0
  %1990 = vmatpush1.msra.mxu0 0.0
  %1991 = vmatprep.subr.mxu0 0.0
  %1992 = vmatpush1.msra.mxu0 0.0
  %1993 = vmatprep.subr.mxu0 0.0
  %1994 = vmatpush1.msra.mxu0 0.0
  %1995 = vmatprep.subr.mxu0 0.0
  %1996 = vmatpush1.msra.mxu0 0.0
  %1997 = vmatprep.subr.mxu0 0.0
  %1998 = vmatpush1.msra.mxu0 0.0
  %1999 = vmatprep.subr.mxu0 0.0
  %2000 = vmatpush1.msra.mxu0 0.0
  %2001 = vmatprep.subr.mxu0 0.0
  %2002 = vmatpush1.msra.mxu0 0.0
  %2003 = vmatprep.subr.mxu0 0.0
  %2004 = vmatpush1.msra.mxu0 0.0
  %2005 = vmatprep.subr.mxu0 0.0
  %2006 = vmatpush1.msra.mxu0 0.0
  %2007 = vmatprep.subr.mxu0 0.0
  %2008 = vmatpush1.msra.mxu0 0.0
  %2009 = vmatprep.subr.mxu0 0.0
  %2010 = vmatpush1.msra.mxu0 0.0
  %2011 = vmatprep.subr.mxu0 0.0
  %2012 = vmatpush1.msra.mxu0 0.0
  %2013 = vmatprep.subr.mxu0 0.0
  %2014 = vmatpush1.msra.mxu0 0.0
  %2015 = vmatprep.subr.mxu0 0.0
  %2016 = vmatpush1.msra.mxu0 0.0
  %2017 = vmatprep.subr.mxu0 0.0
  %2018 = vmatpush1.msra.mxu0 0.0
  %2019 = vmatprep.subr.mxu0 0.0
  %2020 = vmatpush1.msra.mxu0 0.0
  %2021 = vmatprep.subr.mxu0 0.0
  %2022 = vmatpush1.msra.mxu0 0.0
  %2023 = vmatprep.mubr.f32.mxu0 0.0
  %2024 = vmatmul.mubr.f32.gmra.mrb[0].mxu0 %v1954
  %v2025 = vpop.f32.mrb[0].mxu0
  %v2026 = vadd.f32 0.0, %v2025
  %v2027 = vpop.f32.mrb[0].mxu0
  %2028 = vmatprep.mubr.f32.mxu0 0.0
  %2029 = vmatmul.mubr.f32.gmra.mrb[0].mxu0 %v1957
  %v2030 = vpop.f32.mrb[0].mxu0
  %v2031 = vadd.f32 0.0, %v2030
  %v2032 = vpop.f32.mrb[0].mxu0
  %2033 = vdwg.mxu0
  %2034 = vrot.lane.b32.xlu0 %v1614, 96
  %v2035 = vpop.permute.xlu0 %2034
  %2036 = vrot.lane.b32.xlu0 %v1618, 96
  %v2037 = vpop.permute.xlu0 %2036
  %v2038 = vsel %vm147, %v2035, 0
  %v2040 = vsel %vm147, %v2037, 0
  %2042 = vmatprep.subr.mxu0 0.0
  %2043 = vmatpush1.msra.mxu0 %v1621
  %2044 = vmatprep.subr.mxu0 0.0
  %2045 = vmatpush1.msra.mxu0 %v1622
  %2046 = vmatprep.subr.mxu0 0.0
  %2047 = vmatpush1.msra.mxu0 0.0
  %2048 = vmatprep.subr.mxu0 0.0
  %2049 = vmatpush1.msra.mxu0 0.0
  %2050 = vmatprep.subr.mxu0 0.0
  %2051 = vmatpush1.msra.mxu0 0.0
  %2052 = vmatprep.subr.mxu0 0.0
  %2053 = vmatpush1.msra.mxu0 0.0
  %2054 = vmatprep.subr.mxu0 0.0
  %2055 = vmatpush1.msra.mxu0 0.0
  %2056 = vmatprep.subr.mxu0 0.0
  %2057 = vmatpush1.msra.mxu0 0.0
  %2058 = vmatprep.subr.mxu0 0.0
  %2059 = vmatpush1.msra.mxu0 0.0
  %2060 = vmatprep.subr.mxu0 0.0
  %2061 = vmatpush1.msra.mxu0 0.0
  %2062 = vmatprep.subr.mxu0 0.0
  %2063 = vmatpush1.msra.mxu0 0.0
  %2064 = vmatprep.subr.mxu0 0.0
  %2065 = vmatpush1.msra.mxu0 0.0
  %2066 = vmatprep.subr.mxu0 0.0
  %2067 = vmatpush1.msra.mxu0 0.0
  %2068 = vmatprep.subr.mxu0 0.0
  %2069 = vmatpush1.msra.mxu0 0.0
  %2070 = vmatprep.subr.mxu0 0.0
  %2071 = vmatpush1.msra.mxu0 0.0
  %2072 = vmatprep.subr.mxu0 0.0
  %2073 = vmatpush1.msra.mxu0 0.0
  %2074 = vmatprep.subr.mxu0 0.0
  %2075 = vmatpush1.msra.mxu0 0.0
  %2076 = vmatprep.subr.mxu0 0.0
  %2077 = vmatpush1.msra.mxu0 0.0
  %2078 = vmatprep.subr.mxu0 0.0
  %2079 = vmatpush1.msra.mxu0 0.0
  %2080 = vmatprep.subr.mxu0 0.0
  %2081 = vmatpush1.msra.mxu0 0.0
  %2082 = vmatprep.subr.mxu0 0.0
  %2083 = vmatpush1.msra.mxu0 0.0
  %2084 = vmatprep.subr.mxu0 0.0
  %2085 = vmatpush1.msra.mxu0 0.0
  %2086 = vmatprep.subr.mxu0 0.0
  %2087 = vmatpush1.msra.mxu0 0.0
  %2088 = vmatprep.subr.mxu0 0.0
  %2089 = vmatpush1.msra.mxu0 0.0
  %2090 = vmatprep.subr.mxu0 0.0
  %2091 = vmatpush1.msra.mxu0 0.0
  %2092 = vmatprep.subr.mxu0 0.0
  %2093 = vmatpush1.msra.mxu0 0.0
  %2094 = vmatprep.subr.mxu0 0.0
  %2095 = vmatpush1.msra.mxu0 0.0
  %2096 = vmatprep.subr.mxu0 0.0
  %2097 = vmatpush1.msra.mxu0 0.0
  %2098 = vmatprep.subr.mxu0 0.0
  %2099 = vmatpush1.msra.mxu0 0.0
  %2100 = vmatprep.subr.mxu0 0.0
  %2101 = vmatpush1.msra.mxu0 0.0
  %2102 = vmatprep.subr.mxu0 0.0
  %2103 = vmatpush1.msra.mxu0 0.0
  %2104 = vmatprep.subr.mxu0 0.0
  %2105 = vmatpush1.msra.mxu0 0.0
  %2106 = vmatprep.mubr.f32.mxu0 0.0
  %2107 = vmatmul.mubr.f32.gmra.mrb[0].mxu0 %v2038
  %v2108 = vpop.f32.mrb[0].mxu0
  %v2109 = vadd.f32 0.0, %v2108
  %v2110 = vpop.f32.mrb[0].mxu0
  %2111 = vmatprep.mubr.f32.mxu0 0.0
  %2112 = vmatmul.mubr.f32.gmra.mrb[0].mxu0 %v2040
  %v2113 = vpop.f32.mrb[0].mxu0
  %v2114 = vadd.f32 0.0, %v2113
  %v2115 = vpop.f32.mrb[0].mxu0
  %2116 = vdwg.mxu0
  %2117 = vrot.lane.b32.xlu0 %v1614, 64
  %v2118 = vpop.permute.xlu0 %2117
  %2119 = vrot.lane.b32.xlu0 %v1618, 64
  %v2120 = vpop.permute.xlu0 %2119
  %v2121 = vsel %vm147, %v2118, 0
  %v2123 = vsel %vm147, %v2120, 0
  %2125 = vmatprep.subr.mxu0 0.0
  %2126 = vmatpush1.msra.mxu0 %v1621
  %2127 = vmatprep.subr.mxu0 0.0
  %2128 = vmatpush1.msra.mxu0 %v1622
  %2129 = vmatprep.subr.mxu0 0.0
  %2130 = vmatpush1.msra.mxu0 0.0
  %2131 = vmatprep.subr.mxu0 0.0
  %2132 = vmatpush1.msra.mxu0 0.0
  %2133 = vmatprep.subr.mxu0 0.0
  %2134 = vmatpush1.msra.mxu0 0.0
  %2135 = vmatprep.subr.mxu0 0.0
  %2136 = vmatpush1.msra.mxu0 0.0
  %2137 = vmatprep.subr.mxu0 0.0
  %2138 = vmatpush1.msra.mxu0 0.0
  %2139 = vmatprep.subr.mxu0 0.0
  %2140 = vmatpush1.msra.mxu0 0.0
  %2141 = vmatprep.subr.mxu0 0.0
  %2142 = vmatpush1.msra.mxu0 0.0
  %2143 = vmatprep.subr.mxu0 0.0
  %2144 = vmatpush1.msra.mxu0 0.0
  %2145 = vmatprep.subr.mxu0 0.0
  %2146 = vmatpush1.msra.mxu0 0.0
  %2147 = vmatprep.subr.mxu0 0.0
  %2148 = vmatpush1.msra.mxu0 0.0
  %2149 = vmatprep.subr.mxu0 0.0
  %2150 = vmatpush1.msra.mxu0 0.0
  %2151 = vmatprep.subr.mxu0 0.0
  %2152 = vmatpush1.msra.mxu0 0.0
  %2153 = vmatprep.subr.mxu0 0.0
  %2154 = vmatpush1.msra.mxu0 0.0
  %2155 = vmatprep.subr.mxu0 0.0
  %2156 = vmatpush1.msra.mxu0 0.0
  %2157 = vmatprep.subr.mxu0 0.0
  %2158 = vmatpush1.msra.mxu0 0.0
  %2159 = vmatprep.subr.mxu0 0.0
  %2160 = vmatpush1.msra.mxu0 0.0
  %2161 = vmatprep.subr.mxu0 0.0
  %2162 = vmatpush1.msra.mxu0 0.0
  %2163 = vmatprep.subr.mxu0 0.0
  %2164 = vmatpush1.msra.mxu0 0.0
  %2165 = vmatprep.subr.mxu0 0.0
  %2166 = vmatpush1.msra.mxu0 0.0
  %2167 = vmatprep.subr.mxu0 0.0
  %2168 = vmatpush1.msra.mxu0 0.0
  %2169 = vmatprep.subr.mxu0 0.0
  %2170 = vmatpush1.msra.mxu0 0.0
  %2171 = vmatprep.subr.mxu0 0.0
  %2172 = vmatpush1.msra.mxu0 0.0
  %2173 = vmatprep.subr.mxu0 0.0
  %2174 = vmatpush1.msra.mxu0 0.0
  %2175 = vmatprep.subr.mxu0 0.0
  %2176 = vmatpush1.msra.mxu0 0.0
  %2177 = vmatprep.subr.mxu0 0.0
  %2178 = vmatpush1.msra.mxu0 0.0
  %2179 = vmatprep.subr.mxu0 0.0
  %2180 = vmatpush1.msra.mxu0 0.0
  %2181 = vmatprep.subr.mxu0 0.0
  %2182 = vmatpush1.msra.mxu0 0.0
  %2183 = vmatprep.subr.mxu0 0.0
  %2184 = vmatpush1.msra.mxu0 0.0
  %2185 = vmatprep.subr.mxu0 0.0
  %2186 = vmatpush1.msra.mxu0 0.0
  %2187 = vmatprep.subr.mxu0 0.0
  %2188 = vmatpush1.msra.mxu0 0.0
  %2189 = vmatprep.mubr.f32.mxu0 0.0
  %2190 = vmatmul.mubr.f32.gmra.mrb[0].mxu0 %v2121
  %v2191 = vpop.f32.mrb[0].mxu0
  %v2192 = vadd.f32 0.0, %v2191
  %v2193 = vpop.f32.mrb[0].mxu0
  %2194 = vmatprep.mubr.f32.mxu0 0.0
  %2195 = vmatmul.mubr.f32.gmra.mrb[0].mxu0 %v2123
  %v2196 = vpop.f32.mrb[0].mxu0
  %v2197 = vadd.f32 0.0, %v2196
  %v2198 = vpop.f32.mrb[0].mxu0
  %2199 = vdwg.mxu0
  %2200 = vrot.lane.b32.xlu0 %v1614, 32
  %v2201 = vpop.permute.xlu0 %2200
  %2202 = vrot.lane.b32.xlu0 %v1618, 32
  %v2203 = vpop.permute.xlu0 %2202
  %v2204 = vsel %vm147, %v2201, 0
  %v2206 = vsel %vm147, %v2203, 0
  %2208 = vmatprep.subr.mxu0 0.0
  %2209 = vmatpush1.msra.mxu0 %v1621
  %2210 = vmatprep.subr.mxu0 0.0
  %2211 = vmatpush1.msra.mxu0 %v1622
  %2212 = vmatprep.subr.mxu0 0.0
  %2213 = vmatpush1.msra.mxu0 0.0
  %2214 = vmatprep.subr.mxu0 0.0
  %2215 = vmatpush1.msra.mxu0 0.0
  %2216 = vmatprep.subr.mxu0 0.0
  %2217 = vmatpush1.msra.mxu0 0.0
  %2218 = vmatprep.subr.mxu0 0.0
  %2219 = vmatpush1.msra.mxu0 0.0
  %2220 = vmatprep.subr.mxu0 0.0
  %2221 = vmatpush1.msra.mxu0 0.0
  %2222 = vmatprep.subr.mxu0 0.0
  %2223 = vmatpush1.msra.mxu0 0.0
  %2224 = vmatprep.subr.mxu0 0.0
  %2225 = vmatpush1.msra.mxu0 0.0
  %2226 = vmatprep.subr.mxu0 0.0
  %2227 = vmatpush1.msra.mxu0 0.0
  %2228 = vmatprep.subr.mxu0 0.0
  %2229 = vmatpush1.msra.mxu0 0.0
  %2230 = vmatprep.subr.mxu0 0.0
  %2231 = vmatpush1.msra.mxu0 0.0
  %2232 = vmatprep.subr.mxu0 0.0
  %2233 = vmatpush1.msra.mxu0 0.0
  %2234 = vmatprep.subr.mxu0 0.0
  %2235 = vmatpush1.msra.mxu0 0.0
  %2236 = vmatprep.subr.mxu0 0.0
  %2237 = vmatpush1.msra.mxu0 0.0
  %2238 = vmatprep.subr.mxu0 0.0
  %2239 = vmatpush1.msra.mxu0 0.0
  %2240 = vmatprep.subr.mxu0 0.0
  %2241 = vmatpush1.msra.mxu0 0.0
  %2242 = vmatprep.subr.mxu0 0.0
  %2243 = vmatpush1.msra.mxu0 0.0
  %2244 = vmatprep.subr.mxu0 0.0
  %2245 = vmatpush1.msra.mxu0 0.0
  %2246 = vmatprep.subr.mxu0 0.0
  %2247 = vmatpush1.msra.mxu0 0.0
  %2248 = vmatprep.subr.mxu0 0.0
  %2249 = vmatpush1.msra.mxu0 0.0
  %2250 = vmatprep.subr.mxu0 0.0
  %2251 = vmatpush1.msra.mxu0 0.0
  %2252 = vmatprep.subr.mxu0 0.0
  %2253 = vmatpush1.msra.mxu0 0.0
  %2254 = vmatprep.subr.mxu0 0.0
  %2255 = vmatpush1.msra.mxu0 0.0
  %2256 = vmatprep.subr.mxu0 0.0
  %2257 = vmatpush1.msra.mxu0 0.0
  %2258 = vmatprep.subr.mxu0 0.0
  %2259 = vmatpush1.msra.mxu0 0.0
  %2260 = vmatprep.subr.mxu0 0.0
  %2261 = vmatpush1.msra.mxu0 0.0
  %2262 = vmatprep.subr.mxu0 0.0
  %2263 = vmatpush1.msra.mxu0 0.0
  %2264 = vmatprep.subr.mxu0 0.0
  %2265 = vmatpush1.msra.mxu0 0.0
  %2266 = vmatprep.subr.mxu0 0.0
  %2267 = vmatpush1.msra.mxu0 0.0
  %2268 = vmatprep.subr.mxu0 0.0
  %2269 = vmatpush1.msra.mxu0 0.0
  %2270 = vmatprep.subr.mxu0 0.0
  %2271 = vmatpush1.msra.mxu0 0.0
  %2272 = vmatprep.mubr.f32.mxu0 0.0
  %2273 = vmatmul.mubr.f32.gmra.mrb[0].mxu0 %v2204
  %v2274 = vpop.f32.mrb[0].mxu0
  %v2275 = vadd.f32 0.0, %v2274
  %v2276 = vpop.f32.mrb[0].mxu0
  %2277 = vmatprep.mubr.f32.mxu0 0.0
  %2278 = vmatmul.mubr.f32.gmra.mrb[0].mxu0 %v2206
  %v2279 = vpop.f32.mrb[0].mxu0
  %v2280 = vadd.f32 0.0, %v2279
  %v2281 = vpop.f32.mrb[0].mxu0
  %2282 = vdwg.mxu0
  %v2284 = vsel %vm147, %v1615, 0
  %v2287 = vsel %vm147, %v1619, 0
  %2289 = vmatprep.subr.mxu0 0.0
  %2290 = vmatpush1.msra.mxu0 %v1621
  %2291 = vmatprep.subr.mxu0 0.0
  %2292 = vmatpush1.msra.mxu0 %v1622
  %2293 = vmatprep.subr.mxu0 0.0
  %2294 = vmatpush1.msra.mxu0 0.0
  %2295 = vmatprep.subr.mxu0 0.0
  %2296 = vmatpush1.msra.mxu0 0.0
  %2297 = vmatprep.subr.mxu0 0.0
  %2298 = vmatpush1.msra.mxu0 0.0
  %2299 = vmatprep.subr.mxu0 0.0
  %2300 = vmatpush1.msra.mxu0 0.0
  %2301 = vmatprep.subr.mxu0 0.0
  %2302 = vmatpush1.msra.mxu0 0.0
  %2303 = vmatprep.subr.mxu0 0.0
  %2304 = vmatpush1.msra.mxu0 0.0
  %2305 = vmatprep.subr.mxu0 0.0
  %2306 = vmatpush1.msra.mxu0 0.0
  %2307 = vmatprep.subr.mxu0 0.0
  %2308 = vmatpush1.msra.mxu0 0.0
  %2309 = vmatprep.subr.mxu0 0.0
  %2310 = vmatpush1.msra.mxu0 0.0
  %2311 = vmatprep.subr.mxu0 0.0
  %2312 = vmatpush1.msra.mxu0 0.0
  %2313 = vmatprep.subr.mxu0 0.0
  %2314 = vmatpush1.msra.mxu0 0.0
  %2315 = vmatprep.subr.mxu0 0.0
  %2316 = vmatpush1.msra.mxu0 0.0
  %2317 = vmatprep.subr.mxu0 0.0
  %2318 = vmatpush1.msra.mxu0 0.0
  %2319 = vmatprep.subr.mxu0 0.0
  %2320 = vmatpush1.msra.mxu0 0.0
  %2321 = vmatprep.subr.mxu0 0.0
  %2322 = vmatpush1.msra.mxu0 0.0
  %2323 = vmatprep.subr.mxu0 0.0
  %2324 = vmatpush1.msra.mxu0 0.0
  %2325 = vmatprep.subr.mxu0 0.0
  %2326 = vmatpush1.msra.mxu0 0.0
  %2327 = vmatprep.subr.mxu0 0.0
  %2328 = vmatpush1.msra.mxu0 0.0
  %2329 = vmatprep.subr.mxu0 0.0
  %2330 = vmatpush1.msra.mxu0 0.0
  %2331 = vmatprep.subr.mxu0 0.0
  %2332 = vmatpush1.msra.mxu0 0.0
  %2333 = vmatprep.subr.mxu0 0.0
  %2334 = vmatpush1.msra.mxu0 0.0
  %2335 = vmatprep.subr.mxu0 0.0
  %2336 = vmatpush1.msra.mxu0 0.0
  %2337 = vmatprep.subr.mxu0 0.0
  %2338 = vmatpush1.msra.mxu0 0.0
  %2339 = vmatprep.subr.mxu0 0.0
  %2340 = vmatpush1.msra.mxu0 0.0
  %2341 = vmatprep.subr.mxu0 0.0
  %2342 = vmatpush1.msra.mxu0 0.0
  %2343 = vmatprep.subr.mxu0 0.0
  %2344 = vmatpush1.msra.mxu0 0.0
  %2345 = vmatprep.subr.mxu0 0.0
  %2346 = vmatpush1.msra.mxu0 0.0
  %2347 = vmatprep.subr.mxu0 0.0
  %2348 = vmatpush1.msra.mxu0 0.0
  %2349 = vmatprep.subr.mxu0 0.0
  %2350 = vmatpush1.msra.mxu0 0.0
  %2351 = vmatprep.subr.mxu0 0.0
  %2352 = vmatpush1.msra.mxu0 0.0
  %2353 = vmatprep.mubr.f32.mxu0 0.0
  %2354 = vmatmul.mubr.f32.gmra.mrb[0].mxu0 %v2284
  %v2355 = vpop.f32.mrb[0].mxu0
  %v2356 = vadd.f32 0.0, %v2355
  %v2357 = vpop.f32.mrb[0].mxu0
  %2358 = vmatprep.mubr.f32.mxu0 0.0
  %2359 = vmatmul.mubr.f32.gmra.mrb[0].mxu0 %v2287
  %v2360 = vpop.f32.mrb[0].mxu0
  %v2361 = vadd.f32 0.0, %v2360
  %v2362 = vpop.f32.mrb[0].mxu0
  %2363 = vdwg.mxu0
  %2364 = vrot.lane.b32.xlu0 %v1615, 96
  %v2365 = vpop.permute.xlu0 %2364
  %2366 = vrot.lane.b32.xlu0 %v1619, 96
  %v2367 = vpop.permute.xlu0 %2366
  %v2368 = vsel %vm147, %v2365, 0
  %v2370 = vsel %vm147, %v2367, 0
  %2372 = vmatprep.subr.mxu0 0.0
  %2373 = vmatpush1.msra.mxu0 %v1621
  %2374 = vmatprep.subr.mxu0 0.0
  %2375 = vmatpush1.msra.mxu0 %v1622
  %2376 = vmatprep.subr.mxu0 0.0
  %2377 = vmatpush1.msra.mxu0 0.0
  %2378 = vmatprep.subr.mxu0 0.0
  %2379 = vmatpush1.msra.mxu0 0.0
  %2380 = vmatprep.subr.mxu0 0.0
  %2381 = vmatpush1.msra.mxu0 0.0
  %2382 = vmatprep.subr.mxu0 0.0
  %2383 = vmatpush1.msra.mxu0 0.0
  %2384 = vmatprep.subr.mxu0 0.0
  %2385 = vmatpush1.msra.mxu0 0.0
  %2386 = vmatprep.subr.mxu0 0.0
  %2387 = vmatpush1.msra.mxu0 0.0
  %2388 = vmatprep.subr.mxu0 0.0
  %2389 = vmatpush1.msra.mxu0 0.0
  %2390 = vmatprep.subr.mxu0 0.0
  %2391 = vmatpush1.msra.mxu0 0.0
  %2392 = vmatprep.subr.mxu0 0.0
  %2393 = vmatpush1.msra.mxu0 0.0
  %2394 = vmatprep.subr.mxu0 0.0
  %2395 = vmatpush1.msra.mxu0 0.0
  %2396 = vmatprep.subr.mxu0 0.0
  %2397 = vmatpush1.msra.mxu0 0.0
  %2398 = vmatprep.subr.mxu0 0.0
  %2399 = vmatpush1.msra.mxu0 0.0
  %2400 = vmatprep.subr.mxu0 0.0
  %2401 = vmatpush1.msra.mxu0 0.0
  %2402 = vmatprep.subr.mxu0 0.0
  %2403 = vmatpush1.msra.mxu0 0.0
  %2404 = vmatprep.subr.mxu0 0.0
  %2405 = vmatpush1.msra.mxu0 0.0
  %2406 = vmatprep.subr.mxu0 0.0
  %2407 = vmatpush1.msra.mxu0 0.0
  %2408 = vmatprep.subr.mxu0 0.0
  %2409 = vmatpush1.msra.mxu0 0.0
  %2410 = vmatprep.subr.mxu0 0.0
  %2411 = vmatpush1.msra.mxu0 0.0
  %2412 = vmatprep.subr.mxu0 0.0
  %2413 = vmatpush1.msra.mxu0 0.0
  %2414 = vmatprep.subr.mxu0 0.0
  %2415 = vmatpush1.msra.mxu0 0.0
  %2416 = vmatprep.subr.mxu0 0.0
  %2417 = vmatpush1.msra.mxu0 0.0
  %2418 = vmatprep.subr.mxu0 0.0
  %2419 = vmatpush1.msra.mxu0 0.0
  %2420 = vmatprep.subr.mxu0 0.0
  %2421 = vmatpush1.msra.mxu0 0.0
  %2422 = vmatprep.subr.mxu0 0.0
  %2423 = vmatpush1.msra.mxu0 0.0
  %2424 = vmatprep.subr.mxu0 0.0
  %2425 = vmatpush1.msra.mxu0 0.0
  %2426 = vmatprep.subr.mxu0 0.0
  %2427 = vmatpush1.msra.mxu0 0.0
  %2428 = vmatprep.subr.mxu0 0.0
  %2429 = vmatpush1.msra.mxu0 0.0
  %2430 = vmatprep.subr.mxu0 0.0
  %2431 = vmatpush1.msra.mxu0 0.0
  %2432 = vmatprep.subr.mxu0 0.0
  %2433 = vmatpush1.msra.mxu0 0.0
  %2434 = vmatprep.subr.mxu0 0.0
  %2435 = vmatpush1.msra.mxu0 0.0
  %2436 = vmatprep.mubr.f32.mxu0 0.0
  %2437 = vmatmul.mubr.f32.gmra.mrb[0].mxu0 %v2368
  %v2438 = vpop.f32.mrb[0].mxu0
  %v2439 = vadd.f32 0.0, %v2438
  %v2440 = vpop.f32.mrb[0].mxu0
  %2441 = vmatprep.mubr.f32.mxu0 0.0
  %2442 = vmatmul.mubr.f32.gmra.mrb[0].mxu0 %v2370
  %v2443 = vpop.f32.mrb[0].mxu0
  %v2444 = vadd.f32 0.0, %v2443
  %v2445 = vpop.f32.mrb[0].mxu0
  %2446 = vdwg.mxu0
  %2447 = vrot.lane.b32.xlu0 %v1615, 64
  %v2448 = vpop.permute.xlu0 %2447
  %2449 = vrot.lane.b32.xlu0 %v1619, 64
  %v2450 = vpop.permute.xlu0 %2449
  %v2451 = vsel %vm147, %v2448, 0
  %v2453 = vsel %vm147, %v2450, 0
  %2455 = vmatprep.subr.mxu0 0.0
  %2456 = vmatpush1.msra.mxu0 %v1621
  %2457 = vmatprep.subr.mxu0 0.0
  %2458 = vmatpush1.msra.mxu0 %v1622
  %2459 = vmatprep.subr.mxu0 0.0
  %2460 = vmatpush1.msra.mxu0 0.0
  %2461 = vmatprep.subr.mxu0 0.0
  %2462 = vmatpush1.msra.mxu0 0.0
  %2463 = vmatprep.subr.mxu0 0.0
  %2464 = vmatpush1.msra.mxu0 0.0
  %2465 = vmatprep.subr.mxu0 0.0
  %2466 = vmatpush1.msra.mxu0 0.0
  %2467 = vmatprep.subr.mxu0 0.0
  %2468 = vmatpush1.msra.mxu0 0.0
  %2469 = vmatprep.subr.mxu0 0.0
  %2470 = vmatpush1.msra.mxu0 0.0
  %2471 = vmatprep.subr.mxu0 0.0
  %2472 = vmatpush1.msra.mxu0 0.0
  %2473 = vmatprep.subr.mxu0 0.0
  %2474 = vmatpush1.msra.mxu0 0.0
  %2475 = vmatprep.subr.mxu0 0.0
  %2476 = vmatpush1.msra.mxu0 0.0
  %2477 = vmatprep.subr.mxu0 0.0
  %2478 = vmatpush1.msra.mxu0 0.0
  %2479 = vmatprep.subr.mxu0 0.0
  %2480 = vmatpush1.msra.mxu0 0.0
  %2481 = vmatprep.subr.mxu0 0.0
  %2482 = vmatpush1.msra.mxu0 0.0
  %2483 = vmatprep.subr.mxu0 0.0
  %2484 = vmatpush1.msra.mxu0 0.0
  %2485 = vmatprep.subr.mxu0 0.0
  %2486 = vmatpush1.msra.mxu0 0.0
  %2487 = vmatprep.subr.mxu0 0.0
  %2488 = vmatpush1.msra.mxu0 0.0
  %2489 = vmatprep.subr.mxu0 0.0
  %2490 = vmatpush1.msra.mxu0 0.0
  %2491 = vmatprep.subr.mxu0 0.0
  %2492 = vmatpush1.msra.mxu0 0.0
  %2493 = vmatprep.subr.mxu0 0.0
  %2494 = vmatpush1.msra.mxu0 0.0
  %2495 = vmatprep.subr.mxu0 0.0
  %2496 = vmatpush1.msra.mxu0 0.0
  %2497 = vmatprep.subr.mxu0 0.0
  %2498 = vmatpush1.msra.mxu0 0.0
  %2499 = vmatprep.subr.mxu0 0.0
  %2500 = vmatpush1.msra.mxu0 0.0
  %2501 = vmatprep.subr.mxu0 0.0
  %2502 = vmatpush1.msra.mxu0 0.0
  %2503 = vmatprep.subr.mxu0 0.0
  %2504 = vmatpush1.msra.mxu0 0.0
  %2505 = vmatprep.subr.mxu0 0.0
  %2506 = vmatpush1.msra.mxu0 0.0
  %2507 = vmatprep.subr.mxu0 0.0
  %2508 = vmatpush1.msra.mxu0 0.0
  %2509 = vmatprep.subr.mxu0 0.0
  %2510 = vmatpush1.msra.mxu0 0.0
  %2511 = vmatprep.subr.mxu0 0.0
  %2512 = vmatpush1.msra.mxu0 0.0
  %2513 = vmatprep.subr.mxu0 0.0
  %2514 = vmatpush1.msra.mxu0 0.0
  %2515 = vmatprep.subr.mxu0 0.0
  %2516 = vmatpush1.msra.mxu0 0.0
  %2517 = vmatprep.subr.mxu0 0.0
  %2518 = vmatpush1.msra.mxu0 0.0
  %2519 = vmatprep.mubr.f32.mxu0 0.0
  %2520 = vmatmul.mubr.f32.gmra.mrb[0].mxu0 %v2451
  %v2521 = vpop.f32.mrb[0].mxu0
  %v2522 = vadd.f32 0.0, %v2521
  %v2523 = vpop.f32.mrb[0].mxu0
  %2524 = vmatprep.mubr.f32.mxu0 0.0
  %2525 = vmatmul.mubr.f32.gmra.mrb[0].mxu0 %v2453
  %v2526 = vpop.f32.mrb[0].mxu0
  %v2527 = vadd.f32 0.0, %v2526
  %v2528 = vpop.f32.mrb[0].mxu0
  %2529 = vdwg.mxu0
  %2530 = vrot.lane.b32.xlu0 %v1615, 32
  %v2531 = vpop.permute.xlu0 %2530
  %2532 = vrot.lane.b32.xlu0 %v1619, 32
  %v2533 = vpop.permute.xlu0 %2532
  %v2534 = vsel %vm147, %v2531, 0
  %v2536 = vsel %vm147, %v2533, 0
  %2538 = vmatprep.subr.mxu0 0.0
  %2539 = vmatpush1.msra.mxu0 %v1621
  %2540 = vmatprep.subr.mxu0 0.0
  %2541 = vmatpush1.msra.mxu0 %v1622
  %2542 = vmatprep.subr.mxu0 0.0
  %2543 = vmatpush1.msra.mxu0 0.0
  %2544 = vmatprep.subr.mxu0 0.0
  %2545 = vmatpush1.msra.mxu0 0.0
  %2546 = vmatprep.subr.mxu0 0.0
  %2547 = vmatpush1.msra.mxu0 0.0
  %2548 = vmatprep.subr.mxu0 0.0
  %2549 = vmatpush1.msra.mxu0 0.0
  %2550 = vmatprep.subr.mxu0 0.0
  %2551 = vmatpush1.msra.mxu0 0.0
  %2552 = vmatprep.subr.mxu0 0.0
  %2553 = vmatpush1.msra.mxu0 0.0
  %2554 = vmatprep.subr.mxu0 0.0
  %2555 = vmatpush1.msra.mxu0 0.0
  %2556 = vmatprep.subr.mxu0 0.0
  %2557 = vmatpush1.msra.mxu0 0.0
  %2558 = vmatprep.subr.mxu0 0.0
  %2559 = vmatpush1.msra.mxu0 0.0
  %2560 = vmatprep.subr.mxu0 0.0
  %2561 = vmatpush1.msra.mxu0 0.0
  %2562 = vmatprep.subr.mxu0 0.0
  %2563 = vmatpush1.msra.mxu0 0.0
  %2564 = vmatprep.subr.mxu0 0.0
  %2565 = vmatpush1.msra.mxu0 0.0
  %2566 = vmatprep.subr.mxu0 0.0
  %2567 = vmatpush1.msra.mxu0 0.0
  %2568 = vmatprep.subr.mxu0 0.0
  %2569 = vmatpush1.msra.mxu0 0.0
  %2570 = vmatprep.subr.mxu0 0.0
  %2571 = vmatpush1.msra.mxu0 0.0
  %2572 = vmatprep.subr.mxu0 0.0
  %2573 = vmatpush1.msra.mxu0 0.0
  %2574 = vmatprep.subr.mxu0 0.0
  %2575 = vmatpush1.msra.mxu0 0.0
  %2576 = vmatprep.subr.mxu0 0.0
  %2577 = vmatpush1.msra.mxu0 0.0
  %2578 = vmatprep.subr.mxu0 0.0
  %2579 = vmatpush1.msra.mxu0 0.0
  %2580 = vmatprep.subr.mxu0 0.0
  %2581 = vmatpush1.msra.mxu0 0.0
  %2582 = vmatprep.subr.mxu0 0.0
  %2583 = vmatpush1.msra.mxu0 0.0
  %2584 = vmatprep.subr.mxu0 0.0
  %2585 = vmatpush1.msra.mxu0 0.0
  %2586 = vmatprep.subr.mxu0 0.0
  %2587 = vmatpush1.msra.mxu0 0.0
  %2588 = vmatprep.subr.mxu0 0.0
  %2589 = vmatpush1.msra.mxu0 0.0
  %2590 = vmatprep.subr.mxu0 0.0
  %2591 = vmatpush1.msra.mxu0 0.0
  %2592 = vmatprep.subr.mxu0 0.0
  %2593 = vmatpush1.msra.mxu0 0.0
  %2594 = vmatprep.subr.mxu0 0.0
  %2595 = vmatpush1.msra.mxu0 0.0
  %2596 = vmatprep.subr.mxu0 0.0
  %2597 = vmatpush1.msra.mxu0 0.0
  %2598 = vmatprep.subr.mxu0 0.0
  %2599 = vmatpush1.msra.mxu0 0.0
  %2600 = vmatprep.subr.mxu0 0.0
  %2601 = vmatpush1.msra.mxu0 0.0
  %2602 = vmatprep.mubr.f32.mxu0 0.0
  %2603 = vmatmul.mubr.f32.gmra.mrb[0].mxu0 %v2534
  %v2604 = vpop.f32.mrb[0].mxu0
  %v2605 = vadd.f32 0.0, %v2604
  %v2606 = vpop.f32.mrb[0].mxu0
  %2607 = vmatprep.mubr.f32.mxu0 0.0
  %2608 = vmatmul.mubr.f32.gmra.mrb[0].mxu0 %v2536
  %v2609 = vpop.f32.mrb[0].mxu0
  %v2610 = vadd.f32 0.0, %v2609
  %v2611 = vpop.f32.mrb[0].mxu0
  %2612 = vdwg.mxu0
  %v2614 = vsel %vm147, %v1616, 0
  %v2617 = vsel %vm147, %v1620, 0
  %2619 = vmatprep.subr.mxu0 0.0
  %2620 = vmatpush1.msra.mxu0 %v1621
  %2621 = vmatprep.subr.mxu0 0.0
  %2622 = vmatpush1.msra.mxu0 %v1622
  %2623 = vmatprep.subr.mxu0 0.0
  %2624 = vmatpush1.msra.mxu0 0.0
  %2625 = vmatprep.subr.mxu0 0.0
  %2626 = vmatpush1.msra.mxu0 0.0
  %2627 = vmatprep.subr.mxu0 0.0
  %2628 = vmatpush1.msra.mxu0 0.0
  %2629 = vmatprep.subr.mxu0 0.0
  %2630 = vmatpush1.msra.mxu0 0.0
  %2631 = vmatprep.subr.mxu0 0.0
  %2632 = vmatpush1.msra.mxu0 0.0
  %2633 = vmatprep.subr.mxu0 0.0
  %2634 = vmatpush1.msra.mxu0 0.0
  %2635 = vmatprep.subr.mxu0 0.0
  %2636 = vmatpush1.msra.mxu0 0.0
  %2637 = vmatprep.subr.mxu0 0.0
  %2638 = vmatpush1.msra.mxu0 0.0
  %2639 = vmatprep.subr.mxu0 0.0
  %2640 = vmatpush1.msra.mxu0 0.0
  %2641 = vmatprep.subr.mxu0 0.0
  %2642 = vmatpush1.msra.mxu0 0.0
  %2643 = vmatprep.subr.mxu0 0.0
  %2644 = vmatpush1.msra.mxu0 0.0
  %2645 = vmatprep.subr.mxu0 0.0
  %2646 = vmatpush1.msra.mxu0 0.0
  %2647 = vmatprep.subr.mxu0 0.0
  %2648 = vmatpush1.msra.mxu0 0.0
  %2649 = vmatprep.subr.mxu0 0.0
  %2650 = vmatpush1.msra.mxu0 0.0
  %2651 = vmatprep.subr.mxu0 0.0
  %2652 = vmatpush1.msra.mxu0 0.0
  %2653 = vmatprep.subr.mxu0 0.0
  %2654 = vmatpush1.msra.mxu0 0.0
  %2655 = vmatprep.subr.mxu0 0.0
  %2656 = vmatpush1.msra.mxu0 0.0
  %2657 = vmatprep.subr.mxu0 0.0
  %2658 = vmatpush1.msra.mxu0 0.0
  %2659 = vmatprep.subr.mxu0 0.0
  %2660 = vmatpush1.msra.mxu0 0.0
  %2661 = vmatprep.subr.mxu0 0.0
  %2662 = vmatpush1.msra.mxu0 0.0
  %2663 = vmatprep.subr.mxu0 0.0
  %2664 = vmatpush1.msra.mxu0 0.0
  %2665 = vmatprep.subr.mxu0 0.0
  %2666 = vmatpush1.msra.mxu0 0.0
  %2667 = vmatprep.subr.mxu0 0.0
  %2668 = vmatpush1.msra.mxu0 0.0
  %2669 = vmatprep.subr.mxu0 0.0
  %2670 = vmatpush1.msra.mxu0 0.0
  %2671 = vmatprep.subr.mxu0 0.0
  %2672 = vmatpush1.msra.mxu0 0.0
  %2673 = vmatprep.subr.mxu0 0.0
  %2674 = vmatpush1.msra.mxu0 0.0
  %2675 = vmatprep.subr.mxu0 0.0
  %2676 = vmatpush1.msra.mxu0 0.0
  %2677 = vmatprep.subr.mxu0 0.0
  %2678 = vmatpush1.msra.mxu0 0.0
  %2679 = vmatprep.subr.mxu0 0.0
  %2680 = vmatpush1.msra.mxu0 0.0
  %2681 = vmatprep.subr.mxu0 0.0
  %2682 = vmatpush1.msra.mxu0 0.0
  %2683 = vmatprep.mubr.f32.mxu0 0.0
  %2684 = vmatmul.mubr.f32.gmra.mrb[0].mxu0 %v2614
  %v2685 = vpop.f32.mrb[0].mxu0
  %v2686 = vadd.f32 0.0, %v2685
  %v2687 = vpop.f32.mrb[0].mxu0
  %2688 = vmatprep.mubr.f32.mxu0 0.0
  %2689 = vmatmul.mubr.f32.gmra.mrb[0].mxu0 %v2617
  %v2690 = vpop.f32.mrb[0].mxu0
  %v2691 = vadd.f32 0.0, %v2690
  %v2692 = vpop.f32.mrb[0].mxu0
  %2693 = vdwg.mxu0
  %2694 = vrot.lane.b32.xlu0 %v1616, 96
  %v2695 = vpop.permute.xlu0 %2694
  %2696 = vrot.lane.b32.xlu0 %v1620, 96
  %v2697 = vpop.permute.xlu0 %2696
  %v2698 = vsel %vm147, %v2695, 0
  %v2700 = vsel %vm147, %v2697, 0
  %2702 = vmatprep.subr.mxu0 0.0
  %2703 = vmatpush1.msra.mxu0 %v1621
  %2704 = vmatprep.subr.mxu0 0.0
  %2705 = vmatpush1.msra.mxu0 %v1622
  %2706 = vmatprep.subr.mxu0 0.0
  %2707 = vmatpush1.msra.mxu0 0.0
  %2708 = vmatprep.subr.mxu0 0.0
  %2709 = vmatpush1.msra.mxu0 0.0
  %2710 = vmatprep.subr.mxu0 0.0
  %2711 = vmatpush1.msra.mxu0 0.0
  %2712 = vmatprep.subr.mxu0 0.0
  %2713 = vmatpush1.msra.mxu0 0.0
  %2714 = vmatprep.subr.mxu0 0.0
  %2715 = vmatpush1.msra.mxu0 0.0
  %2716 = vmatprep.subr.mxu0 0.0
  %2717 = vmatpush1.msra.mxu0 0.0
  %2718 = vmatprep.subr.mxu0 0.0
  %2719 = vmatpush1.msra.mxu0 0.0
  %2720 = vmatprep.subr.mxu0 0.0
  %2721 = vmatpush1.msra.mxu0 0.0
  %2722 = vmatprep.subr.mxu0 0.0
  %2723 = vmatpush1.msra.mxu0 0.0
  %2724 = vmatprep.subr.mxu0 0.0
  %2725 = vmatpush1.msra.mxu0 0.0
  %2726 = vmatprep.subr.mxu0 0.0
  %2727 = vmatpush1.msra.mxu0 0.0
  %2728 = vmatprep.subr.mxu0 0.0
  %2729 = vmatpush1.msra.mxu0 0.0
  %2730 = vmatprep.subr.mxu0 0.0
  %2731 = vmatpush1.msra.mxu0 0.0
  %2732 = vmatprep.subr.mxu0 0.0
  %2733 = vmatpush1.msra.mxu0 0.0
  %2734 = vmatprep.subr.mxu0 0.0
  %2735 = vmatpush1.msra.mxu0 0.0
  %2736 = vmatprep.subr.mxu0 0.0
  %2737 = vmatpush1.msra.mxu0 0.0
  %2738 = vmatprep.subr.mxu0 0.0
  %2739 = vmatpush1.msra.mxu0 0.0
  %2740 = vmatprep.subr.mxu0 0.0
  %2741 = vmatpush1.msra.mxu0 0.0
  %2742 = vmatprep.subr.mxu0 0.0
  %2743 = vmatpush1.msra.mxu0 0.0
  %2744 = vmatprep.subr.mxu0 0.0
  %2745 = vmatpush1.msra.mxu0 0.0
  %2746 = vmatprep.subr.mxu0 0.0
  %2747 = vmatpush1.msra.mxu0 0.0
  %2748 = vmatprep.subr.mxu0 0.0
  %2749 = vmatpush1.msra.mxu0 0.0
  %2750 = vmatprep.subr.mxu0 0.0
  %2751 = vmatpush1.msra.mxu0 0.0
  %2752 = vmatprep.subr.mxu0 0.0
  %2753 = vmatpush1.msra.mxu0 0.0
  %2754 = vmatprep.subr.mxu0 0.0
  %2755 = vmatpush1.msra.mxu0 0.0
  %2756 = vmatprep.subr.mxu0 0.0
  %2757 = vmatpush1.msra.mxu0 0.0
  %2758 = vmatprep.subr.mxu0 0.0
  %2759 = vmatpush1.msra.mxu0 0.0
  %2760 = vmatprep.subr.mxu0 0.0
  %2761 = vmatpush1.msra.mxu0 0.0
  %2762 = vmatprep.subr.mxu0 0.0
  %2763 = vmatpush1.msra.mxu0 0.0
  %2764 = vmatprep.subr.mxu0 0.0
  %2765 = vmatpush1.msra.mxu0 0.0
  %2766 = vmatprep.mubr.f32.mxu0 0.0
  %2767 = vmatmul.mubr.f32.gmra.mrb[0].mxu0 %v2698
  %v2768 = vpop.f32.mrb[0].mxu0
  %v2769 = vadd.f32 0.0, %v2768
  %v2770 = vpop.f32.mrb[0].mxu0
  %2771 = vmatprep.mubr.f32.mxu0 0.0
  %2772 = vmatmul.mubr.f32.gmra.mrb[0].mxu0 %v2700
  %v2773 = vpop.f32.mrb[0].mxu0
  %v2774 = vadd.f32 0.0, %v2773
  %v2775 = vpop.f32.mrb[0].mxu0
  %2776 = vdwg.mxu0
  %2777 = vrot.lane.b32.xlu0 %v1616, 64
  %v2778 = vpop.permute.xlu0 %2777
  %2779 = vrot.lane.b32.xlu0 %v1620, 64
  %v2780 = vpop.permute.xlu0 %2779
  %v2781 = vsel %vm147, %v2778, 0
  %v2783 = vsel %vm147, %v2780, 0
  %2785 = vmatprep.subr.mxu0 0.0
  %2786 = vmatpush1.msra.mxu0 %v1621
  %2787 = vmatprep.subr.mxu0 0.0
  %2788 = vmatpush1.msra.mxu0 %v1622
  %2789 = vmatprep.subr.mxu0 0.0
  %2790 = vmatpush1.msra.mxu0 0.0
  %2791 = vmatprep.subr.mxu0 0.0
  %2792 = vmatpush1.msra.mxu0 0.0
  %2793 = vmatprep.subr.mxu0 0.0
  %2794 = vmatpush1.msra.mxu0 0.0
  %2795 = vmatprep.subr.mxu0 0.0
  %2796 = vmatpush1.msra.mxu0 0.0
  %2797 = vmatprep.subr.mxu0 0.0
  %2798 = vmatpush1.msra.mxu0 0.0
  %2799 = vmatprep.subr.mxu0 0.0
  %2800 = vmatpush1.msra.mxu0 0.0
  %2801 = vmatprep.subr.mxu0 0.0
  %2802 = vmatpush1.msra.mxu0 0.0
  %2803 = vmatprep.subr.mxu0 0.0
  %2804 = vmatpush1.msra.mxu0 0.0
  %2805 = vmatprep.subr.mxu0 0.0
  %2806 = vmatpush1.msra.mxu0 0.0
  %2807 = vmatprep.subr.mxu0 0.0
  %2808 = vmatpush1.msra.mxu0 0.0
  %2809 = vmatprep.subr.mxu0 0.0
  %2810 = vmatpush1.msra.mxu0 0.0
  %2811 = vmatprep.subr.mxu0 0.0
  %2812 = vmatpush1.msra.mxu0 0.0
  %2813 = vmatprep.subr.mxu0 0.0
  %2814 = vmatpush1.msra.mxu0 0.0
  %2815 = vmatprep.subr.mxu0 0.0
  %2816 = vmatpush1.msra.mxu0 0.0
  %2817 = vmatprep.subr.mxu0 0.0
  %2818 = vmatpush1.msra.mxu0 0.0
  %2819 = vmatprep.subr.mxu0 0.0
  %2820 = vmatpush1.msra.mxu0 0.0
  %2821 = vmatprep.subr.mxu0 0.0
  %2822 = vmatpush1.msra.mxu0 0.0
  %2823 = vmatprep.subr.mxu0 0.0
  %2824 = vmatpush1.msra.mxu0 0.0
  %2825 = vmatprep.subr.mxu0 0.0
  %2826 = vmatpush1.msra.mxu0 0.0
  %2827 = vmatprep.subr.mxu0 0.0
  %2828 = vmatpush1.msra.mxu0 0.0
  %2829 = vmatprep.subr.mxu0 0.0
  %2830 = vmatpush1.msra.mxu0 0.0
  %2831 = vmatprep.subr.mxu0 0.0
  %2832 = vmatpush1.msra.mxu0 0.0
  %2833 = vmatprep.subr.mxu0 0.0
  %2834 = vmatpush1.msra.mxu0 0.0
  %2835 = vmatprep.subr.mxu0 0.0
  %2836 = vmatpush1.msra.mxu0 0.0
  %2837 = vmatprep.subr.mxu0 0.0
  %2838 = vmatpush1.msra.mxu0 0.0
  %2839 = vmatprep.subr.mxu0 0.0
  %2840 = vmatpush1.msra.mxu0 0.0
  %2841 = vmatprep.subr.mxu0 0.0
  %2842 = vmatpush1.msra.mxu0 0.0
  %2843 = vmatprep.subr.mxu0 0.0
  %2844 = vmatpush1.msra.mxu0 0.0
  %2845 = vmatprep.subr.mxu0 0.0
  %2846 = vmatpush1.msra.mxu0 0.0
  %2847 = vmatprep.subr.mxu0 0.0
  %2848 = vmatpush1.msra.mxu0 0.0
  %2849 = vmatprep.mubr.f32.mxu0 0.0
  %2850 = vmatmul.mubr.f32.gmra.mrb[0].mxu0 %v2781
  %v2851 = vpop.f32.mrb[0].mxu0
  %v2852 = vadd.f32 0.0, %v2851
  %v2853 = vpop.f32.mrb[0].mxu0
  %2854 = vmatprep.mubr.f32.mxu0 0.0
  %2855 = vmatmul.mubr.f32.gmra.mrb[0].mxu0 %v2783
  %v2856 = vpop.f32.mrb[0].mxu0
  %v2857 = vadd.f32 0.0, %v2856
  %v2858 = vpop.f32.mrb[0].mxu0
  %2859 = vdwg.mxu0
  %2860 = vrot.lane.b32.xlu0 %v1616, 32
  %v2861 = vpop.permute.xlu0 %2860
  %2862 = vrot.lane.b32.xlu0 %v1620, 32
  %v2863 = vpop.permute.xlu0 %2862
  %v2864 = vsel %vm147, %v2861, 0
  %v2866 = vsel %vm147, %v2863, 0
  %2868 = vmatprep.subr.mxu0 0.0
  %2869 = vmatpush1.msra.mxu0 %v1621
  %2870 = vmatprep.subr.mxu0 0.0
  %2871 = vmatpush1.msra.mxu0 %v1622
  %2872 = vmatprep.subr.mxu0 0.0
  %2873 = vmatpush1.msra.mxu0 0.0
  %2874 = vmatprep.subr.mxu0 0.0
  %2875 = vmatpush1.msra.mxu0 0.0
  %2876 = vmatprep.subr.mxu0 0.0
  %2877 = vmatpush1.msra.mxu0 0.0
  %2878 = vmatprep.subr.mxu0 0.0
  %2879 = vmatpush1.msra.mxu0 0.0
  %2880 = vmatprep.subr.mxu0 0.0
  %2881 = vmatpush1.msra.mxu0 0.0
  %2882 = vmatprep.subr.mxu0 0.0
  %2883 = vmatpush1.msra.mxu0 0.0
  %2884 = vmatprep.subr.mxu0 0.0
  %2885 = vmatpush1.msra.mxu0 0.0
  %2886 = vmatprep.subr.mxu0 0.0
  %2887 = vmatpush1.msra.mxu0 0.0
  %2888 = vmatprep.subr.mxu0 0.0
  %2889 = vmatpush1.msra.mxu0 0.0
  %2890 = vmatprep.subr.mxu0 0.0
  %2891 = vmatpush1.msra.mxu0 0.0
  %2892 = vmatprep.subr.mxu0 0.0
  %2893 = vmatpush1.msra.mxu0 0.0
  %2894 = vmatprep.subr.mxu0 0.0
  %2895 = vmatpush1.msra.mxu0 0.0
  %2896 = vmatprep.subr.mxu0 0.0
  %2897 = vmatpush1.msra.mxu0 0.0
  %2898 = vmatprep.subr.mxu0 0.0
  %2899 = vmatpush1.msra.mxu0 0.0
  %2900 = vmatprep.subr.mxu0 0.0
  %2901 = vmatpush1.msra.mxu0 0.0
  %2902 = vmatprep.subr.mxu0 0.0
  %2903 = vmatpush1.msra.mxu0 0.0
  %2904 = vmatprep.subr.mxu0 0.0
  %2905 = vmatpush1.msra.mxu0 0.0
  %2906 = vmatprep.subr.mxu0 0.0
  %2907 = vmatpush1.msra.mxu0 0.0
  %2908 = vmatprep.subr.mxu0 0.0
  %2909 = vmatpush1.msra.mxu0 0.0
  %2910 = vmatprep.subr.mxu0 0.0
  %2911 = vmatpush1.msra.mxu0 0.0
  %2912 = vmatprep.subr.mxu0 0.0
  %2913 = vmatpush1.msra.mxu0 0.0
  %2914 = vmatprep.subr.mxu0 0.0
  %2915 = vmatpush1.msra.mxu0 0.0
  %2916 = vmatprep.subr.mxu0 0.0
  %2917 = vmatpush1.msra.mxu0 0.0
  %2918 = vmatprep.subr.mxu0 0.0
  %2919 = vmatpush1.msra.mxu0 0.0
  %2920 = vmatprep.subr.mxu0 0.0
  %2921 = vmatpush1.msra.mxu0 0.0
  %2922 = vmatprep.subr.mxu0 0.0
  %2923 = vmatpush1.msra.mxu0 0.0
  %2924 = vmatprep.subr.mxu0 0.0
  %2925 = vmatpush1.msra.mxu0 0.0
  %2926 = vmatprep.subr.mxu0 0.0
  %2927 = vmatpush1.msra.mxu0 0.0
  %2928 = vmatprep.subr.mxu0 0.0
  %2929 = vmatpush1.msra.mxu0 0.0
  %2930 = vmatprep.subr.mxu0 0.0
  %2931 = vmatpush1.msra.mxu0 0.0
  %2932 = vmatprep.mubr.f32.mxu0 0.0
  %2933 = vmatmul.mubr.f32.gmra.mrb[0].mxu0 %v2864
  %v2934 = vpop.f32.mrb[0].mxu0
  %v2935 = vadd.f32 0.0, %v2934
  %v2936 = vpop.f32.mrb[0].mxu0
  %2937 = vmatprep.mubr.f32.mxu0 0.0
  %2938 = vmatmul.mubr.f32.gmra.mrb[0].mxu0 %v2866
  %v2939 = vpop.f32.mrb[0].mxu0
  %v2940 = vadd.f32 0.0, %v2939
  %v2941 = vpop.f32.mrb[0].mxu0
  %2942 = vdwg.mxu0
  %2945 = vrot.lane.b32.xlu0 %v1779, 8
  %v2946 = vpop.permute.xlu0 %2945
  %2947 = vrot.lane.b32.xlu0 %v1784, 8
  %v2948 = vpop.permute.xlu0 %2947
  %2953 = vrot.lane.b32.xlu0 %v1862, 16
  %v2954 = vpop.permute.xlu0 %2953
  %2955 = vrot.lane.b32.xlu0 %v1867, 16
  %v2956 = vpop.permute.xlu0 %2955
  %2961 = vrot.lane.b32.xlu0 %v1945, 24
  %v2962 = vpop.permute.xlu0 %2961
  %2963 = vrot.lane.b32.xlu0 %v1950, 24
  %v2964 = vpop.permute.xlu0 %2963
  %2969 = vrot.lane.b32.xlu0 %v2026, 32
  %v2970 = vpop.permute.xlu0 %2969
  %2971 = vrot.lane.b32.xlu0 %v2031, 32
  %v2972 = vpop.permute.xlu0 %2971
  %2977 = vrot.lane.b32.xlu0 %v2109, 40
  %v2978 = vpop.permute.xlu0 %2977
  %2979 = vrot.lane.b32.xlu0 %v2114, 40
  %v2980 = vpop.permute.xlu0 %2979
  %2985 = vrot.lane.b32.xlu0 %v2192, 48
  %v2986 = vpop.permute.xlu0 %2985
  %2987 = vrot.lane.b32.xlu0 %v2197, 48
  %v2988 = vpop.permute.xlu0 %2987
  %2993 = vrot.lane.b32.xlu0 %v2275, 56
  %v2994 = vpop.permute.xlu0 %2993
  %2995 = vrot.lane.b32.xlu0 %v2280, 56
  %v2996 = vpop.permute.xlu0 %2995
  %3001 = vrot.lane.b32.xlu0 %v2356, 64
  %v3002 = vpop.permute.xlu0 %3001
  %3003 = vrot.lane.b32.xlu0 %v2361, 64
  %v3004 = vpop.permute.xlu0 %3003
  %3009 = vrot.lane.b32.xlu0 %v2439, 72
  %v3010 = vpop.permute.xlu0 %3009
  %3011 = vrot.lane.b32.xlu0 %v2444, 72
  %v3012 = vpop.permute.xlu0 %3011
  %3017 = vrot.lane.b32.xlu0 %v2522, 80
  %v3018 = vpop.permute.xlu0 %3017
  %3019 = vrot.lane.b32.xlu0 %v2527, 80
  %v3020 = vpop.permute.xlu0 %3019
  %3025 = vrot.lane.b32.xlu0 %v2605, 88
  %v3026 = vpop.permute.xlu0 %3025
  %3027 = vrot.lane.b32.xlu0 %v2610, 88
  %v3028 = vpop.permute.xlu0 %3027
  %3033 = vrot.lane.b32.xlu0 %v2686, 96
  %v3034 = vpop.permute.xlu0 %3033
  %3035 = vrot.lane.b32.xlu0 %v2691, 96
  %v3036 = vpop.permute.xlu0 %3035
  %3041 = vrot.lane.b32.xlu0 %v2769, 104
  %v3042 = vpop.permute.xlu0 %3041
  %3043 = vrot.lane.b32.xlu0 %v2774, 104
  %v3044 = vpop.permute.xlu0 %3043
  %3049 = vrot.lane.b32.xlu0 %v2852, 112
  %v3050 = vpop.permute.xlu0 %3049
  %3051 = vrot.lane.b32.xlu0 %v2857, 112
  %v3052 = vpop.permute.xlu0 %3051
  %3057 = vrot.lane.b32.xlu0 %v2935, 120
  %v3058 = vpop.permute.xlu0 %3057
  %3059 = vrot.lane.b32.xlu0 %v2940, 120
  %v3060 = vpop.permute.xlu0 %3059
  %vm3063 = vcmask 64512
  %v3064 = vsel %vm3063, %v1696, %v2946
  %v3065 = vsel %vm3063, %v1701, %v2948
  %v3066 = vsel %vm147, %v3064, %v2954
  %v3067 = vsel %vm147, %v3065, %v2956
  %vm3068 = vcmask 195584
  %v3069 = vsel %vm3068, %v3066, %v2962
  %v3070 = vsel %vm3068, %v3067, %v2964
  %vm3071 = vcmask 261120
  %v3072 = vsel %vm3071, %v3069, %v2970
  %v3073 = vsel %vm3071, %v3070, %v2972
  %vm3074 = vcmask 326656
  %v3075 = vsel %vm3074, %v3072, %v2978
  %v3076 = vsel %vm3074, %v3073, %v2980
  %vm3077 = vcmask 392192
  %v3078 = vsel %vm3077, %v3075, %v2986
  %v3079 = vsel %vm3077, %v3076, %v2988
  %vm3080 = vcmask 457728
  %v3081 = vsel %vm3080, %v3078, %v2994
  %v3082 = vsel %vm3080, %v3079, %v2996
  %vm3083 = vcmask 523264
  %v3084 = vsel %vm3083, %v3081, %v3002
  %v3085 = vsel %vm3083, %v3082, %v3004
  %vm3086 = vcmask 588800
  %v3087 = vsel %vm3086, %v3084, %v3010
  %v3088 = vsel %vm3086, %v3085, %v3012
  %vm3089 = vcmask 654336
  %v3090 = vsel %vm3089, %v3087, %v3018
  %v3091 = vsel %vm3089, %v3088, %v3020
  %vm3092 = vcmask 719872
  %v3093 = vsel %vm3092, %v3090, %v3026
  %v3094 = vsel %vm3092, %v3091, %v3028
  %vm3095 = vcmask 785408
  %v3096 = vsel %vm3095, %v3093, %v3034
  %v3097 = vsel %vm3095, %v3094, %v3036
  %vm3098 = vcmask 850944
  %v3099 = vsel %vm3098, %v3096, %v3042
  %v3100 = vsel %vm3098, %v3097, %v3044
  %v3101 = vsel %vm513, %v3099, %v3050
  %v3102 = vsel %vm513, %v3100, %v3052
  %vm3103 = vcmask 982016
  %v3104 = vsel %vm3103, %v3101, %v3058
  %v3105 = vsel %vm3103, %v3102, %v3060
  %3106 = vst [vmem:[%s9] sm:$0xff] %v3104
  %3107 = vst [vmem:[%s9 + $0x8] sm:$0xff] %v3105
  // Predicated region
  $region38: #{fcn_encoder_block.1} parent=0 // pred_check
    _
  $region39: #{fcn_encoder_block.1} parent=0 // pred_check_branch
    %3109 = sbr.rel (0) target = $region41
  $region40: #{fcn_encoder_block.1} parent=0 // pred_region
    _
  $region41: #{fcn_encoder_block.1} parent=0 // pred_fallthru
    _
  // Predicated region
  $region42: #{fcn_encoder_block.1} parent=0 // pred_check
    _
  $region43: #{fcn_encoder_block.1} parent=0 // pred_check_branch
    %3111 = sbr.rel (0) target = $region45
  $region44: #{fcn_encoder_block.1} parent=0 // pred_region
    _
  $region45: #{fcn_encoder_block.1} parent=0 // pred_fallthru
    _

</llo_original>
